<compile_context>
chip_gen: v7x
topology: tpu7x:2x2x1
jax: 0.10.0
libtpu: 0.0.40
codegen_flags: <defaults>
</compile_context>

<pallas_src>
import functools
import math

import jax
import jax.numpy as jnp
from jax.experimental import pallas as pl
from jax.experimental.pallas import tpu as pltpu


def _round_up(n, m):
    return ((n + m - 1) // m) * m


# ---------------------------------------------------------------------------
# Fused kernel: both GRU encoders + both linear+CE heads, one batch tile each
# ---------------------------------------------------------------------------

def renet_head_kernel(
    x_s_ref, x_r_ref, lens_ref, e_s_ref, rel_r_ref, lab_o_ref, lab_r_ref,
    enc_wih_ref, enc_whh_ref, enc_bih_ref, enc_bhh_ref,
    encr_wih_ref, encr_whh_ref, encr_bih_ref, encr_bhh_ref,
    lin_w_ref, lin_b_ref, linr_w_ref, linr_b_ref,
    out_ref,
    *, h_pad, n_valid_rows, n_cls_o, n_cls_r, rel_weight):
    L, Bt, d_s = x_s_ref.shape
    d_r = x_r_ref.shape[2]
    H = h_pad
    lens = lens_ref[...]                                   # (Bt, 1) int32

    # Hoisted, gate-packed input projections: one MXU pass per encoder.
    x_s = x_s_ref[...].reshape(L * Bt, d_s)                # (L*Bt, Din) bf16
    x_r = x_r_ref[...].reshape(L * Bt, d_r)
    gi_s = jnp.dot(x_s, enc_wih_ref[...],
                   preferred_element_type=jnp.float32).astype(jnp.bfloat16)
    gi_q = jnp.dot(x_r, encr_wih_ref[...],
                   preferred_element_type=jnp.float32).astype(jnp.bfloat16)

    w_hh_s = enc_whh_ref[...]                              # (H, 3H) f32
    w_hh_q = encr_whh_ref[...]
    b_ih_s = enc_bih_ref[...]                              # (1, 3H) f32
    b_hh_s = enc_bhh_ref[...]
    b_ih_q = encr_bih_ref[...]
    b_hh_q = encr_bhh_ref[...]

    h_s = jnp.zeros((Bt, H), jnp.float32)
    h_q = jnp.zeros((Bt, H), jnp.float32)

    def gru_step(gi_t, gh, h_prev, upd):
        # PyTorch GRU gate order [r, z, n];  n = tanh(gi_n + r * gh_n).
        r = jax.nn.sigmoid(gi_t[:, :H] + gh[:, :H])
        z = jax.nn.sigmoid(gi_t[:, H:2 * H] + gh[:, H:2 * H])
        n = jnp.tanh(gi_t[:, 2 * H:] + r * gh[:, 2 * H:])
        h_new = (1.0 - z) * n + z * h_prev
        # Freeze past each row's packed-sequence length (rows with empty
        # history stay exactly zero, matching the reference zero-padding).
        return jnp.where(upd, h_new, h_prev)

    # Short, fully unrolled time loop with the two encoders interleaved.
    # TODO(synk): switch to lax.fori_loop(..., unroll=True) if L grows past ~8.
    for t in range(L):
        rows = slice(t * Bt, (t + 1) * Bt)
        upd = lens > t
        gh_s = jnp.dot(h_s, w_hh_s, preferred_element_type=jnp.float32) + b_hh_s
        gh_q = jnp.dot(h_q, w_hh_q, preferred_element_type=jnp.float32) + b_hh_q
        gi_st = gi_s[rows].astype(jnp.float32) + b_ih_s
        gi_qt = gi_q[rows].astype(jnp.float32) + b_ih_q
        h_s = gru_step(gi_st, gh_s, h_s, upd)
        h_q = gru_step(gi_qt, gh_q, h_q, upd)

    e_s = e_s_ref[...]                                     # (Bt, H) bf16
    rel = rel_r_ref[...]                                   # (Bt, H) bf16
    wdt = lin_w_ref.dtype

    # Object head: split-weight matmuls (no feature concat), f32 accumulation.
    logits_o = (jnp.dot(e_s, lin_w_ref[0], preferred_element_type=jnp.float32)
                + jnp.dot(h_s.astype(wdt), lin_w_ref[1],
                          preferred_element_type=jnp.float32)
                + jnp.dot(rel, lin_w_ref[2], preferred_element_type=jnp.float32)
                + lin_b_ref[...])
    # Relation head.
    logits_r = (jnp.dot(e_s, linr_w_ref[0], preferred_element_type=jnp.float32)
                + jnp.dot(h_q.astype(wdt), linr_w_ref[1],
                          preferred_element_type=jnp.float32)
                + linr_b_ref[...])

    row0 = pl.program_id(0) * Bt
    row_id = row0 + jax.lax.broadcasted_iota(jnp.int32, (Bt, 1), 0)
    row_valid = row_id < n_valid_rows                      # mask padded batch rows

    def ce_sum(logits, lab, n_cls):
        cls = jax.lax.broadcasted_iota(jnp.int32, logits.shape, 1)
        logits = jnp.where(cls < n_cls, logits, -jnp.inf)  # mask padded classes
        m = jnp.max(logits, axis=-1, keepdims=True)
        lse = m + jnp.log(jnp.sum(jnp.exp(logits - m), axis=-1, keepdims=True))
        ll = jnp.sum(jnp.where(cls == lab, logits, 0.0), axis=-1, keepdims=True)
        return jnp.sum(jnp.where(row_valid, lse - ll, 0.0))

    partial = (ce_sum(logits_o, lab_o_ref[...], n_cls_o)
               + rel_weight * ce_sum(logits_r, lab_r_ref[...], n_cls_r))
    out_ref[...] = jnp.full((1, 128), partial, dtype=jnp.float32)  # lane-dense store


# ---------------------------------------------------------------------------
# Parameter initialisation (mirrors __init__ shapes; lane-padded & gate-packed)
# ---------------------------------------------------------------------------

def init_params(key, in_dim, h_dim, num_rels, lane=128):
    H = _round_up(h_dim, lane)
    E = _round_up(in_dim, lane)
    R = _round_up(num_rels, lane)
    D_s = _round_up(4 * h_dim, lane)
    D_r = _round_up(3 * h_dim, lane)
    gain = math.sqrt(2.0)                   # calculate_gain('relu')
    keys = iter(jax.random.split(key, 16))

    def xavier_pad(k, rows, cols, cols_pad):
        bound = gain * math.sqrt(6.0 / (rows + cols))
        w = jax.random.uniform(k, (rows, cols), jnp.float32, -bound, bound)
        return jnp.pad(w, ((0, 0), (0, cols_pad - cols)))

    def gru_pack(kw_ih, kw_hh, kb_ih, kb_hh, d_log, d_pad):
        # PyTorch GRU init U(-1/sqrt(h), 1/sqrt(h)); gates [r,z,n] lane-stacked
        # so gate g occupies columns [g*H, g*H + h_dim) of a 3H axis; the
        # padded rows/columns are zero so the padded hidden columns stay 0.
        b = 1.0 / math.sqrt(h_dim)
        wih = jnp.zeros((d_pad, 3 * H), jnp.float32)
        whh = jnp.zeros((H, 3 * H), jnp.float32)
        bih = jnp.zeros((1, 3 * H), jnp.float32)
        bhh = jnp.zeros((1, 3 * H), jnp.float32)
        kw_ih = jax.random.split(kw_ih, 3)
        kw_hh = jax.random.split(kw_hh, 3)
        kb_ih = jax.random.split(kb_ih, 3)
        kb_hh = jax.random.split(kb_hh, 3)
        for g in range(3):
            c = slice(g * H, g * H + h_dim)
            wih = wih.at[:d_log, c].set(
                jax.random.uniform(kw_ih[g], (d_log, h_dim), jnp.float32, -b, b))
            whh = whh.at[:h_dim, c].set(
                jax.random.uniform(kw_hh[g], (h_dim, h_dim), jnp.float32, -b, b))
            bih = bih.at[:, c].set(
                jax.random.uniform(kb_ih[g], (1, h_dim), jnp.float32, -b, b))
            bhh = bhh.at[:, c].set(
                jax.random.uniform(kb_hh[g], (1, h_dim), jnp.float32, -b, b))
        # whh kept f32: the recurrent dot stays in f32 (no bf16 drift of h).
        return wih.astype(jnp.bfloat16), whh, bih, bhh

    enc = gru_pack(next(keys), next(keys), next(keys), next(keys), 4 * h_dim, D_s)
    encr = gru_pack(next(keys), next(keys), next(keys), next(keys), 3 * h_dim, D_r)

    def linear_blocks(k, n_blocks, out_log, out_pad):
        fan_in = n_blocks * h_dim
        b = 1.0 / math.sqrt(fan_in)
        ks = jax.random.split(k, n_blocks + 1)
        w = jnp.zeros((n_blocks, H, out_pad), jnp.float32)
        for i in range(n_blocks):
            w = w.at[i, :h_dim, :out_log].set(
                jax.random.uniform(ks[i], (h_dim, out_log), jnp.float32, -b, b))
        bias = jnp.zeros((1, out_pad), jnp.float32)
        bias = bias.at[:, :out_log].set(
            jax.random.uniform(ks[-1], (1, out_log), jnp.float32, -b, b))
        return w.astype(jnp.bfloat16), bias

    lin_w, lin_b = linear_blocks(next(keys), 3, in_dim, E)      # linear: 3H -> in_dim
    linr_w, linr_b = linear_blocks(next(keys), 2, num_rels, R)  # linear_r: 2H -> num_rels

    return dict(
        dims=dict(H=H, E=E, R=R, D_s=D_s, D_r=D_r),
        rel_embeds=xavier_pad(next(keys), 2 * num_rels, h_dim, H),
        ent_embeds=xavier_pad(next(keys), in_dim, h_dim, H),
        enc_wih=enc[0], enc_whh=enc[1], enc_bih=enc[2], enc_bhh=enc[3],
        encr_wih=encr[0], encr_whh=encr[1], encr_bih=encr[2], encr_bhh=encr[3],
        lin_w=lin_w, lin_b=lin_b, linr_w=linr_w, linr_b=linr_b,
    )


# ---------------------------------------------------------------------------
# RENet.forward (subject=True), dropout p=0 => identity
# ---------------------------------------------------------------------------

def renet_forward(params, triplets, hist_len, s_packed_input, s_packed_input_r,
                  *, num_rels, h_dim, in_dim, b_tile=16):
    dims = params["dims"]
    H, E, R, D_s, D_r = dims["H"], dims["E"], dims["R"], dims["D_s"], dims["D_r"]
    B = int(triplets.shape[0])
    B_pad = _round_up(B, b_tile)            # sublane multiple (16 for bf16 rows)
    L = int(s_packed_input.shape[1])
    n_tiles = B_pad // b_tile

    s = triplets[:, 0]
    r = triplets[:, 1]
    o = triplets[:, 2]
    # hist_len.sort(0, descending=True) -> permutation; the aggregator's packed
    # rows follow this order with zero-length rows at the end.
    s_idx = jnp.argsort(-hist_len)
    s_len = hist_len[s_idx].astype(jnp.int32)

    def pad_rows(x, rows):
        return jnp.pad(x, ((0, rows - x.shape[0]),) + ((0, 0),) * (x.ndim - 1))

    e_s = pad_rows(params["ent_embeds"][s[s_idx]], B_pad).astype(jnp.bfloat16)
    rel_r = pad_rows(params["rel_embeds"][:num_rels][r[s_idx]], B_pad).astype(jnp.bfloat16)
    lab_o = pad_rows(o[s_idx].astype(jnp.int32).reshape(B, 1), B_pad)
    lab_r = pad_rows(r[s_idx].astype(jnp.int32).reshape(B, 1), B_pad)
    lens = pad_rows(s_len.reshape(B, 1), B_pad)

    def prep(x, d_pad):
        # TODO(synk): in production the RGCNAggregator should emit this
        # time-major, lane-padded layout directly so this extra HBM round-trip
        # disappears.
        b_ne, seq, d = x.shape
        x = jnp.pad(x, ((0, B_pad - b_ne), (0, 0), (0, d_pad - d)))
        return jnp.transpose(x, (1, 0, 2)).astype(jnp.bfloat16)   # (L, B_pad, d_pad)

    x_s = prep(s_packed_input, D_s)
    x_r = prep(s_packed_input_r, D_r)

    kernel = functools.partial(
        renet_head_kernel, h_pad=H, n_valid_rows=B,
        n_cls_o=in_dim, n_cls_r=num_rels, rel_weight=0.1)

    partials = pl.pallas_call(
        kernel,
        out_shape=jax.ShapeDtypeStruct((n_tiles, 128), jnp.float32),
        grid=(n_tiles,),
        in_specs=[
            pl.BlockSpec((L, b_tile, D_s), lambda i: (0, i, 0)),
            pl.BlockSpec((L, b_tile, D_r), lambda i: (0, i, 0)),
            pl.BlockSpec((b_tile, 1), lambda i: (i, 0)),
            pl.BlockSpec((b_tile, H), lambda i: (i, 0)),
            pl.BlockSpec((b_tile, H), lambda i: (i, 0)),
            pl.BlockSpec((b_tile, 1), lambda i: (i, 0)),
            pl.BlockSpec((b_tile, 1), lambda i: (i, 0)),
            pl.BlockSpec((D_s, 3 * H), lambda i: (0, 0)),
            pl.BlockSpec((H, 3 * H), lambda i: (0, 0)),
            pl.BlockSpec((1, 3 * H), lambda i: (0, 0)),
            pl.BlockSpec((1, 3 * H), lambda i: (0, 0)),
            pl.BlockSpec((D_r, 3 * H), lambda i: (0, 0)),
            pl.BlockSpec((H, 3 * H), lambda i: (0, 0)),
            pl.BlockSpec((1, 3 * H), lambda i: (0, 0)),
            pl.BlockSpec((1, 3 * H), lambda i: (0, 0)),
            pl.BlockSpec((3, H, E), lambda i: (0, 0, 0)),
            pl.BlockSpec((1, E), lambda i: (0, 0)),
            pl.BlockSpec((2, H, R), lambda i: (0, 0, 0)),
            pl.BlockSpec((1, R), lambda i: (0, 0)),
        ],
        out_specs=pl.BlockSpec((1, 128), lambda i: (i, 0)),
        compiler_params=pltpu.CompilerParams(
            dimension_semantics=("parallel",),
            vmem_limit_bytes=48 * 1024 * 1024),
    )(x_s, x_r, lens, e_s, rel_r, lab_o, lab_r,
      params["enc_wih"], params["enc_whh"], params["enc_bih"], params["enc_bhh"],
      params["encr_wih"], params["encr_whh"], params["encr_bih"], params["encr_bhh"],
      params["lin_w"], params["lin_b"], params["linr_w"], params["linr_b"])

    # CE means are over the TRUE batch size (padded rows masked in-kernel).
    return jnp.sum(partials[:, 0]) / B


# ---------------------------------------------------------------------------
# Demo
# ---------------------------------------------------------------------------

if __name__ == "__main__":
    in_dim, h_dim, num_rels = 16, 32, 8
    B, L = 8, 4                       # batch of triplets, history length
    # per-triplet history lengths (two empty histories -> zero hidden rows)
    hist_len = jnp.array([3, 2, 4, 0, 1, 0, 2, 3], jnp.int32)
    B_ne = int(jnp.sum(hist_len > 0))  # number of non-empty histories = 6

    key = jax.random.PRNGKey(0)
    kp, kt, ka, kb = jax.random.split(key, 4)
    params = init_params(kp, in_dim, h_dim, num_rels)

    # triplets (s, r, o)
    s_col = jax.random.randint(jax.random.fold_in(kt, 0), (B, 1), 0, in_dim)
    r_col = jax.random.randint(jax.random.fold_in(kt, 1), (B, 1), 0, num_rels)
    o_col = jax.random.randint(jax.random.fold_in(kt, 2), (B, 1), 0, in_dim)
    triplets = jnp.concatenate([s_col, r_col, o_col], axis=1).astype(jnp.int32)

    # synthetic aggregator outputs (see TODO(synk) at top of file)
    s_packed_input = 0.1 * jax.random.normal(ka, (B_ne, L, 4 * h_dim), jnp.float32)
    s_packed_input_r = 0.1 * jax.random.normal(kb, (B_ne, L, 3 * h_dim), jnp.float32)

    loss = renet_forward(params, triplets, hist_len,
                         s_packed_input, s_packed_input_r,
                         num_rels=num_rels, h_dim=h_dim, in_dim=in_dim)
    loss = jax.block_until_ready(loss)
    assert jnp.isfinite(loss)
    print("KERNEL_OK")
</pallas_src>

<mosaic_0001>
module attributes {stable_mosaic.version = 11 : i64} {
  func.func @renet_head_kernel(%arg0: i32, %arg1: memref<4x16x128xbf16, #tpu.memory_space<vmem>>, %arg2: memref<4x16x128xbf16, #tpu.memory_space<vmem>>, %arg3: memref<16x1xi32, #tpu.memory_space<vmem>>, %arg4: memref<16x128xbf16, #tpu.memory_space<vmem>>, %arg5: memref<16x128xbf16, #tpu.memory_space<vmem>>, %arg6: memref<16x1xi32, #tpu.memory_space<vmem>>, %arg7: memref<16x1xi32, #tpu.memory_space<vmem>>, %arg8: memref<128x384xbf16, #tpu.memory_space<vmem>>, %arg9: memref<128x384xf32, #tpu.memory_space<vmem>>, %arg10: memref<1x384xf32, #tpu.memory_space<vmem>>, %arg11: memref<1x384xf32, #tpu.memory_space<vmem>>, %arg12: memref<128x384xbf16, #tpu.memory_space<vmem>>, %arg13: memref<128x384xf32, #tpu.memory_space<vmem>>, %arg14: memref<1x384xf32, #tpu.memory_space<vmem>>, %arg15: memref<1x384xf32, #tpu.memory_space<vmem>>, %arg16: memref<3x128x128xbf16, #tpu.memory_space<vmem>>, %arg17: memref<1x128xf32, #tpu.memory_space<vmem>>, %arg18: memref<2x128x128xbf16, #tpu.memory_space<vmem>>, %arg19: memref<1x128xf32, #tpu.memory_space<vmem>>, %arg20: memref<1x128xf32, #tpu.memory_space<vmem>>) attributes {dimension_semantics = [#tpu.dimension_semantics<parallel>], iteration_bounds = array<i64: 1>, scalar_prefetch = 0 : i64, scratch_operands = 0 : i64, tpu.core_type = #tpu.core_type<tc>, window_params = [{transform_indices = @transform_0, window_bounds = array<i64: 4, 16, 128>}, {transform_indices = @transform_1, window_bounds = array<i64: 4, 16, 128>}, {transform_indices = @transform_2, window_bounds = array<i64: 16, 1>}, {transform_indices = @transform_3, window_bounds = array<i64: 16, 128>}, {transform_indices = @transform_4, window_bounds = array<i64: 16, 128>}, {transform_indices = @transform_5, window_bounds = array<i64: 16, 1>}, {transform_indices = @transform_6, window_bounds = array<i64: 16, 1>}, {pipeline_mode = #tpu.pipeline_mode<synchronous>, transform_indices = @transform_7, window_bounds = array<i64: 128, 384>}, {pipeline_mode = #tpu.pipeline_mode<synchronous>, transform_indices = @transform_8, window_bounds = array<i64: 128, 384>}, {pipeline_mode = #tpu.pipeline_mode<synchronous>, transform_indices = @transform_9, window_bounds = array<i64: 1, 384>}, {pipeline_mode = #tpu.pipeline_mode<synchronous>, transform_indices = @transform_10, window_bounds = array<i64: 1, 384>}, {pipeline_mode = #tpu.pipeline_mode<synchronous>, transform_indices = @transform_11, window_bounds = array<i64: 128, 384>}, {pipeline_mode = #tpu.pipeline_mode<synchronous>, transform_indices = @transform_12, window_bounds = array<i64: 128, 384>}, {pipeline_mode = #tpu.pipeline_mode<synchronous>, transform_indices = @transform_13, window_bounds = array<i64: 1, 384>}, {pipeline_mode = #tpu.pipeline_mode<synchronous>, transform_indices = @transform_14, window_bounds = array<i64: 1, 384>}, {pipeline_mode = #tpu.pipeline_mode<synchronous>, transform_indices = @transform_15, window_bounds = array<i64: 3, 128, 128>}, {pipeline_mode = #tpu.pipeline_mode<synchronous>, transform_indices = @transform_16, window_bounds = array<i64: 1, 128>}, {pipeline_mode = #tpu.pipeline_mode<synchronous>, transform_indices = @transform_17, window_bounds = array<i64: 2, 128, 128>}, {pipeline_mode = #tpu.pipeline_mode<synchronous>, transform_indices = @transform_18, window_bounds = array<i64: 1, 128>}, {transform_indices = @transform_19, window_bounds = array<i64: 1, 128>}]} {
    %c0 = arith.constant 0 : index
    %c0_0 = arith.constant 0 : index
    %0 = vector.load %arg3[%c0, %c0_0] : memref<16x1xi32, #tpu.memory_space<vmem>>, vector<16x1xi32>
    %c0_1 = arith.constant 0 : index
    %c0_2 = arith.constant 0 : index
    %c0_3 = arith.constant 0 : index
    %1 = vector.load %arg1[%c0_1, %c0_2, %c0_3] : memref<4x16x128xbf16, #tpu.memory_space<vmem>>, vector<4x16x128xbf16>
    %2 = vector.shape_cast %1 : vector<4x16x128xbf16> to vector<64x128xbf16>
    %c0_4 = arith.constant 0 : index
    %c0_5 = arith.constant 0 : index
    %c0_6 = arith.constant 0 : index
    %3 = vector.load %arg2[%c0_4, %c0_5, %c0_6] : memref<4x16x128xbf16, #tpu.memory_space<vmem>>, vector<4x16x128xbf16>
    %4 = vector.shape_cast %3 : vector<4x16x128xbf16> to vector<64x128xbf16>
    %c0_7 = arith.constant 0 : index
    %c0_8 = arith.constant 0 : index
    %5 = vector.load %arg8[%c0_7, %c0_8] : memref<128x384xbf16, #tpu.memory_space<vmem>>, vector<128x384xbf16>
    %cst = arith.constant dense<0.000000e+00> : vector<64x384xf32>
    %6 = tpu.matmul %2, %5, %cst {dimension_numbers = #tpu.dot_dimension_numbers<[1], [0], [0], [1], [0, 0, 1, 1], [], []>} : vector<64x128xbf16>, vector<128x384xbf16>, vector<64x384xf32> -> vector<64x384xf32>
    %7 = arith.truncf %6 : vector<64x384xf32> to vector<64x384xbf16>
    %c0_9 = arith.constant 0 : index
    %c0_10 = arith.constant 0 : index
    %8 = vector.load %arg12[%c0_9, %c0_10] : memref<128x384xbf16, #tpu.memory_space<vmem>>, vector<128x384xbf16>
    %cst_11 = arith.constant dense<0.000000e+00> : vector<64x384xf32>
    %9 = tpu.matmul %4, %8, %cst_11 {dimension_numbers = #tpu.dot_dimension_numbers<[1], [0], [0], [1], [0, 0, 1, 1], [], []>} : vector<64x128xbf16>, vector<128x384xbf16>, vector<64x384xf32> -> vector<64x384xf32>
    %10 = arith.truncf %9 : vector<64x384xf32> to vector<64x384xbf16>
    %c0_12 = arith.constant 0 : index
    %c0_13 = arith.constant 0 : index
    %11 = vector.load %arg9[%c0_12, %c0_13] : memref<128x384xf32, #tpu.memory_space<vmem>>, vector<128x384xf32>
    %c0_14 = arith.constant 0 : index
    %c0_15 = arith.constant 0 : index
    %12 = vector.load %arg13[%c0_14, %c0_15] : memref<128x384xf32, #tpu.memory_space<vmem>>, vector<128x384xf32>
    %c0_16 = arith.constant 0 : index
    %c0_17 = arith.constant 0 : index
    %13 = vector.load %arg10[%c0_16, %c0_17] : memref<1x384xf32, #tpu.memory_space<vmem>>, vector<1x384xf32>
    %c0_18 = arith.constant 0 : index
    %c0_19 = arith.constant 0 : index
    %14 = vector.load %arg11[%c0_18, %c0_19] : memref<1x384xf32, #tpu.memory_space<vmem>>, vector<1x384xf32>
    %c0_20 = arith.constant 0 : index
    %c0_21 = arith.constant 0 : index
    %15 = vector.load %arg14[%c0_20, %c0_21] : memref<1x384xf32, #tpu.memory_space<vmem>>, vector<1x384xf32>
    %c0_22 = arith.constant 0 : index
    %c0_23 = arith.constant 0 : index
    %16 = vector.load %arg15[%c0_22, %c0_23] : memref<1x384xf32, #tpu.memory_space<vmem>>, vector<1x384xf32>
    %cst_24 = arith.constant 0.000000e+00 : f32
    %17 = vector.broadcast %cst_24 : f32 to vector<16x128xf32>
    %cst_25 = arith.constant 0.000000e+00 : f32
    %18 = vector.broadcast %cst_25 : f32 to vector<16x128xf32>
    %c0_i32 = arith.constant 0 : i32
    %19 = vector.broadcast %c0_i32 : i32 to vector<16x1xi32>
    %20 = arith.cmpi sgt, %0, %19 : vector<16x1xi32>
    %cst_26 = arith.constant dense<0.000000e+00> : vector<16x384xf32>
    %21 = tpu.matmul %17, %11, %cst_26 {dimension_numbers = #tpu.dot_dimension_numbers<[1], [0], [0], [1], [0, 0, 1, 1], [], []>} : vector<16x128xf32>, vector<128x384xf32>, vector<16x384xf32> -> vector<16x384xf32>
    %22 = vector.broadcast %14 : vector<1x384xf32> to vector<16x384xf32>
    %23 = arith.addf %21, %22 : vector<16x384xf32>
    %cst_27 = arith.constant dense<0.000000e+00> : vector<16x384xf32>
    %24 = tpu.matmul %18, %12, %cst_27 {dimension_numbers = #tpu.dot_dimension_numbers<[1], [0], [0], [1], [0, 0, 1, 1], [], []>} : vector<16x128xf32>, vector<128x384xf32>, vector<16x384xf32> -> vector<16x384xf32>
    %25 = vector.broadcast %16 : vector<1x384xf32> to vector<16x384xf32>
    %26 = arith.addf %24, %25 : vector<16x384xf32>
    %27 = vector.extract_strided_slice %7 {offsets = [0, 0], sizes = [16, 384], strides = [1, 1]} : vector<64x384xbf16> to vector<16x384xbf16>
    %28 = arith.extf %27 : vector<16x384xbf16> to vector<16x384xf32>
    %29 = vector.broadcast %13 : vector<1x384xf32> to vector<16x384xf32>
    %30 = arith.addf %28, %29 : vector<16x384xf32>
    %31 = vector.extract_strided_slice %10 {offsets = [0, 0], sizes = [16, 384], strides = [1, 1]} : vector<64x384xbf16> to vector<16x384xbf16>
    %32 = arith.extf %31 : vector<16x384xbf16> to vector<16x384xf32>
    %33 = vector.broadcast %15 : vector<1x384xf32> to vector<16x384xf32>
    %34 = arith.addf %32, %33 : vector<16x384xf32>
    %35 = vector.extract_strided_slice %30 {offsets = [0, 0], sizes = [16, 128], strides = [1, 1]} : vector<16x384xf32> to vector<16x128xf32>
    %36 = vector.extract_strided_slice %23 {offsets = [0, 0], sizes = [16, 128], strides = [1, 1]} : vector<16x384xf32> to vector<16x128xf32>
    %37 = arith.addf %35, %36 : vector<16x128xf32>
    %38 = arith.negf %37 : vector<16x128xf32>
    %39 = math.exp %38 : vector<16x128xf32>
    %cst_28 = arith.constant 1.000000e+00 : f32
    %40 = vector.broadcast %cst_28 : f32 to vector<16x128xf32>
    %41 = arith.addf %40, %39 : vector<16x128xf32>
    %42 = arith.divf %40, %41 : vector<16x128xf32>
    %43 = vector.extract_strided_slice %30 {offsets = [0, 128], sizes = [16, 128], strides = [1, 1]} : vector<16x384xf32> to vector<16x128xf32>
    %44 = vector.extract_strided_slice %23 {offsets = [0, 128], sizes = [16, 128], strides = [1, 1]} : vector<16x384xf32> to vector<16x128xf32>
    %45 = arith.addf %43, %44 : vector<16x128xf32>
    %46 = arith.negf %45 : vector<16x128xf32>
    %47 = math.exp %46 : vector<16x128xf32>
    %cst_29 = arith.constant 1.000000e+00 : f32
    %48 = vector.broadcast %cst_29 : f32 to vector<16x128xf32>
    %49 = arith.addf %48, %47 : vector<16x128xf32>
    %50 = arith.divf %48, %49 : vector<16x128xf32>
    %51 = vector.extract_strided_slice %30 {offsets = [0, 256], sizes = [16, 128], strides = [1, 1]} : vector<16x384xf32> to vector<16x128xf32>
    %52 = vector.extract_strided_slice %23 {offsets = [0, 256], sizes = [16, 128], strides = [1, 1]} : vector<16x384xf32> to vector<16x128xf32>
    %53 = arith.mulf %42, %52 : vector<16x128xf32>
    %54 = arith.addf %51, %53 : vector<16x128xf32>
    %55 = math.tanh %54 : vector<16x128xf32>
    %cst_30 = arith.constant 1.000000e+00 : f32
    %56 = vector.broadcast %cst_30 : f32 to vector<16x128xf32>
    %57 = arith.subf %56, %50 : vector<16x128xf32>
    %58 = arith.mulf %57, %55 : vector<16x128xf32>
    %59 = arith.mulf %50, %17 : vector<16x128xf32>
    %60 = arith.addf %58, %59 : vector<16x128xf32>
    %61 = vector.shape_cast %20 : vector<16x1xi1> to vector<16x1xi1>
    %62 = vector.broadcast %61 : vector<16x1xi1> to vector<16x128xi1>
    %63 = arith.select %62, %60, %17 : vector<16x128xi1>, vector<16x128xf32>
    %64 = vector.extract_strided_slice %34 {offsets = [0, 0], sizes = [16, 128], strides = [1, 1]} : vector<16x384xf32> to vector<16x128xf32>
    %65 = vector.extract_strided_slice %26 {offsets = [0, 0], sizes = [16, 128], strides = [1, 1]} : vector<16x384xf32> to vector<16x128xf32>
    %66 = arith.addf %64, %65 : vector<16x128xf32>
    %67 = arith.negf %66 : vector<16x128xf32>
    %68 = math.exp %67 : vector<16x128xf32>
    %cst_31 = arith.constant 1.000000e+00 : f32
    %69 = vector.broadcast %cst_31 : f32 to vector<16x128xf32>
    %70 = arith.addf %69, %68 : vector<16x128xf32>
    %71 = arith.divf %69, %70 : vector<16x128xf32>
    %72 = vector.extract_strided_slice %34 {offsets = [0, 128], sizes = [16, 128], strides = [1, 1]} : vector<16x384xf32> to vector<16x128xf32>
    %73 = vector.extract_strided_slice %26 {offsets = [0, 128], sizes = [16, 128], strides = [1, 1]} : vector<16x384xf32> to vector<16x128xf32>
    %74 = arith.addf %72, %73 : vector<16x128xf32>
    %75 = arith.negf %74 : vector<16x128xf32>
    %76 = math.exp %75 : vector<16x128xf32>
    %cst_32 = arith.constant 1.000000e+00 : f32
    %77 = vector.broadcast %cst_32 : f32 to vector<16x128xf32>
    %78 = arith.addf %77, %76 : vector<16x128xf32>
    %79 = arith.divf %77, %78 : vector<16x128xf32>
    %80 = vector.extract_strided_slice %34 {offsets = [0, 256], sizes = [16, 128], strides = [1, 1]} : vector<16x384xf32> to vector<16x128xf32>
    %81 = vector.extract_strided_slice %26 {offsets = [0, 256], sizes = [16, 128], strides = [1, 1]} : vector<16x384xf32> to vector<16x128xf32>
    %82 = arith.mulf %71, %81 : vector<16x128xf32>
    %83 = arith.addf %80, %82 : vector<16x128xf32>
    %84 = math.tanh %83 : vector<16x128xf32>
    %cst_33 = arith.constant 1.000000e+00 : f32
    %85 = vector.broadcast %cst_33 : f32 to vector<16x128xf32>
    %86 = arith.subf %85, %79 : vector<16x128xf32>
    %87 = arith.mulf %86, %84 : vector<16x128xf32>
    %88 = arith.mulf %79, %18 : vector<16x128xf32>
    %89 = arith.addf %87, %88 : vector<16x128xf32>
    %90 = vector.shape_cast %20 : vector<16x1xi1> to vector<16x1xi1>
    %91 = vector.broadcast %90 : vector<16x1xi1> to vector<16x128xi1>
    %92 = arith.select %91, %89, %18 : vector<16x128xi1>, vector<16x128xf32>
    %c1_i32 = arith.constant 1 : i32
    %93 = vector.broadcast %c1_i32 : i32 to vector<16x1xi32>
    %94 = arith.cmpi sgt, %0, %93 : vector<16x1xi32>
    %cst_34 = arith.constant dense<0.000000e+00> : vector<16x384xf32>
    %95 = tpu.matmul %63, %11, %cst_34 {dimension_numbers = #tpu.dot_dimension_numbers<[1], [0], [0], [1], [0, 0, 1, 1], [], []>} : vector<16x128xf32>, vector<128x384xf32>, vector<16x384xf32> -> vector<16x384xf32>
    %96 = vector.broadcast %14 : vector<1x384xf32> to vector<16x384xf32>
    %97 = arith.addf %95, %96 : vector<16x384xf32>
    %cst_35 = arith.constant dense<0.000000e+00> : vector<16x384xf32>
    %98 = tpu.matmul %92, %12, %cst_35 {dimension_numbers = #tpu.dot_dimension_numbers<[1], [0], [0], [1], [0, 0, 1, 1], [], []>} : vector<16x128xf32>, vector<128x384xf32>, vector<16x384xf32> -> vector<16x384xf32>
    %99 = vector.broadcast %16 : vector<1x384xf32> to vector<16x384xf32>
    %100 = arith.addf %98, %99 : vector<16x384xf32>
    %101 = vector.extract_strided_slice %7 {offsets = [16, 0], sizes = [16, 384], strides = [1, 1]} : vector<64x384xbf16> to vector<16x384xbf16>
    %102 = arith.extf %101 : vector<16x384xbf16> to vector<16x384xf32>
    %103 = vector.broadcast %13 : vector<1x384xf32> to vector<16x384xf32>
    %104 = arith.addf %102, %103 : vector<16x384xf32>
    %105 = vector.extract_strided_slice %10 {offsets = [16, 0], sizes = [16, 384], strides = [1, 1]} : vector<64x384xbf16> to vector<16x384xbf16>
    %106 = arith.extf %105 : vector<16x384xbf16> to vector<16x384xf32>
    %107 = vector.broadcast %15 : vector<1x384xf32> to vector<16x384xf32>
    %108 = arith.addf %106, %107 : vector<16x384xf32>
    %109 = vector.extract_strided_slice %104 {offsets = [0, 0], sizes = [16, 128], strides = [1, 1]} : vector<16x384xf32> to vector<16x128xf32>
    %110 = vector.extract_strided_slice %97 {offsets = [0, 0], sizes = [16, 128], strides = [1, 1]} : vector<16x384xf32> to vector<16x128xf32>
    %111 = arith.addf %109, %110 : vector<16x128xf32>
    %112 = arith.negf %111 : vector<16x128xf32>
    %113 = math.exp %112 : vector<16x128xf32>
    %cst_36 = arith.constant 1.000000e+00 : f32
    %114 = vector.broadcast %cst_36 : f32 to vector<16x128xf32>
    %115 = arith.addf %114, %113 : vector<16x128xf32>
    %116 = arith.divf %114, %115 : vector<16x128xf32>
    %117 = vector.extract_strided_slice %104 {offsets = [0, 128], sizes = [16, 128], strides = [1, 1]} : vector<16x384xf32> to vector<16x128xf32>
    %118 = vector.extract_strided_slice %97 {offsets = [0, 128], sizes = [16, 128], strides = [1, 1]} : vector<16x384xf32> to vector<16x128xf32>
    %119 = arith.addf %117, %118 : vector<16x128xf32>
    %120 = arith.negf %119 : vector<16x128xf32>
    %121 = math.exp %120 : vector<16x128xf32>
    %cst_37 = arith.constant 1.000000e+00 : f32
    %122 = vector.broadcast %cst_37 : f32 to vector<16x128xf32>
    %123 = arith.addf %122, %121 : vector<16x128xf32>
    %124 = arith.divf %122, %123 : vector<16x128xf32>
    %125 = vector.extract_strided_slice %104 {offsets = [0, 256], sizes = [16, 128], strides = [1, 1]} : vector<16x384xf32> to vector<16x128xf32>
    %126 = vector.extract_strided_slice %97 {offsets = [0, 256], sizes = [16, 128], strides = [1, 1]} : vector<16x384xf32> to vector<16x128xf32>
    %127 = arith.mulf %116, %126 : vector<16x128xf32>
    %128 = arith.addf %125, %127 : vector<16x128xf32>
    %129 = math.tanh %128 : vector<16x128xf32>
    %cst_38 = arith.constant 1.000000e+00 : f32
    %130 = vector.broadcast %cst_38 : f32 to vector<16x128xf32>
    %131 = arith.subf %130, %124 : vector<16x128xf32>
    %132 = arith.mulf %131, %129 : vector<16x128xf32>
    %133 = arith.mulf %124, %63 : vector<16x128xf32>
    %134 = arith.addf %132, %133 : vector<16x128xf32>
    %135 = vector.shape_cast %94 : vector<16x1xi1> to vector<16x1xi1>
    %136 = vector.broadcast %135 : vector<16x1xi1> to vector<16x128xi1>
    %137 = arith.select %136, %134, %63 : vector<16x128xi1>, vector<16x128xf32>
    %138 = vector.extract_strided_slice %108 {offsets = [0, 0], sizes = [16, 128], strides = [1, 1]} : vector<16x384xf32> to vector<16x128xf32>
    %139 = vector.extract_strided_slice %100 {offsets = [0, 0], sizes = [16, 128], strides = [1, 1]} : vector<16x384xf32> to vector<16x128xf32>
    %140 = arith.addf %138, %139 : vector<16x128xf32>
    %141 = arith.negf %140 : vector<16x128xf32>
    %142 = math.exp %141 : vector<16x128xf32>
    %cst_39 = arith.constant 1.000000e+00 : f32
    %143 = vector.broadcast %cst_39 : f32 to vector<16x128xf32>
    %144 = arith.addf %143, %142 : vector<16x128xf32>
    %145 = arith.divf %143, %144 : vector<16x128xf32>
    %146 = vector.extract_strided_slice %108 {offsets = [0, 128], sizes = [16, 128], strides = [1, 1]} : vector<16x384xf32> to vector<16x128xf32>
    %147 = vector.extract_strided_slice %100 {offsets = [0, 128], sizes = [16, 128], strides = [1, 1]} : vector<16x384xf32> to vector<16x128xf32>
    %148 = arith.addf %146, %147 : vector<16x128xf32>
    %149 = arith.negf %148 : vector<16x128xf32>
    %150 = math.exp %149 : vector<16x128xf32>
    %cst_40 = arith.constant 1.000000e+00 : f32
    %151 = vector.broadcast %cst_40 : f32 to vector<16x128xf32>
    %152 = arith.addf %151, %150 : vector<16x128xf32>
    %153 = arith.divf %151, %152 : vector<16x128xf32>
    %154 = vector.extract_strided_slice %108 {offsets = [0, 256], sizes = [16, 128], strides = [1, 1]} : vector<16x384xf32> to vector<16x128xf32>
    %155 = vector.extract_strided_slice %100 {offsets = [0, 256], sizes = [16, 128], strides = [1, 1]} : vector<16x384xf32> to vector<16x128xf32>
    %156 = arith.mulf %145, %155 : vector<16x128xf32>
    %157 = arith.addf %154, %156 : vector<16x128xf32>
    %158 = math.tanh %157 : vector<16x128xf32>
    %cst_41 = arith.constant 1.000000e+00 : f32
    %159 = vector.broadcast %cst_41 : f32 to vector<16x128xf32>
    %160 = arith.subf %159, %153 : vector<16x128xf32>
    %161 = arith.mulf %160, %158 : vector<16x128xf32>
    %162 = arith.mulf %153, %92 : vector<16x128xf32>
    %163 = arith.addf %161, %162 : vector<16x128xf32>
    %164 = vector.shape_cast %94 : vector<16x1xi1> to vector<16x1xi1>
    %165 = vector.broadcast %164 : vector<16x1xi1> to vector<16x128xi1>
    %166 = arith.select %165, %163, %92 : vector<16x128xi1>, vector<16x128xf32>
    %c2_i32 = arith.constant 2 : i32
    %167 = vector.broadcast %c2_i32 : i32 to vector<16x1xi32>
    %168 = arith.cmpi sgt, %0, %167 : vector<16x1xi32>
    %cst_42 = arith.constant dense<0.000000e+00> : vector<16x384xf32>
    %169 = tpu.matmul %137, %11, %cst_42 {dimension_numbers = #tpu.dot_dimension_numbers<[1], [0], [0], [1], [0, 0, 1, 1], [], []>} : vector<16x128xf32>, vector<128x384xf32>, vector<16x384xf32> -> vector<16x384xf32>
    %170 = vector.broadcast %14 : vector<1x384xf32> to vector<16x384xf32>
    %171 = arith.addf %169, %170 : vector<16x384xf32>
    %cst_43 = arith.constant dense<0.000000e+00> : vector<16x384xf32>
    %172 = tpu.matmul %166, %12, %cst_43 {dimension_numbers = #tpu.dot_dimension_numbers<[1], [0], [0], [1], [0, 0, 1, 1], [], []>} : vector<16x128xf32>, vector<128x384xf32>, vector<16x384xf32> -> vector<16x384xf32>
    %173 = vector.broadcast %16 : vector<1x384xf32> to vector<16x384xf32>
    %174 = arith.addf %172, %173 : vector<16x384xf32>
    %175 = vector.extract_strided_slice %7 {offsets = [32, 0], sizes = [16, 384], strides = [1, 1]} : vector<64x384xbf16> to vector<16x384xbf16>
    %176 = arith.extf %175 : vector<16x384xbf16> to vector<16x384xf32>
    %177 = vector.broadcast %13 : vector<1x384xf32> to vector<16x384xf32>
    %178 = arith.addf %176, %177 : vector<16x384xf32>
    %179 = vector.extract_strided_slice %10 {offsets = [32, 0], sizes = [16, 384], strides = [1, 1]} : vector<64x384xbf16> to vector<16x384xbf16>
    %180 = arith.extf %179 : vector<16x384xbf16> to vector<16x384xf32>
    %181 = vector.broadcast %15 : vector<1x384xf32> to vector<16x384xf32>
    %182 = arith.addf %180, %181 : vector<16x384xf32>
    %183 = vector.extract_strided_slice %178 {offsets = [0, 0], sizes = [16, 128], strides = [1, 1]} : vector<16x384xf32> to vector<16x128xf32>
    %184 = vector.extract_strided_slice %171 {offsets = [0, 0], sizes = [16, 128], strides = [1, 1]} : vector<16x384xf32> to vector<16x128xf32>
    %185 = arith.addf %183, %184 : vector<16x128xf32>
    %186 = arith.negf %185 : vector<16x128xf32>
    %187 = math.exp %186 : vector<16x128xf32>
    %cst_44 = arith.constant 1.000000e+00 : f32
    %188 = vector.broadcast %cst_44 : f32 to vector<16x128xf32>
    %189 = arith.addf %188, %187 : vector<16x128xf32>
    %190 = arith.divf %188, %189 : vector<16x128xf32>
    %191 = vector.extract_strided_slice %178 {offsets = [0, 128], sizes = [16, 128], strides = [1, 1]} : vector<16x384xf32> to vector<16x128xf32>
    %192 = vector.extract_strided_slice %171 {offsets = [0, 128], sizes = [16, 128], strides = [1, 1]} : vector<16x384xf32> to vector<16x128xf32>
    %193 = arith.addf %191, %192 : vector<16x128xf32>
    %194 = arith.negf %193 : vector<16x128xf32>
    %195 = math.exp %194 : vector<16x128xf32>
    %cst_45 = arith.constant 1.000000e+00 : f32
    %196 = vector.broadcast %cst_45 : f32 to vector<16x128xf32>
    %197 = arith.addf %196, %195 : vector<16x128xf32>
    %198 = arith.divf %196, %197 : vector<16x128xf32>
    %199 = vector.extract_strided_slice %178 {offsets = [0, 256], sizes = [16, 128], strides = [1, 1]} : vector<16x384xf32> to vector<16x128xf32>
    %200 = vector.extract_strided_slice %171 {offsets = [0, 256], sizes = [16, 128], strides = [1, 1]} : vector<16x384xf32> to vector<16x128xf32>
    %201 = arith.mulf %190, %200 : vector<16x128xf32>
    %202 = arith.addf %199, %201 : vector<16x128xf32>
    %203 = math.tanh %202 : vector<16x128xf32>
    %cst_46 = arith.constant 1.000000e+00 : f32
    %204 = vector.broadcast %cst_46 : f32 to vector<16x128xf32>
    %205 = arith.subf %204, %198 : vector<16x128xf32>
    %206 = arith.mulf %205, %203 : vector<16x128xf32>
    %207 = arith.mulf %198, %137 : vector<16x128xf32>
    %208 = arith.addf %206, %207 : vector<16x128xf32>
    %209 = vector.shape_cast %168 : vector<16x1xi1> to vector<16x1xi1>
    %210 = vector.broadcast %209 : vector<16x1xi1> to vector<16x128xi1>
    %211 = arith.select %210, %208, %137 : vector<16x128xi1>, vector<16x128xf32>
    %212 = vector.extract_strided_slice %182 {offsets = [0, 0], sizes = [16, 128], strides = [1, 1]} : vector<16x384xf32> to vector<16x128xf32>
    %213 = vector.extract_strided_slice %174 {offsets = [0, 0], sizes = [16, 128], strides = [1, 1]} : vector<16x384xf32> to vector<16x128xf32>
    %214 = arith.addf %212, %213 : vector<16x128xf32>
    %215 = arith.negf %214 : vector<16x128xf32>
    %216 = math.exp %215 : vector<16x128xf32>
    %cst_47 = arith.constant 1.000000e+00 : f32
    %217 = vector.broadcast %cst_47 : f32 to vector<16x128xf32>
    %218 = arith.addf %217, %216 : vector<16x128xf32>
    %219 = arith.divf %217, %218 : vector<16x128xf32>
    %220 = vector.extract_strided_slice %182 {offsets = [0, 128], sizes = [16, 128], strides = [1, 1]} : vector<16x384xf32> to vector<16x128xf32>
    %221 = vector.extract_strided_slice %174 {offsets = [0, 128], sizes = [16, 128], strides = [1, 1]} : vector<16x384xf32> to vector<16x128xf32>
    %222 = arith.addf %220, %221 : vector<16x128xf32>
    %223 = arith.negf %222 : vector<16x128xf32>
    %224 = math.exp %223 : vector<16x128xf32>
    %cst_48 = arith.constant 1.000000e+00 : f32
    %225 = vector.broadcast %cst_48 : f32 to vector<16x128xf32>
    %226 = arith.addf %225, %224 : vector<16x128xf32>
    %227 = arith.divf %225, %226 : vector<16x128xf32>
    %228 = vector.extract_strided_slice %182 {offsets = [0, 256], sizes = [16, 128], strides = [1, 1]} : vector<16x384xf32> to vector<16x128xf32>
    %229 = vector.extract_strided_slice %174 {offsets = [0, 256], sizes = [16, 128], strides = [1, 1]} : vector<16x384xf32> to vector<16x128xf32>
    %230 = arith.mulf %219, %229 : vector<16x128xf32>
    %231 = arith.addf %228, %230 : vector<16x128xf32>
    %232 = math.tanh %231 : vector<16x128xf32>
    %cst_49 = arith.constant 1.000000e+00 : f32
    %233 = vector.broadcast %cst_49 : f32 to vector<16x128xf32>
    %234 = arith.subf %233, %227 : vector<16x128xf32>
    %235 = arith.mulf %234, %232 : vector<16x128xf32>
    %236 = arith.mulf %227, %166 : vector<16x128xf32>
    %237 = arith.addf %235, %236 : vector<16x128xf32>
    %238 = vector.shape_cast %168 : vector<16x1xi1> to vector<16x1xi1>
    %239 = vector.broadcast %238 : vector<16x1xi1> to vector<16x128xi1>
    %240 = arith.select %239, %237, %166 : vector<16x128xi1>, vector<16x128xf32>
    %c3_i32 = arith.constant 3 : i32
    %241 = vector.broadcast %c3_i32 : i32 to vector<16x1xi32>
    %242 = arith.cmpi sgt, %0, %241 : vector<16x1xi32>
    %cst_50 = arith.constant dense<0.000000e+00> : vector<16x384xf32>
    %243 = tpu.matmul %211, %11, %cst_50 {dimension_numbers = #tpu.dot_dimension_numbers<[1], [0], [0], [1], [0, 0, 1, 1], [], []>} : vector<16x128xf32>, vector<128x384xf32>, vector<16x384xf32> -> vector<16x384xf32>
    %244 = vector.broadcast %14 : vector<1x384xf32> to vector<16x384xf32>
    %245 = arith.addf %243, %244 : vector<16x384xf32>
    %cst_51 = arith.constant dense<0.000000e+00> : vector<16x384xf32>
    %246 = tpu.matmul %240, %12, %cst_51 {dimension_numbers = #tpu.dot_dimension_numbers<[1], [0], [0], [1], [0, 0, 1, 1], [], []>} : vector<16x128xf32>, vector<128x384xf32>, vector<16x384xf32> -> vector<16x384xf32>
    %247 = vector.broadcast %16 : vector<1x384xf32> to vector<16x384xf32>
    %248 = arith.addf %246, %247 : vector<16x384xf32>
    %249 = vector.extract_strided_slice %7 {offsets = [48, 0], sizes = [16, 384], strides = [1, 1]} : vector<64x384xbf16> to vector<16x384xbf16>
    %250 = arith.extf %249 : vector<16x384xbf16> to vector<16x384xf32>
    %251 = vector.broadcast %13 : vector<1x384xf32> to vector<16x384xf32>
    %252 = arith.addf %250, %251 : vector<16x384xf32>
    %253 = vector.extract_strided_slice %10 {offsets = [48, 0], sizes = [16, 384], strides = [1, 1]} : vector<64x384xbf16> to vector<16x384xbf16>
    %254 = arith.extf %253 : vector<16x384xbf16> to vector<16x384xf32>
    %255 = vector.broadcast %15 : vector<1x384xf32> to vector<16x384xf32>
    %256 = arith.addf %254, %255 : vector<16x384xf32>
    %257 = vector.extract_strided_slice %252 {offsets = [0, 0], sizes = [16, 128], strides = [1, 1]} : vector<16x384xf32> to vector<16x128xf32>
    %258 = vector.extract_strided_slice %245 {offsets = [0, 0], sizes = [16, 128], strides = [1, 1]} : vector<16x384xf32> to vector<16x128xf32>
    %259 = arith.addf %257, %258 : vector<16x128xf32>
    %260 = arith.negf %259 : vector<16x128xf32>
    %261 = math.exp %260 : vector<16x128xf32>
    %cst_52 = arith.constant 1.000000e+00 : f32
    %262 = vector.broadcast %cst_52 : f32 to vector<16x128xf32>
    %263 = arith.addf %262, %261 : vector<16x128xf32>
    %264 = arith.divf %262, %263 : vector<16x128xf32>
    %265 = vector.extract_strided_slice %252 {offsets = [0, 128], sizes = [16, 128], strides = [1, 1]} : vector<16x384xf32> to vector<16x128xf32>
    %266 = vector.extract_strided_slice %245 {offsets = [0, 128], sizes = [16, 128], strides = [1, 1]} : vector<16x384xf32> to vector<16x128xf32>
    %267 = arith.addf %265, %266 : vector<16x128xf32>
    %268 = arith.negf %267 : vector<16x128xf32>
    %269 = math.exp %268 : vector<16x128xf32>
    %cst_53 = arith.constant 1.000000e+00 : f32
    %270 = vector.broadcast %cst_53 : f32 to vector<16x128xf32>
    %271 = arith.addf %270, %269 : vector<16x128xf32>
    %272 = arith.divf %270, %271 : vector<16x128xf32>
    %273 = vector.extract_strided_slice %252 {offsets = [0, 256], sizes = [16, 128], strides = [1, 1]} : vector<16x384xf32> to vector<16x128xf32>
    %274 = vector.extract_strided_slice %245 {offsets = [0, 256], sizes = [16, 128], strides = [1, 1]} : vector<16x384xf32> to vector<16x128xf32>
    %275 = arith.mulf %264, %274 : vector<16x128xf32>
    %276 = arith.addf %273, %275 : vector<16x128xf32>
    %277 = math.tanh %276 : vector<16x128xf32>
    %cst_54 = arith.constant 1.000000e+00 : f32
    %278 = vector.broadcast %cst_54 : f32 to vector<16x128xf32>
    %279 = arith.subf %278, %272 : vector<16x128xf32>
    %280 = arith.mulf %279, %277 : vector<16x128xf32>
    %281 = arith.mulf %272, %211 : vector<16x128xf32>
    %282 = arith.addf %280, %281 : vector<16x128xf32>
    %283 = vector.shape_cast %242 : vector<16x1xi1> to vector<16x1xi1>
    %284 = vector.broadcast %283 : vector<16x1xi1> to vector<16x128xi1>
    %285 = arith.select %284, %282, %211 : vector<16x128xi1>, vector<16x128xf32>
    %286 = vector.extract_strided_slice %256 {offsets = [0, 0], sizes = [16, 128], strides = [1, 1]} : vector<16x384xf32> to vector<16x128xf32>
    %287 = vector.extract_strided_slice %248 {offsets = [0, 0], sizes = [16, 128], strides = [1, 1]} : vector<16x384xf32> to vector<16x128xf32>
    %288 = arith.addf %286, %287 : vector<16x128xf32>
    %289 = arith.negf %288 : vector<16x128xf32>
    %290 = math.exp %289 : vector<16x128xf32>
    %cst_55 = arith.constant 1.000000e+00 : f32
    %291 = vector.broadcast %cst_55 : f32 to vector<16x128xf32>
    %292 = arith.addf %291, %290 : vector<16x128xf32>
    %293 = arith.divf %291, %292 : vector<16x128xf32>
    %294 = vector.extract_strided_slice %256 {offsets = [0, 128], sizes = [16, 128], strides = [1, 1]} : vector<16x384xf32> to vector<16x128xf32>
    %295 = vector.extract_strided_slice %248 {offsets = [0, 128], sizes = [16, 128], strides = [1, 1]} : vector<16x384xf32> to vector<16x128xf32>
    %296 = arith.addf %294, %295 : vector<16x128xf32>
    %297 = arith.negf %296 : vector<16x128xf32>
    %298 = math.exp %297 : vector<16x128xf32>
    %cst_56 = arith.constant 1.000000e+00 : f32
    %299 = vector.broadcast %cst_56 : f32 to vector<16x128xf32>
    %300 = arith.addf %299, %298 : vector<16x128xf32>
    %301 = arith.divf %299, %300 : vector<16x128xf32>
    %302 = vector.extract_strided_slice %256 {offsets = [0, 256], sizes = [16, 128], strides = [1, 1]} : vector<16x384xf32> to vector<16x128xf32>
    %303 = vector.extract_strided_slice %248 {offsets = [0, 256], sizes = [16, 128], strides = [1, 1]} : vector<16x384xf32> to vector<16x128xf32>
    %304 = arith.mulf %293, %303 : vector<16x128xf32>
    %305 = arith.addf %302, %304 : vector<16x128xf32>
    %306 = math.tanh %305 : vector<16x128xf32>
    %cst_57 = arith.constant 1.000000e+00 : f32
    %307 = vector.broadcast %cst_57 : f32 to vector<16x128xf32>
    %308 = arith.subf %307, %301 : vector<16x128xf32>
    %309 = arith.mulf %308, %306 : vector<16x128xf32>
    %310 = arith.mulf %301, %240 : vector<16x128xf32>
    %311 = arith.addf %309, %310 : vector<16x128xf32>
    %312 = vector.shape_cast %242 : vector<16x1xi1> to vector<16x1xi1>
    %313 = vector.broadcast %312 : vector<16x1xi1> to vector<16x128xi1>
    %314 = arith.select %313, %311, %240 : vector<16x128xi1>, vector<16x128xf32>
    %c0_58 = arith.constant 0 : index
    %c0_59 = arith.constant 0 : index
    %315 = vector.load %arg4[%c0_58, %c0_59] : memref<16x128xbf16, #tpu.memory_space<vmem>>, vector<16x128xbf16>
    %c0_60 = arith.constant 0 : index
    %c0_61 = arith.constant 0 : index
    %316 = vector.load %arg5[%c0_60, %c0_61] : memref<16x128xbf16, #tpu.memory_space<vmem>>, vector<16x128xbf16>
    %c0_62 = arith.constant 0 : index
    %c0_63 = arith.constant 0 : index
    %c0_64 = arith.constant 0 : index
    %317 = vector.load %arg16[%c0_62, %c0_63, %c0_64] : memref<3x128x128xbf16, #tpu.memory_space<vmem>>, vector<1x128x128xbf16>
    %318 = vector.shape_cast %317 : vector<1x128x128xbf16> to vector<128x128xbf16>
    %cst_65 = arith.constant dense<0.000000e+00> : vector<16x128xf32>
    %319 = tpu.matmul %315, %318, %cst_65 {dimension_numbers = #tpu.dot_dimension_numbers<[1], [0], [0], [1], [0, 0, 1, 1], [], []>} : vector<16x128xbf16>, vector<128x128xbf16>, vector<16x128xf32> -> vector<16x128xf32>
    %320 = arith.truncf %285 : vector<16x128xf32> to vector<16x128xbf16>
    %c1 = arith.constant 1 : index
    %c0_66 = arith.constant 0 : index
    %c0_67 = arith.constant 0 : index
    %321 = vector.load %arg16[%c1, %c0_66, %c0_67] : memref<3x128x128xbf16, #tpu.memory_space<vmem>>, vector<1x128x128xbf16>
    %322 = vector.shape_cast %321 : vector<1x128x128xbf16> to vector<128x128xbf16>
    %cst_68 = arith.constant dense<0.000000e+00> : vector<16x128xf32>
    %323 = tpu.matmul %320, %322, %cst_68 {dimension_numbers = #tpu.dot_dimension_numbers<[1], [0], [0], [1], [0, 0, 1, 1], [], []>} : vector<16x128xbf16>, vector<128x128xbf16>, vector<16x128xf32> -> vector<16x128xf32>
    %324 = arith.addf %319, %323 : vector<16x128xf32>
    %c2 = arith.constant 2 : index
    %c0_69 = arith.constant 0 : index
    %c0_70 = arith.constant 0 : index
    %325 = vector.load %arg16[%c2, %c0_69, %c0_70] : memref<3x128x128xbf16, #tpu.memory_space<vmem>>, vector<1x128x128xbf16>
    %326 = vector.shape_cast %325 : vector<1x128x128xbf16> to vector<128x128xbf16>
    %cst_71 = arith.constant dense<0.000000e+00> : vector<16x128xf32>
    %327 = tpu.matmul %316, %326, %cst_71 {dimension_numbers = #tpu.dot_dimension_numbers<[1], [0], [0], [1], [0, 0, 1, 1], [], []>} : vector<16x128xbf16>, vector<128x128xbf16>, vector<16x128xf32> -> vector<16x128xf32>
    %328 = arith.addf %324, %327 : vector<16x128xf32>
    %c0_72 = arith.constant 0 : index
    %c0_73 = arith.constant 0 : index
    %329 = vector.load %arg17[%c0_72, %c0_73] : memref<1x128xf32, #tpu.memory_space<vmem>>, vector<1x128xf32>
    %330 = vector.broadcast %329 : vector<1x128xf32> to vector<16x128xf32>
    %331 = arith.addf %328, %330 : vector<16x128xf32>
    %c0_74 = arith.constant 0 : index
    %c0_75 = arith.constant 0 : index
    %c0_76 = arith.constant 0 : index
    %332 = vector.load %arg18[%c0_74, %c0_75, %c0_76] : memref<2x128x128xbf16, #tpu.memory_space<vmem>>, vector<1x128x128xbf16>
    %333 = vector.shape_cast %332 : vector<1x128x128xbf16> to vector<128x128xbf16>
    %cst_77 = arith.constant dense<0.000000e+00> : vector<16x128xf32>
    %334 = tpu.matmul %315, %333, %cst_77 {dimension_numbers = #tpu.dot_dimension_numbers<[1], [0], [0], [1], [0, 0, 1, 1], [], []>} : vector<16x128xbf16>, vector<128x128xbf16>, vector<16x128xf32> -> vector<16x128xf32>
    %335 = arith.truncf %314 : vector<16x128xf32> to vector<16x128xbf16>
    %c1_78 = arith.constant 1 : index
    %c0_79 = arith.constant 0 : index
    %c0_80 = arith.constant 0 : index
    %336 = vector.load %arg18[%c1_78, %c0_79, %c0_80] : memref<2x128x128xbf16, #tpu.memory_space<vmem>>, vector<1x128x128xbf16>
    %337 = vector.shape_cast %336 : vector<1x128x128xbf16> to vector<128x128xbf16>
    %cst_81 = arith.constant dense<0.000000e+00> : vector<16x128xf32>
    %338 = tpu.matmul %335, %337, %cst_81 {dimension_numbers = #tpu.dot_dimension_numbers<[1], [0], [0], [1], [0, 0, 1, 1], [], []>} : vector<16x128xbf16>, vector<128x128xbf16>, vector<16x128xf32> -> vector<16x128xf32>
    %339 = arith.addf %334, %338 : vector<16x128xf32>
    %c0_82 = arith.constant 0 : index
    %c0_83 = arith.constant 0 : index
    %340 = vector.load %arg19[%c0_82, %c0_83] : memref<1x128xf32, #tpu.memory_space<vmem>>, vector<1x128xf32>
    %341 = vector.broadcast %340 : vector<1x128xf32> to vector<16x128xf32>
    %342 = arith.addf %339, %341 : vector<16x128xf32>
    %c16_i32 = arith.constant 16 : i32
    %343 = arith.muli %arg0, %c16_i32 : i32
    %344 = tpu.iota {dimensions = array<i32: 0>} : vector<16x1xi32>
    %345 = vector.broadcast %343 : i32 to vector<16x1xi32>
    %346 = arith.addi %345, %344 : vector<16x1xi32>
    %c8_i32 = arith.constant 8 : i32
    %347 = vector.broadcast %c8_i32 : i32 to vector<16x1xi32>
    %348 = arith.cmpi slt, %346, %347 : vector<16x1xi32>
    %c0_84 = arith.constant 0 : index
    %c0_85 = arith.constant 0 : index
    %349 = vector.load %arg6[%c0_84, %c0_85] : memref<16x1xi32, #tpu.memory_space<vmem>>, vector<16x1xi32>
    %350 = tpu.iota {dimensions = array<i32: 1>} : vector<16x128xi32>
    %c16_i32_86 = arith.constant 16 : i32
    %351 = vector.broadcast %c16_i32_86 : i32 to vector<16x128xi32>
    %352 = arith.cmpi slt, %350, %351 : vector<16x128xi32>
    %cst_87 = arith.constant 0xFF800000 : f32
    %353 = vector.broadcast %cst_87 : f32 to vector<16x128xf32>
    %354 = arith.select %352, %331, %353 : vector<16x128xi1>, vector<16x128xf32>
    %cst_88 = arith.constant dense<0xFF800000> : vector<16xf32>
    %355 = vector.multi_reduction <maximumf>, %354, %cst_88 [1] : vector<16x128xf32> to vector<16xf32>
    %356 = vector.shape_cast %355 : vector<16xf32> to vector<16x1xf32>
    %357 = vector.broadcast %356 : vector<16x1xf32> to vector<16x128xf32>
    %358 = arith.subf %354, %357 : vector<16x128xf32>
    %359 = math.exp %358 : vector<16x128xf32>
    %cst_89 = arith.constant dense<0.000000e+00> : vector<16xf32>
    %360 = vector.multi_reduction <add>, %359, %cst_89 [1] : vector<16x128xf32> to vector<16xf32>
    %361 = vector.shape_cast %360 : vector<16xf32> to vector<16x1xf32>
    %362 = math.log %361 : vector<16x1xf32>
    %363 = arith.addf %356, %362 : vector<16x1xf32>
    %364 = vector.broadcast %349 : vector<16x1xi32> to vector<16x128xi32>
    %365 = arith.cmpi eq, %350, %364 : vector<16x128xi32>
    %cst_90 = arith.constant 0.000000e+00 : f32
    %366 = vector.broadcast %cst_90 : f32 to vector<16x128xf32>
    %367 = arith.select %365, %354, %366 : vector<16x128xi1>, vector<16x128xf32>
    %cst_91 = arith.constant dense<0.000000e+00> : vector<16xf32>
    %368 = vector.multi_reduction <add>, %367, %cst_91 [1] : vector<16x128xf32> to vector<16xf32>
    %369 = vector.shape_cast %368 : vector<16xf32> to vector<16x1xf32>
    %370 = arith.subf %363, %369 : vector<16x1xf32>
    %cst_92 = arith.constant 0.000000e+00 : f32
    %371 = vector.broadcast %cst_92 : f32 to vector<16x1xf32>
    %372 = arith.select %348, %370, %371 : vector<16x1xi1>, vector<16x1xf32>
    %373 = vector.shape_cast %372 : vector<16x1xf32> to vector<1x16x1xf32>
    %cst_93 = arith.constant dense<0.000000e+00> : vector<1xf32>
    %374 = vector.multi_reduction <add>, %373, %cst_93 [1, 2] : vector<1x16x1xf32> to vector<1xf32>
    %375 = vector.shape_cast %374 : vector<1xf32> to vector<1x1x1xf32>
    %376 = vector.extract %375[0, 0, 0] : f32 from vector<1x1x1xf32>
    %c0_94 = arith.constant 0 : index
    %c0_95 = arith.constant 0 : index
    %377 = vector.load %arg7[%c0_94, %c0_95] : memref<16x1xi32, #tpu.memory_space<vmem>>, vector<16x1xi32>
    %378 = tpu.iota {dimensions = array<i32: 1>} : vector<16x128xi32>
    %c8_i32_96 = arith.constant 8 : i32
    %379 = vector.broadcast %c8_i32_96 : i32 to vector<16x128xi32>
    %380 = arith.cmpi slt, %378, %379 : vector<16x128xi32>
    %cst_97 = arith.constant 0xFF800000 : f32
    %381 = vector.broadcast %cst_97 : f32 to vector<16x128xf32>
    %382 = arith.select %380, %342, %381 : vector<16x128xi1>, vector<16x128xf32>
    %cst_98 = arith.constant dense<0xFF800000> : vector<16xf32>
    %383 = vector.multi_reduction <maximumf>, %382, %cst_98 [1] : vector<16x128xf32> to vector<16xf32>
    %384 = vector.shape_cast %383 : vector<16xf32> to vector<16x1xf32>
    %385 = vector.broadcast %384 : vector<16x1xf32> to vector<16x128xf32>
    %386 = arith.subf %382, %385 : vector<16x128xf32>
    %387 = math.exp %386 : vector<16x128xf32>
    %cst_99 = arith.constant dense<0.000000e+00> : vector<16xf32>
    %388 = vector.multi_reduction <add>, %387, %cst_99 [1] : vector<16x128xf32> to vector<16xf32>
    %389 = vector.shape_cast %388 : vector<16xf32> to vector<16x1xf32>
    %390 = math.log %389 : vector<16x1xf32>
    %391 = arith.addf %384, %390 : vector<16x1xf32>
    %392 = vector.broadcast %377 : vector<16x1xi32> to vector<16x128xi32>
    %393 = arith.cmpi eq, %378, %392 : vector<16x128xi32>
    %cst_100 = arith.constant 0.000000e+00 : f32
    %394 = vector.broadcast %cst_100 : f32 to vector<16x128xf32>
    %395 = arith.select %393, %382, %394 : vector<16x128xi1>, vector<16x128xf32>
    %cst_101 = arith.constant dense<0.000000e+00> : vector<16xf32>
    %396 = vector.multi_reduction <add>, %395, %cst_101 [1] : vector<16x128xf32> to vector<16xf32>
    %397 = vector.shape_cast %396 : vector<16xf32> to vector<16x1xf32>
    %398 = arith.subf %391, %397 : vector<16x1xf32>
    %cst_102 = arith.constant 0.000000e+00 : f32
    %399 = vector.broadcast %cst_102 : f32 to vector<16x1xf32>
    %400 = arith.select %348, %398, %399 : vector<16x1xi1>, vector<16x1xf32>
    %401 = vector.shape_cast %400 : vector<16x1xf32> to vector<1x16x1xf32>
    %cst_103 = arith.constant dense<0.000000e+00> : vector<1xf32>
    %402 = vector.multi_reduction <add>, %401, %cst_103 [1, 2] : vector<1x16x1xf32> to vector<1xf32>
    %403 = vector.shape_cast %402 : vector<1xf32> to vector<1x1x1xf32>
    %404 = vector.extract %403[0, 0, 0] : f32 from vector<1x1x1xf32>
    %cst_104 = arith.constant 1.000000e-01 : f32
    %405 = arith.mulf %cst_104, %404 : f32
    %406 = arith.addf %376, %405 : f32
    %407 = vector.broadcast %406 : f32 to vector<1x128xf32>
    %c0_105 = arith.constant 0 : index
    %c0_106 = arith.constant 0 : index
    %408 = vector.load %arg20[%c0_105, %c0_106] : memref<1x128xf32, #tpu.memory_space<vmem>>, vector<1x128xf32>
    tpu.vector_store %arg20[%c0_105, %c0_106], %407 {strides = array<i32>} : memref<1x128xf32, #tpu.memory_space<vmem>>, vector<1x128xf32>,
    return
  }
  func.func @transform_0(%arg0: i32) -> (i32, i32, i32) {
    %c0_i32 = arith.constant 0 : i32
    %c0_i32_0 = arith.constant 0 : i32
    %c0_i32_1 = arith.constant 0 : i32
    return %c0_i32, %arg0, %c0_i32_0 : i32, i32, i32
  }
  func.func @transform_1(%arg0: i32) -> (i32, i32, i32) {
    %c0_i32 = arith.constant 0 : i32
    %c0_i32_0 = arith.constant 0 : i32
    %c0_i32_1 = arith.constant 0 : i32
    return %c0_i32, %arg0, %c0_i32_0 : i32, i32, i32
  }
  func.func @transform_2(%arg0: i32) -> (i32, i32) {
    %c0_i32 = arith.constant 0 : i32
    %c0_i32_0 = arith.constant 0 : i32
    return %arg0, %c0_i32 : i32, i32
  }
  func.func @transform_3(%arg0: i32) -> (i32, i32) {
    %c0_i32 = arith.constant 0 : i32
    %c0_i32_0 = arith.constant 0 : i32
    return %arg0, %c0_i32 : i32, i32
  }
  func.func @transform_4(%arg0: i32) -> (i32, i32) {
    %c0_i32 = arith.constant 0 : i32
    %c0_i32_0 = arith.constant 0 : i32
    return %arg0, %c0_i32 : i32, i32
  }
  func.func @transform_5(%arg0: i32) -> (i32, i32) {
    %c0_i32 = arith.constant 0 : i32
    %c0_i32_0 = arith.constant 0 : i32
    return %arg0, %c0_i32 : i32, i32
  }
  func.func @transform_6(%arg0: i32) -> (i32, i32) {
    %c0_i32 = arith.constant 0 : i32
    %c0_i32_0 = arith.constant 0 : i32
    return %arg0, %c0_i32 : i32, i32
  }
  func.func @transform_7(%arg0: i32) -> (i32, i32) {
    %c0_i32 = arith.constant 0 : i32
    %c0_i32_0 = arith.constant 0 : i32
    %c0_i32_1 = arith.constant 0 : i32
    return %c0_i32, %c0_i32_0 : i32, i32
  }
  func.func @transform_8(%arg0: i32) -> (i32, i32) {
    %c0_i32 = arith.constant 0 : i32
    %c0_i32_0 = arith.constant 0 : i32
    %c0_i32_1 = arith.constant 0 : i32
    return %c0_i32, %c0_i32_0 : i32, i32
  }
  func.func @transform_9(%arg0: i32) -> (i32, i32) {
    %c0_i32 = arith.constant 0 : i32
    %c0_i32_0 = arith.constant 0 : i32
    %c0_i32_1 = arith.constant 0 : i32
    return %c0_i32, %c0_i32_0 : i32, i32
  }
  func.func @transform_10(%arg0: i32) -> (i32, i32) {
    %c0_i32 = arith.constant 0 : i32
    %c0_i32_0 = arith.constant 0 : i32
    %c0_i32_1 = arith.constant 0 : i32
    return %c0_i32, %c0_i32_0 : i32, i32
  }
  func.func @transform_11(%arg0: i32) -> (i32, i32) {
    %c0_i32 = arith.constant 0 : i32
    %c0_i32_0 = arith.constant 0 : i32
    %c0_i32_1 = arith.constant 0 : i32
    return %c0_i32, %c0_i32_0 : i32, i32
  }
  func.func @transform_12(%arg0: i32) -> (i32, i32) {
    %c0_i32 = arith.constant 0 : i32
    %c0_i32_0 = arith.constant 0 : i32
    %c0_i32_1 = arith.constant 0 : i32
    return %c0_i32, %c0_i32_0 : i32, i32
  }
  func.func @transform_13(%arg0: i32) -> (i32, i32) {
    %c0_i32 = arith.constant 0 : i32
    %c0_i32_0 = arith.constant 0 : i32
    %c0_i32_1 = arith.constant 0 : i32
    return %c0_i32, %c0_i32_0 : i32, i32
  }
  func.func @transform_14(%arg0: i32) -> (i32, i32) {
    %c0_i32 = arith.constant 0 : i32
    %c0_i32_0 = arith.constant 0 : i32
    %c0_i32_1 = arith.constant 0 : i32
    return %c0_i32, %c0_i32_0 : i32, i32
  }
  func.func @transform_15(%arg0: i32) -> (i32, i32, i32) {
    %c0_i32 = arith.constant 0 : i32
    %c0_i32_0 = arith.constant 0 : i32
    %c0_i32_1 = arith.constant 0 : i32
    %c0_i32_2 = arith.constant 0 : i32
    return %c0_i32, %c0_i32_0, %c0_i32_1 : i32, i32, i32
  }
  func.func @transform_16(%arg0: i32) -> (i32, i32) {
    %c0_i32 = arith.constant 0 : i32
    %c0_i32_0 = arith.constant 0 : i32
    %c0_i32_1 = arith.constant 0 : i32
    return %c0_i32, %c0_i32_0 : i32, i32
  }
  func.func @transform_17(%arg0: i32) -> (i32, i32, i32) {
    %c0_i32 = arith.constant 0 : i32
    %c0_i32_0 = arith.constant 0 : i32
    %c0_i32_1 = arith.constant 0 : i32
    %c0_i32_2 = arith.constant 0 : i32
    return %c0_i32, %c0_i32_0, %c0_i32_1 : i32, i32, i32
  }
  func.func @transform_18(%arg0: i32) -> (i32, i32) {
    %c0_i32 = arith.constant 0 : i32
    %c0_i32_0 = arith.constant 0 : i32
    %c0_i32_1 = arith.constant 0 : i32
    return %c0_i32, %c0_i32_0 : i32, i32
  }
  func.func @transform_19(%arg0: i32) -> (i32, i32) {
    %c0_i32 = arith.constant 0 : i32
    %c0_i32_0 = arith.constant 0 : i32
    return %arg0, %c0_i32 : i32, i32
  }
}

</mosaic_0001>

<llo_original>
// kernel: tpu_custom_call.1
$region0: #{tpu_custom_call.1}
  #allocation0 [shape = 'u32[]', space=smem, size = 0x4, offset = 0x4, fixed_abs, tag = 'smem constant byte address 0x4 - core index']
  #allocation1 [shape = 'u32[144,128]{1,0:T(1,128)}', space=vmem, size = 0x12000, scoped, tag = 'internal scratch']
  %s0 = inlined_call_operand.vmem [shape: bf16[4,16,128], index: 0, kind: input, shape index: {}]
  %s1 = inlined_call_operand.hbm [shape: bf16[4,16,128], index: 1, kind: input, shape index: {}]
  %s2 = inlined_call_operand.vmem [shape: s32[16,1], index: 2, kind: input, shape index: {}]
  %s3 = inlined_call_operand.vmem [shape: bf16[16,128], index: 3, kind: input, shape index: {}]
  %s4 = inlined_call_operand.vmem [shape: bf16[16,128], index: 4, kind: input, shape index: {}]
  %s5 = inlined_call_operand.vmem [shape: s32[16,1], index: 5, kind: input, shape index: {}]
  %s6 = inlined_call_operand.vmem [shape: s32[16,1], index: 6, kind: input, shape index: {}]
  %s7 = inlined_call_operand.hbm [shape: bf16[128,384], index: 7, kind: input, shape index: {}]
  %s8 = inlined_call_operand.hbm [shape: f32[128,384], index: 8, kind: input, shape index: {}]
  %s9 = inlined_call_operand.vmem [shape: f32[1,384], index: 9, kind: input, shape index: {}]
  %s10 = inlined_call_operand.vmem [shape: f32[1,384], index: 10, kind: input, shape index: {}]
  %s11 = inlined_call_operand.hbm [shape: bf16[128,384], index: 11, kind: input, shape index: {}]
  %s12 = inlined_call_operand.hbm [shape: f32[128,384], index: 12, kind: input, shape index: {}]
  %s13 = inlined_call_operand.vmem [shape: f32[1,384], index: 13, kind: input, shape index: {}]
  %s14 = inlined_call_operand.vmem [shape: f32[1,384], index: 14, kind: input, shape index: {}]
  %s15 = inlined_call_operand.hbm [shape: bf16[3,128,128], index: 15, kind: input, shape index: {}]
  %s16 = inlined_call_operand.vmem [shape: f32[1,128], index: 16, kind: input, shape index: {}]
  %s17 = inlined_call_operand.hbm [shape: bf16[2,128,128], index: 17, kind: input, shape index: {}]
  %s18 = inlined_call_operand.vmem [shape: f32[1,128], index: 18, kind: input, shape index: {}]
  %s19 = inlined_call_operand.hbm [shape: f32[1,128], index: 19, kind: output, shape index: {}]
  %s20 = sld [smem:[#allocation0]]
  $region114: #{tpu_custom_call.1} parent=0
    _
  %s22 = ssub.s32 1, %s20
  %s23 = scalar_select 0, %s22, %s20
  $region1: #{tpu_custom_call.1} parent=0
    #allocation2 [shape = 'u8[16384]{0}', space=vmem, size = 0x4000, scoped, tag = 'input window, operand 1, single buffered']
    #allocation3 [shape = 's32[1]{0}', space=sflag, size = 0x4, scoped, tag = 'scoped memory for tpu_custom_call.1']
    #allocation4 [shape = 's32[1]{0}', space=sflag, size = 0x4, scoped, tag = 'scoped memory for tpu_custom_call.1']
    #allocation5 [shape = 'u8[98304]{0}', space=vmem, size = 0x18000, scoped, tag = 'input window, operand 7, single buffered']
    #allocation6 [shape = 's32[1]{0}', space=sflag, size = 0x4, scoped, tag = 'scoped memory for tpu_custom_call.1']
    #allocation7 [shape = 'u8[196608]{0}', space=vmem, size = 0x30000, scoped, tag = 'input window, operand 8, single buffered']
    #allocation8 [shape = 'u8[98304]{0}', space=vmem, size = 0x18000, scoped, tag = 'input window, operand 11, single buffered']
    #allocation9 [shape = 's32[1]{0}', space=sflag, size = 0x4, scoped, tag = 'scoped memory for tpu_custom_call.1']
    #allocation10 [shape = 'u8[196608]{0}', space=vmem, size = 0x30000, scoped, tag = 'input window, operand 12, single buffered']
    #allocation11 [shape = 'u8[98304]{0}', space=vmem, size = 0x18000, scoped, tag = 'input window, operand 15, single buffered']
    #allocation12 [shape = 's32[1]{0}', space=sflag, size = 0x4, scoped, tag = 'scoped memory for tpu_custom_call.1']
    #allocation13 [shape = 'u8[65536]{0}', space=vmem, size = 0x10000, scoped, tag = 'input window, operand 17, single buffered']
    #allocation14 [shape = 'u8[512]{0}', space=vmem, size = 0x400, scoped, tag = 'output window, operand 0, single buffered']
    %24 = vsyncpa [#allocation3], 0
    %25 = vsyncpa [#allocation6], 0
    %26 = vsyncpa [#allocation9], 0
    %27 = vsyncpa [#allocation12], 0
    %28 = vsyncpa [#allocation4], 0
    // Predicated region
    $region2: #{tpu_custom_call.1} parent=1 // pred_check
      _
    $region3: #{tpu_custom_call.1} parent=1 // pred_check_branch
      %30 = sbr.rel (0) target = $region5
    $region4: #{tpu_custom_call.1} parent=1 // pred_region
      _
    $region5: #{tpu_custom_call.1} parent=1 // pred_fallthru
      _
    // Predicated region
    $region6: #{tpu_custom_call.1} parent=1 // pred_check
      _
    $region7: #{tpu_custom_call.1} parent=1 // pred_check_branch
      %32 = sbr.rel (0) target = $region9
    $region8: #{tpu_custom_call.1} parent=1 // pred_region
      %s34 = ssub.s32 512, 512
      %35 = vsyncadd [#allocation3], %s34
      %s36 = sshll.u32 [#allocation2], 4
      %s37 = int_to_ptr.vmem [resolvable:$true] %s36
      %42 = dma.hbm_to_vmem [thread:$0]  %s1, 512, %s37, [#allocation3], 64, 64, 4
    $region9: #{tpu_custom_call.1} parent=1 // pred_fallthru
      _
    // Predicated region
    $region10: #{tpu_custom_call.1} parent=1 // pred_check
      _
    $region11: #{tpu_custom_call.1} parent=1 // pred_check_branch
      %44 = sbr.rel (0) target = $region13
    $region12: #{tpu_custom_call.1} parent=1 // pred_region
      _
    $region13: #{tpu_custom_call.1} parent=1 // pred_fallthru
      _
    // Predicated region
    $region14: #{tpu_custom_call.1} parent=1 // pred_check
      _
    $region15: #{tpu_custom_call.1} parent=1 // pred_check_branch
      %46 = sbr.rel (0) target = $region17
    $region16: #{tpu_custom_call.1} parent=1 // pred_region
      _
    $region17: #{tpu_custom_call.1} parent=1 // pred_fallthru
      _
    // Predicated region
    $region18: #{tpu_custom_call.1} parent=1 // pred_check
      _
    $region19: #{tpu_custom_call.1} parent=1 // pred_check_branch
      %48 = sbr.rel (0) target = $region21
    $region20: #{tpu_custom_call.1} parent=1 // pred_region
      _
    $region21: #{tpu_custom_call.1} parent=1 // pred_fallthru
      _
    // Predicated region
    $region22: #{tpu_custom_call.1} parent=1 // pred_check
      _
    $region23: #{tpu_custom_call.1} parent=1 // pred_check_branch
      %50 = sbr.rel (0) target = $region25
    $region24: #{tpu_custom_call.1} parent=1 // pred_region
      _
    $region25: #{tpu_custom_call.1} parent=1 // pred_fallthru
      _
    // Predicated region
    $region26: #{tpu_custom_call.1} parent=1 // pred_check
      _
    $region27: #{tpu_custom_call.1} parent=1 // pred_check_branch
      %52 = sbr.rel (0) target = $region29
    $region28: #{tpu_custom_call.1} parent=1 // pred_region
      _
    $region29: #{tpu_custom_call.1} parent=1 // pred_fallthru
      _
    // Predicated region
    $region30: #{tpu_custom_call.1} parent=1 // pred_check
      _
    $region31: #{tpu_custom_call.1} parent=1 // pred_check_branch
      %54 = sbr.rel (0) target = $region33
    $region32: #{tpu_custom_call.1} parent=1 // pred_region
      %s56 = ssub.s32 3072, 3072
      %57 = vsyncadd [#allocation6], %s56
      %s58 = sshll.u32 [#allocation5], 4
      %s59 = int_to_ptr.vmem [resolvable:$true] %s58
      %64 = dma.hbm_to_vmem [thread:$0]  %s7, 3072, %s59, [#allocation6], 192, 192, 12
    $region33: #{tpu_custom_call.1} parent=1 // pred_fallthru
      _
    // Predicated region
    $region34: #{tpu_custom_call.1} parent=1 // pred_check
      _
    $region35: #{tpu_custom_call.1} parent=1 // pred_check_branch
      %66 = sbr.rel (0) target = $region37
    $region36: #{tpu_custom_call.1} parent=1 // pred_region
      %s68 = ssub.s32 6144, 6144
      %69 = vsyncadd [#allocation6], %s68
      %s70 = sshll.u32 [#allocation7], 4
      %s71 = int_to_ptr.vmem [resolvable:$true] %s70
      %76 = dma.hbm_to_vmem [thread:$0]  %s8, 6144, %s71, [#allocation6], 384, 384, 24
    $region37: #{tpu_custom_call.1} parent=1 // pred_fallthru
      _
    // Predicated region
    $region38: #{tpu_custom_call.1} parent=1 // pred_check
      _
    $region39: #{tpu_custom_call.1} parent=1 // pred_check_branch
      %78 = sbr.rel (0) target = $region41
    $region40: #{tpu_custom_call.1} parent=1 // pred_region
      _
    $region41: #{tpu_custom_call.1} parent=1 // pred_fallthru
      _
    // Predicated region
    $region42: #{tpu_custom_call.1} parent=1 // pred_check
      _
    $region43: #{tpu_custom_call.1} parent=1 // pred_check_branch
      %80 = sbr.rel (0) target = $region45
    $region44: #{tpu_custom_call.1} parent=1 // pred_region
      _
    $region45: #{tpu_custom_call.1} parent=1 // pred_fallthru
      _
    // Predicated region
    $region46: #{tpu_custom_call.1} parent=1 // pred_check
      _
    $region47: #{tpu_custom_call.1} parent=1 // pred_check_branch
      %82 = sbr.rel (0) target = $region49
    $region48: #{tpu_custom_call.1} parent=1 // pred_region
      %s84 = ssub.s32 3072, 3072
      %85 = vsyncadd [#allocation9], %s84
      %s86 = sshll.u32 [#allocation8], 4
      %s87 = int_to_ptr.vmem [resolvable:$true] %s86
      %92 = dma.hbm_to_vmem [thread:$0]  %s11, 3072, %s87, [#allocation9], 192, 192, 12
    $region49: #{tpu_custom_call.1} parent=1 // pred_fallthru
      _
    // Predicated region
    $region50: #{tpu_custom_call.1} parent=1 // pred_check
      _
    $region51: #{tpu_custom_call.1} parent=1 // pred_check_branch
      %94 = sbr.rel (0) target = $region53
    $region52: #{tpu_custom_call.1} parent=1 // pred_region
      %s96 = ssub.s32 6144, 6144
      %97 = vsyncadd [#allocation9], %s96
      %s98 = sshll.u32 [#allocation10], 4
      %s99 = int_to_ptr.vmem [resolvable:$true] %s98
      %104 = dma.hbm_to_vmem [thread:$0]  %s12, 6144, %s99, [#allocation9], 384, 384, 24
    $region53: #{tpu_custom_call.1} parent=1 // pred_fallthru
      _
    // Predicated region
    $region54: #{tpu_custom_call.1} parent=1 // pred_check
      _
    $region55: #{tpu_custom_call.1} parent=1 // pred_check_branch
      %106 = sbr.rel (0) target = $region57
    $region56: #{tpu_custom_call.1} parent=1 // pred_region
      _
    $region57: #{tpu_custom_call.1} parent=1 // pred_fallthru
      _
    // Predicated region
    $region58: #{tpu_custom_call.1} parent=1 // pred_check
      _
    $region59: #{tpu_custom_call.1} parent=1 // pred_check_branch
      %108 = sbr.rel (0) target = $region61
    $region60: #{tpu_custom_call.1} parent=1 // pred_region
      _
    $region61: #{tpu_custom_call.1} parent=1 // pred_fallthru
      _
    // Predicated region
    $region62: #{tpu_custom_call.1} parent=1 // pred_check
      _
    $region63: #{tpu_custom_call.1} parent=1 // pred_check_branch
      %110 = sbr.rel (0) target = $region65
    $region64: #{tpu_custom_call.1} parent=1 // pred_region
      %s112 = ssub.s32 3072, 3072
      %113 = vsyncadd [#allocation12], %s112
      %s114 = sshll.u32 [#allocation11], 4
      %s115 = int_to_ptr.vmem [resolvable:$true] %s114
      %120 = dma.hbm_to_vmem [thread:$0]  %s15, 3072, %s115, [#allocation12], 64, 64, 4
    $region65: #{tpu_custom_call.1} parent=1 // pred_fallthru
      _
    // Predicated region
    $region66: #{tpu_custom_call.1} parent=1 // pred_check
      _
    $region67: #{tpu_custom_call.1} parent=1 // pred_check_branch
      %122 = sbr.rel (0) target = $region69
    $region68: #{tpu_custom_call.1} parent=1 // pred_region
      _
    $region69: #{tpu_custom_call.1} parent=1 // pred_fallthru
      _
    // Predicated region
    $region70: #{tpu_custom_call.1} parent=1 // pred_check
      _
    $region71: #{tpu_custom_call.1} parent=1 // pred_check_branch
      %124 = sbr.rel (0) target = $region73
    $region72: #{tpu_custom_call.1} parent=1 // pred_region
      %s126 = ssub.s32 2048, 2048
      %127 = vsyncadd [#allocation12], %s126
      %s128 = sshll.u32 [#allocation13], 4
      %s129 = int_to_ptr.vmem [resolvable:$true] %s128
      %134 = dma.hbm_to_vmem [thread:$0]  %s17, 2048, %s129, [#allocation12], 64, 64, 4
    $region73: #{tpu_custom_call.1} parent=1 // pred_fallthru
      _
    // Predicated region
    $region74: #{tpu_custom_call.1} parent=1 // pred_check
      _
    $region75: #{tpu_custom_call.1} parent=1 // pred_check_branch
      %136 = sbr.rel (0) target = $region77
    $region76: #{tpu_custom_call.1} parent=1 // pred_region
      _
    $region77: #{tpu_custom_call.1} parent=1 // pred_fallthru
      _
    // Predicated region
    $region78: #{tpu_custom_call.1} parent=1 // pred_check
      _
    $region79: #{tpu_custom_call.1} parent=1 // pred_check_branch
      %138 = sbr.rel (0) target = $region81
    $region80: #{tpu_custom_call.1} parent=1 // pred_region
      %139 = dma.done [#allocation3], 512
    $region81: #{tpu_custom_call.1} parent=1 // pred_fallthru
      _
    // Predicated region
    $region82: #{tpu_custom_call.1} parent=1 // pred_check
      _
    $region83: #{tpu_custom_call.1} parent=1 // pred_check_branch
      %141 = sbr.rel (0) target = $region85
    $region84: #{tpu_custom_call.1} parent=1 // pred_region
      %142 = dma.done [#allocation6], 3072
    $region85: #{tpu_custom_call.1} parent=1 // pred_fallthru
      _
    // Predicated region
    $region86: #{tpu_custom_call.1} parent=1 // pred_check
      _
    $region87: #{tpu_custom_call.1} parent=1 // pred_check_branch
      %144 = sbr.rel (0) target = $region89
    $region88: #{tpu_custom_call.1} parent=1 // pred_region
      %145 = dma.done [#allocation6], 6144
    $region89: #{tpu_custom_call.1} parent=1 // pred_fallthru
      _
    // Predicated region
    $region90: #{tpu_custom_call.1} parent=1 // pred_check
      _
    $region91: #{tpu_custom_call.1} parent=1 // pred_check_branch
      %147 = sbr.rel (0) target = $region93
    $region92: #{tpu_custom_call.1} parent=1 // pred_region
      %148 = dma.done [#allocation9], 3072
    $region93: #{tpu_custom_call.1} parent=1 // pred_fallthru
      _
    // Predicated region
    $region94: #{tpu_custom_call.1} parent=1 // pred_check
      _
    $region95: #{tpu_custom_call.1} parent=1 // pred_check_branch
      %150 = sbr.rel (0) target = $region97
    $region96: #{tpu_custom_call.1} parent=1 // pred_region
      %151 = dma.done [#allocation9], 6144
    $region97: #{tpu_custom_call.1} parent=1 // pred_fallthru
      _
    // Predicated region
    $region98: #{tpu_custom_call.1} parent=1 // pred_check
      _
    $region99: #{tpu_custom_call.1} parent=1 // pred_check_branch
      %153 = sbr.rel (0) target = $region101
    $region100: #{tpu_custom_call.1} parent=1 // pred_region
      %154 = dma.done [#allocation12], 3072
    $region101: #{tpu_custom_call.1} parent=1 // pred_fallthru
      _
    // Predicated region
    $region102: #{tpu_custom_call.1} parent=1 // pred_check
      _
    $region103: #{tpu_custom_call.1} parent=1 // pred_check_branch
      %156 = sbr.rel (0) target = $region105
    $region104: #{tpu_custom_call.1} parent=1 // pred_region
      %157 = dma.done [#allocation12], 2048
    $region105: #{tpu_custom_call.1} parent=1 // pred_fallthru
      _
    %v159 = vld [vmem:[%s2] sm:$0xff]
    %v160 = vld [vmem:[%s2 + $0x8] sm:$0xff]
    %v161 = vld [vmem:[%s0] sm:$0xf]
    %v162 = vld [vmem:[%s0 + $0x4] sm:$0xf]
    %v163 = vld [vmem:[%s0 + $0x8] sm:$0xf]
    %v164 = vld [vmem:[%s0 + $0xc] sm:$0xf]
    %v165 = vld [vmem:[%s0 + $0x10] sm:$0xf]
    %v166 = vld [vmem:[%s0 + $0x14] sm:$0xf]
    %v167 = vld [vmem:[%s0 + $0x18] sm:$0xf]
    %v168 = vld [vmem:[%s0 + $0x1c] sm:$0xf]
    %v169 = vld [vmem:[#allocation2] sm:$0xf]
    %v170 = vld [vmem:[#allocation2 + $0x4] sm:$0xf]
    %v171 = vld [vmem:[#allocation2 + $0x8] sm:$0xf]
    %v172 = vld [vmem:[#allocation2 + $0xc] sm:$0xf]
    %v173 = vld [vmem:[#allocation2 + $0x10] sm:$0xf]
    %v174 = vld [vmem:[#allocation2 + $0x14] sm:$0xf]
    %v175 = vld [vmem:[#allocation2 + $0x18] sm:$0xf]
    %v176 = vld [vmem:[#allocation2 + $0x1c] sm:$0xf]
    %v177 = vld [vmem:[#allocation5] sm:$0xff]
    %v178 = vld [vmem:[#allocation5 + $0x8] sm:$0xf]
    %v179 = vld [vmem:[#allocation5 + $0xc] sm:$0xff]
    %v180 = vld [vmem:[#allocation5 + $0x14] sm:$0xf]
    %v181 = vld [vmem:[#allocation5 + $0x18] sm:$0xff]
    %v182 = vld [vmem:[#allocation5 + $0x20] sm:$0xf]
    %v183 = vld [vmem:[#allocation5 + $0x24] sm:$0xff]
    %v184 = vld [vmem:[#allocation5 + $0x2c] sm:$0xf]
    %v185 = vld [vmem:[#allocation5 + $0x30] sm:$0xff]
    %v186 = vld [vmem:[#allocation5 + $0x38] sm:$0xf]
    %v187 = vld [vmem:[#allocation5 + $0x3c] sm:$0xff]
    %v188 = vld [vmem:[#allocation5 + $0x44] sm:$0xf]
    %v189 = vld [vmem:[#allocation5 + $0x48] sm:$0xff]
    %v190 = vld [vmem:[#allocation5 + $0x50] sm:$0xf]
    %v191 = vld [vmem:[#allocation5 + $0x54] sm:$0xff]
    %v192 = vld [vmem:[#allocation5 + $0x5c] sm:$0xf]
    %v193 = vld [vmem:[#allocation5 + $0x60] sm:$0xff]
    %v194 = vld [vmem:[#allocation5 + $0x68] sm:$0xf]
    %v195 = vld [vmem:[#allocation5 + $0x6c] sm:$0xff]
    %v196 = vld [vmem:[#allocation5 + $0x74] sm:$0xf]
    %v197 = vld [vmem:[#allocation5 + $0x78] sm:$0xff]
    %v198 = vld [vmem:[#allocation5 + $0x80] sm:$0xf]
    %v199 = vld [vmem:[#allocation5 + $0x84] sm:$0xff]
    %v200 = vld [vmem:[#allocation5 + $0x8c] sm:$0xf]
    %v201 = vld [vmem:[#allocation5 + $0x90] sm:$0xff]
    %v202 = vld [vmem:[#allocation5 + $0x98] sm:$0xf]
    %v203 = vld [vmem:[#allocation5 + $0x9c] sm:$0xff]
    %v204 = vld [vmem:[#allocation5 + $0xa4] sm:$0xf]
    %v205 = vld [vmem:[#allocation5 + $0xa8] sm:$0xff]
    %v206 = vld [vmem:[#allocation5 + $0xb0] sm:$0xf]
    %v207 = vld [vmem:[#allocation5 + $0xb4] sm:$0xff]
    %v208 = vld [vmem:[#allocation5 + $0xbc] sm:$0xf]
    %v217 = vunpack.c.l.b16 %v161
    %v218 = vunpack.c.l.b16 %v162
    %v219 = vunpack.c.l.b16 %v163
    %v220 = vunpack.c.l.b16 %v164
    %v221 = vunpack.c.l.b16 %v165
    %v222 = vunpack.c.l.b16 %v166
    %v223 = vunpack.c.l.b16 %v167
    %v224 = vunpack.c.l.b16 %v168
    %v225 = vpack.c.b16 %v218, %v217
    %v226 = vpack.c.b16 %v220, %v219
    %v227 = vpack.c.b16 %v222, %v221
    %v228 = vpack.c.b16 %v224, %v223
    %v265 = vunpack.c.l.b16 %v177
    %v266 = vunpack.c.h.b16 %v177
    %v267 = vunpack.c.l.b16 %v178
    %v268 = vunpack.c.l.b16 %v179
    %v269 = vunpack.c.h.b16 %v179
    %v270 = vunpack.c.l.b16 %v180
    %v271 = vunpack.c.l.b16 %v181
    %v272 = vunpack.c.h.b16 %v181
    %v273 = vunpack.c.l.b16 %v182
    %v274 = vunpack.c.l.b16 %v183
    %v275 = vunpack.c.h.b16 %v183
    %v276 = vunpack.c.l.b16 %v184
    %v277 = vunpack.c.l.b16 %v185
    %v278 = vunpack.c.h.b16 %v185
    %v279 = vunpack.c.l.b16 %v186
    %v280 = vunpack.c.l.b16 %v187
    %v281 = vunpack.c.h.b16 %v187
    %v282 = vunpack.c.l.b16 %v188
    %v283 = vunpack.c.l.b16 %v189
    %v284 = vunpack.c.h.b16 %v189
    %v285 = vunpack.c.l.b16 %v190
    %v286 = vunpack.c.l.b16 %v191
    %v287 = vunpack.c.h.b16 %v191
    %v288 = vunpack.c.l.b16 %v192
    %v289 = vunpack.c.l.b16 %v193
    %v290 = vunpack.c.h.b16 %v193
    %v291 = vunpack.c.l.b16 %v194
    %v292 = vunpack.c.l.b16 %v195
    %v293 = vunpack.c.h.b16 %v195
    %v294 = vunpack.c.l.b16 %v196
    %v295 = vunpack.c.l.b16 %v197
    %v296 = vunpack.c.h.b16 %v197
    %v297 = vunpack.c.l.b16 %v198
    %v298 = vunpack.c.l.b16 %v199
    %v299 = vunpack.c.h.b16 %v199
    %v300 = vunpack.c.l.b16 %v200
    %v301 = vunpack.c.l.b16 %v201
    %v302 = vunpack.c.h.b16 %v201
    %v303 = vunpack.c.l.b16 %v202
    %v304 = vunpack.c.l.b16 %v203
    %v305 = vunpack.c.h.b16 %v203
    %v306 = vunpack.c.l.b16 %v204
    %v307 = vunpack.c.l.b16 %v205
    %v308 = vunpack.c.h.b16 %v205
    %v309 = vunpack.c.l.b16 %v206
    %v310 = vunpack.c.l.b16 %v207
    %v311 = vunpack.c.h.b16 %v207
    %v312 = vunpack.c.l.b16 %v208
    %v313 = vpack.c.b16 %v268, %v265
    %v314 = vpack.c.b16 %v269, %v266
    %v315 = vpack.c.b16 %v270, %v267
    %v316 = vpack.c.b16 %v274, %v271
    %v317 = vpack.c.b16 %v275, %v272
    %v318 = vpack.c.b16 %v276, %v273
    %v319 = vpack.c.b16 %v280, %v277
    %v320 = vpack.c.b16 %v281, %v278
    %v321 = vpack.c.b16 %v282, %v279
    %v322 = vpack.c.b16 %v286, %v283
    %v323 = vpack.c.b16 %v287, %v284
    %v324 = vpack.c.b16 %v288, %v285
    %v325 = vpack.c.b16 %v292, %v289
    %v326 = vpack.c.b16 %v293, %v290
    %v327 = vpack.c.b16 %v294, %v291
    %v328 = vpack.c.b16 %v298, %v295
    %v329 = vpack.c.b16 %v299, %v296
    %v330 = vpack.c.b16 %v300, %v297
    %v331 = vpack.c.b16 %v304, %v301
    %v332 = vpack.c.b16 %v305, %v302
    %v333 = vpack.c.b16 %v306, %v303
    %v334 = vpack.c.b16 %v310, %v307
    %v335 = vpack.c.b16 %v311, %v308
    %v336 = vpack.c.b16 %v312, %v309
    %361 = vmatprep.subr.bf16.mxu0 %v314
    %362 = vmatpush1.bf16.msra.mxu0 %v313
    %363 = vmatprep.subr.bf16.mxu0 %v317
    %364 = vmatpush1.bf16.msra.mxu0 %v316
    %365 = vmatprep.subr.bf16.mxu0 %v320
    %366 = vmatpush1.bf16.msra.mxu0 %v319
    %367 = vmatprep.subr.bf16.mxu0 %v323
    %368 = vmatpush1.bf16.msra.mxu0 %v322
    %369 = vmatprep.subr.bf16.mxu0 %v326
    %370 = vmatpush1.bf16.msra.mxu0 %v325
    %371 = vmatprep.subr.bf16.mxu0 %v329
    %372 = vmatpush1.bf16.msra.mxu0 %v328
    %373 = vmatprep.subr.bf16.mxu0 %v332
    %374 = vmatpush1.bf16.msra.mxu0 %v331
    %375 = vmatprep.subr.bf16.mxu0 %v335
    %376 = vmatpush1.bf16.msra.mxu0 %v334
    %377 = vmatprep.subr.bf16.mxu0 0
    %378 = vmatpush1.bf16.msra.mxu0 0
    %379 = vmatprep.subr.bf16.mxu0 0
    %380 = vmatpush1.bf16.msra.mxu0 0
    %381 = vmatprep.subr.bf16.mxu0 0
    %382 = vmatpush1.bf16.msra.mxu0 0
    %383 = vmatprep.subr.bf16.mxu0 0
    %384 = vmatpush1.bf16.msra.mxu0 0
    %385 = vmatprep.subr.bf16.mxu0 0
    %386 = vmatpush1.bf16.msra.mxu0 0
    %387 = vmatprep.subr.bf16.mxu0 0
    %388 = vmatpush1.bf16.msra.mxu0 0
    %389 = vmatprep.subr.bf16.mxu0 0
    %390 = vmatpush1.bf16.msra.mxu0 0
    %391 = vmatprep.subr.bf16.mxu0 0
    %392 = vmatpush1.bf16.msra.mxu0 0
    %393 = vmatprep.mubr.bf16.mxu0 0
    %394 = vmatmul.mubr.bf16.gmra.mrb[0].mxu0 %v225
    %v395 = vpop.f32.mrb[0].mxu0
    %v396 = vadd.f32 0.0, %v395
    %v397 = vpop.f32.mrb[0].mxu0
    %v398 = vadd.f32 0.0, %v397
    %v399 = vpop.f32.mrb[0].mxu0
    %v400 = vadd.f32 0.0, %v399
    %v401 = vpop.f32.mrb[0].mxu0
    %v402 = vadd.f32 0.0, %v401
    %403 = vmatprep.mubr.bf16.mxu0 0
    %404 = vmatmul.mubr.bf16.gmra.mrb[0].mxu0 %v226
    %v405 = vpop.f32.mrb[0].mxu0
    %v406 = vadd.f32 0.0, %v405
    %v407 = vpop.f32.mrb[0].mxu0
    %v408 = vadd.f32 0.0, %v407
    %v409 = vpop.f32.mrb[0].mxu0
    %v410 = vadd.f32 0.0, %v409
    %v411 = vpop.f32.mrb[0].mxu0
    %v412 = vadd.f32 0.0, %v411
    %413 = vmatprep.mubr.bf16.mxu0 0
    %414 = vmatmul.mubr.bf16.gmra.mrb[0].mxu0 %v227
    %v415 = vpop.f32.mrb[0].mxu0
    %v416 = vadd.f32 0.0, %v415
    %v417 = vpop.f32.mrb[0].mxu0
    %v418 = vadd.f32 0.0, %v417
    %v419 = vpop.f32.mrb[0].mxu0
    %v420 = vadd.f32 0.0, %v419
    %v421 = vpop.f32.mrb[0].mxu0
    %v422 = vadd.f32 0.0, %v421
    %423 = vmatprep.mubr.bf16.mxu0 0
    %424 = vmatmul.mubr.bf16.gmra.mrb[0].mxu0 %v228
    %v425 = vpop.f32.mrb[0].mxu0
    %v426 = vadd.f32 0.0, %v425
    %v427 = vpop.f32.mrb[0].mxu0
    %v428 = vadd.f32 0.0, %v427
    %v429 = vpop.f32.mrb[0].mxu0
    %v430 = vadd.f32 0.0, %v429
    %v431 = vpop.f32.mrb[0].mxu0
    %v432 = vadd.f32 0.0, %v431
    %433 = vdwg.mxu0
    %434 = vmatprep.subr.bf16.mxu0 0
    %435 = vmatpush1.bf16.msra.mxu0 %v315
    %436 = vmatprep.subr.bf16.mxu0 0
    %437 = vmatpush1.bf16.msra.mxu0 %v318
    %438 = vmatprep.subr.bf16.mxu0 0
    %439 = vmatpush1.bf16.msra.mxu0 %v321
    %440 = vmatprep.subr.bf16.mxu0 0
    %441 = vmatpush1.bf16.msra.mxu0 %v324
    %442 = vmatprep.subr.bf16.mxu0 0
    %443 = vmatpush1.bf16.msra.mxu0 %v327
    %444 = vmatprep.subr.bf16.mxu0 0
    %445 = vmatpush1.bf16.msra.mxu0 %v330
    %446 = vmatprep.subr.bf16.mxu0 0
    %447 = vmatpush1.bf16.msra.mxu0 %v333
    %448 = vmatprep.subr.bf16.mxu0 0
    %449 = vmatpush1.bf16.msra.mxu0 %v336
    %450 = vmatprep.subr.bf16.mxu0 0
    %451 = vmatpush1.bf16.msra.mxu0 0
    %452 = vmatprep.subr.bf16.mxu0 0
    %453 = vmatpush1.bf16.msra.mxu0 0
    %454 = vmatprep.subr.bf16.mxu0 0
    %455 = vmatpush1.bf16.msra.mxu0 0
    %456 = vmatprep.subr.bf16.mxu0 0
    %457 = vmatpush1.bf16.msra.mxu0 0
    %458 = vmatprep.subr.bf16.mxu0 0
    %459 = vmatpush1.bf16.msra.mxu0 0
    %460 = vmatprep.subr.bf16.mxu0 0
    %461 = vmatpush1.bf16.msra.mxu0 0
    %462 = vmatprep.subr.bf16.mxu0 0
    %463 = vmatpush1.bf16.msra.mxu0 0
    %464 = vmatprep.subr.bf16.mxu0 0
    %465 = vmatpush1.bf16.msra.mxu0 0
    %466 = vmatprep.mubr.bf16.mxu0 0
    %467 = vmatmul.mubr.bf16.gmra.mrb[0].mxu0 %v225
    %v468 = vpop.f32.mrb[0].mxu0
    %v469 = vadd.f32 0.0, %v468
    %v470 = vpop.f32.mrb[0].mxu0
    %v471 = vpop.f32.mrb[0].mxu0
    %v472 = vadd.f32 0.0, %v471
    %v473 = vpop.f32.mrb[0].mxu0
    %474 = vmatprep.mubr.bf16.mxu0 0
    %475 = vmatmul.mubr.bf16.gmra.mrb[0].mxu0 %v226
    %v476 = vpop.f32.mrb[0].mxu0
    %v477 = vadd.f32 0.0, %v476
    %v478 = vpop.f32.mrb[0].mxu0
    %v479 = vpop.f32.mrb[0].mxu0
    %v480 = vadd.f32 0.0, %v479
    %v481 = vpop.f32.mrb[0].mxu0
    %482 = vmatprep.mubr.bf16.mxu0 0
    %483 = vmatmul.mubr.bf16.gmra.mrb[0].mxu0 %v227
    %v484 = vpop.f32.mrb[0].mxu0
    %v485 = vadd.f32 0.0, %v484
    %v486 = vpop.f32.mrb[0].mxu0
    %v487 = vpop.f32.mrb[0].mxu0
    %v488 = vadd.f32 0.0, %v487
    %v489 = vpop.f32.mrb[0].mxu0
    %490 = vmatprep.mubr.bf16.mxu0 0
    %491 = vmatmul.mubr.bf16.gmra.mrb[0].mxu0 %v228
    %v492 = vpop.f32.mrb[0].mxu0
    %v493 = vadd.f32 0.0, %v492
    %v494 = vpop.f32.mrb[0].mxu0
    %v495 = vpop.f32.mrb[0].mxu0
    %v496 = vadd.f32 0.0, %v495
    %v497 = vpop.f32.mrb[0].mxu0
    %498 = vdwg.mxu0
    %v499 = vpack.c.bf16 %v400, %v396
    %v500 = vpack.c.bf16 %v402, %v398
    %v501 = vpack.c.bf16 %v472, %v469
    %v502 = vpack.c.bf16 %v410, %v406
    %v503 = vpack.c.bf16 %v412, %v408
    %v504 = vpack.c.bf16 %v480, %v477
    %v505 = vpack.c.bf16 %v420, %v416
    %v506 = vpack.c.bf16 %v422, %v418
    %v507 = vpack.c.bf16 %v488, %v485
    %v508 = vpack.c.bf16 %v430, %v426
    %v509 = vpack.c.bf16 %v432, %v428
    %v510 = vpack.c.bf16 %v496, %v493
    %v511 = vld [vmem:[#allocation8] sm:$0xff]
    %v512 = vld [vmem:[#allocation8 + $0x8] sm:$0xf]
    %v513 = vld [vmem:[#allocation8 + $0xc] sm:$0xff]
    %v514 = vld [vmem:[#allocation8 + $0x14] sm:$0xf]
    %v515 = vld [vmem:[#allocation8 + $0x18] sm:$0xff]
    %v516 = vld [vmem:[#allocation8 + $0x20] sm:$0xf]
    %v517 = vld [vmem:[#allocation8 + $0x24] sm:$0xff]
    %v518 = vld [vmem:[#allocation8 + $0x2c] sm:$0xf]
    %v519 = vld [vmem:[#allocation8 + $0x30] sm:$0xff]
    %v520 = vld [vmem:[#allocation8 + $0x38] sm:$0xf]
    %v521 = vld [vmem:[#allocation8 + $0x3c] sm:$0xff]
    %v522 = vld [vmem:[#allocation8 + $0x44] sm:$0xf]
    %v523 = vld [vmem:[#allocation8 + $0x48] sm:$0xff]
    %v524 = vld [vmem:[#allocation8 + $0x50] sm:$0xf]
    %v525 = vld [vmem:[#allocation8 + $0x54] sm:$0xff]
    %v526 = vld [vmem:[#allocation8 + $0x5c] sm:$0xf]
    %v527 = vld [vmem:[#allocation8 + $0x60] sm:$0xff]
    %v528 = vld [vmem:[#allocation8 + $0x68] sm:$0xf]
    %v529 = vld [vmem:[#allocation8 + $0x6c] sm:$0xff]
    %v530 = vld [vmem:[#allocation8 + $0x74] sm:$0xf]
    %v531 = vld [vmem:[#allocation8 + $0x78] sm:$0xff]
    %v532 = vld [vmem:[#allocation8 + $0x80] sm:$0xf]
    %v533 = vld [vmem:[#allocation8 + $0x84] sm:$0xff]
    %v534 = vld [vmem:[#allocation8 + $0x8c] sm:$0xf]
    %v535 = vld [vmem:[#allocation8 + $0x90] sm:$0xff]
    %v536 = vld [vmem:[#allocation8 + $0x98] sm:$0xf]
    %v537 = vld [vmem:[#allocation8 + $0x9c] sm:$0xff]
    %v538 = vld [vmem:[#allocation8 + $0xa4] sm:$0xf]
    %v539 = vld [vmem:[#allocation8 + $0xa8] sm:$0xff]
    %v540 = vld [vmem:[#allocation8 + $0xb0] sm:$0xf]
    %v541 = vld [vmem:[#allocation8 + $0xb4] sm:$0xff]
    %v542 = vld [vmem:[#allocation8 + $0xbc] sm:$0xf]
    %v551 = vunpack.c.l.b16 %v169
    %v552 = vunpack.c.l.b16 %v170
    %v553 = vunpack.c.l.b16 %v171
    %v554 = vunpack.c.l.b16 %v172
    %v555 = vunpack.c.l.b16 %v173
    %v556 = vunpack.c.l.b16 %v174
    %v557 = vunpack.c.l.b16 %v175
    %v558 = vunpack.c.l.b16 %v176
    %v559 = vpack.c.b16 %v552, %v551
    %v560 = vpack.c.b16 %v554, %v553
    %v561 = vpack.c.b16 %v556, %v555
    %v562 = vpack.c.b16 %v558, %v557
    %v599 = vunpack.c.l.b16 %v511
    %v600 = vunpack.c.h.b16 %v511
    %v601 = vunpack.c.l.b16 %v512
    %v602 = vunpack.c.l.b16 %v513
    %v603 = vunpack.c.h.b16 %v513
    %v604 = vunpack.c.l.b16 %v514
    %v605 = vunpack.c.l.b16 %v515
    %v606 = vunpack.c.h.b16 %v515
    %v607 = vunpack.c.l.b16 %v516
    %v608 = vunpack.c.l.b16 %v517
    %v609 = vunpack.c.h.b16 %v517
    %v610 = vunpack.c.l.b16 %v518
    %v611 = vunpack.c.l.b16 %v519
    %v612 = vunpack.c.h.b16 %v519
    %v613 = vunpack.c.l.b16 %v520
    %v614 = vunpack.c.l.b16 %v521
    %v615 = vunpack.c.h.b16 %v521
    %v616 = vunpack.c.l.b16 %v522
    %v617 = vunpack.c.l.b16 %v523
    %v618 = vunpack.c.h.b16 %v523
    %v619 = vunpack.c.l.b16 %v524
    %v620 = vunpack.c.l.b16 %v525
    %v621 = vunpack.c.h.b16 %v525
    %v622 = vunpack.c.l.b16 %v526
    %v623 = vunpack.c.l.b16 %v527
    %v624 = vunpack.c.h.b16 %v527
    %v625 = vunpack.c.l.b16 %v528
    %v626 = vunpack.c.l.b16 %v529
    %v627 = vunpack.c.h.b16 %v529
    %v628 = vunpack.c.l.b16 %v530
    %v629 = vunpack.c.l.b16 %v531
    %v630 = vunpack.c.h.b16 %v531
    %v631 = vunpack.c.l.b16 %v532
    %v632 = vunpack.c.l.b16 %v533
    %v633 = vunpack.c.h.b16 %v533
    %v634 = vunpack.c.l.b16 %v534
    %v635 = vunpack.c.l.b16 %v535
    %v636 = vunpack.c.h.b16 %v535
    %v637 = vunpack.c.l.b16 %v536
    %v638 = vunpack.c.l.b16 %v537
    %v639 = vunpack.c.h.b16 %v537
    %v640 = vunpack.c.l.b16 %v538
    %v641 = vunpack.c.l.b16 %v539
    %v642 = vunpack.c.h.b16 %v539
    %v643 = vunpack.c.l.b16 %v540
    %v644 = vunpack.c.l.b16 %v541
    %v645 = vunpack.c.h.b16 %v541
    %v646 = vunpack.c.l.b16 %v542
    %v647 = vpack.c.b16 %v602, %v599
    %v648 = vpack.c.b16 %v603, %v600
    %v649 = vpack.c.b16 %v604, %v601
    %v650 = vpack.c.b16 %v608, %v605
    %v651 = vpack.c.b16 %v609, %v606
    %v652 = vpack.c.b16 %v610, %v607
    %v653 = vpack.c.b16 %v614, %v611
    %v654 = vpack.c.b16 %v615, %v612
    %v655 = vpack.c.b16 %v616, %v613
    %v656 = vpack.c.b16 %v620, %v617
    %v657 = vpack.c.b16 %v621, %v618
    %v658 = vpack.c.b16 %v622, %v619
    %v659 = vpack.c.b16 %v626, %v623
    %v660 = vpack.c.b16 %v627, %v624
    %v661 = vpack.c.b16 %v628, %v625
    %v662 = vpack.c.b16 %v632, %v629
    %v663 = vpack.c.b16 %v633, %v630
    %v664 = vpack.c.b16 %v634, %v631
    %v665 = vpack.c.b16 %v638, %v635
    %v666 = vpack.c.b16 %v639, %v636
    %v667 = vpack.c.b16 %v640, %v637
    %v668 = vpack.c.b16 %v644, %v641
    %v669 = vpack.c.b16 %v645, %v642
    %v670 = vpack.c.b16 %v646, %v643
    %695 = vmatprep.subr.bf16.mxu0 %v648
    %696 = vmatpush1.bf16.msra.mxu0 %v647
    %697 = vmatprep.subr.bf16.mxu0 %v651
    %698 = vmatpush1.bf16.msra.mxu0 %v650
    %699 = vmatprep.subr.bf16.mxu0 %v654
    %700 = vmatpush1.bf16.msra.mxu0 %v653
    %701 = vmatprep.subr.bf16.mxu0 %v657
    %702 = vmatpush1.bf16.msra.mxu0 %v656
    %703 = vmatprep.subr.bf16.mxu0 %v660
    %704 = vmatpush1.bf16.msra.mxu0 %v659
    %705 = vmatprep.subr.bf16.mxu0 %v663
    %706 = vmatpush1.bf16.msra.mxu0 %v662
    %707 = vmatprep.subr.bf16.mxu0 %v666
    %708 = vmatpush1.bf16.msra.mxu0 %v665
    %709 = vmatprep.subr.bf16.mxu0 %v669
    %710 = vmatpush1.bf16.msra.mxu0 %v668
    %711 = vmatprep.subr.bf16.mxu0 0
    %712 = vmatpush1.bf16.msra.mxu0 0
    %713 = vmatprep.subr.bf16.mxu0 0
    %714 = vmatpush1.bf16.msra.mxu0 0
    %715 = vmatprep.subr.bf16.mxu0 0
    %716 = vmatpush1.bf16.msra.mxu0 0
    %717 = vmatprep.subr.bf16.mxu0 0
    %718 = vmatpush1.bf16.msra.mxu0 0
    %719 = vmatprep.subr.bf16.mxu0 0
    %720 = vmatpush1.bf16.msra.mxu0 0
    %721 = vmatprep.subr.bf16.mxu0 0
    %722 = vmatpush1.bf16.msra.mxu0 0
    %723 = vmatprep.subr.bf16.mxu0 0
    %724 = vmatpush1.bf16.msra.mxu0 0
    %725 = vmatprep.subr.bf16.mxu0 0
    %726 = vmatpush1.bf16.msra.mxu0 0
    %727 = vmatprep.mubr.bf16.mxu0 0
    %728 = vmatmul.mubr.bf16.gmra.mrb[0].mxu0 %v559
    %v729 = vpop.f32.mrb[0].mxu0
    %v730 = vadd.f32 0.0, %v729
    %v731 = vpop.f32.mrb[0].mxu0
    %v732 = vadd.f32 0.0, %v731
    %v733 = vpop.f32.mrb[0].mxu0
    %v734 = vadd.f32 0.0, %v733
    %v735 = vpop.f32.mrb[0].mxu0
    %v736 = vadd.f32 0.0, %v735
    %737 = vmatprep.mubr.bf16.mxu0 0
    %738 = vmatmul.mubr.bf16.gmra.mrb[0].mxu0 %v560
    %v739 = vpop.f32.mrb[0].mxu0
    %v740 = vadd.f32 0.0, %v739
    %v741 = vpop.f32.mrb[0].mxu0
    %v742 = vadd.f32 0.0, %v741
    %v743 = vpop.f32.mrb[0].mxu0
    %v744 = vadd.f32 0.0, %v743
    %v745 = vpop.f32.mrb[0].mxu0
    %v746 = vadd.f32 0.0, %v745
    %747 = vmatprep.mubr.bf16.mxu0 0
    %748 = vmatmul.mubr.bf16.gmra.mrb[0].mxu0 %v561
    %v749 = vpop.f32.mrb[0].mxu0
    %v750 = vadd.f32 0.0, %v749
    %v751 = vpop.f32.mrb[0].mxu0
    %v752 = vadd.f32 0.0, %v751
    %v753 = vpop.f32.mrb[0].mxu0
    %v754 = vadd.f32 0.0, %v753
    %v755 = vpop.f32.mrb[0].mxu0
    %v756 = vadd.f32 0.0, %v755
    %757 = vmatprep.mubr.bf16.mxu0 0
    %758 = vmatmul.mubr.bf16.gmra.mrb[0].mxu0 %v562
    %v759 = vpop.f32.mrb[0].mxu0
    %v760 = vadd.f32 0.0, %v759
    %v761 = vpop.f32.mrb[0].mxu0
    %v762 = vadd.f32 0.0, %v761
    %v763 = vpop.f32.mrb[0].mxu0
    %v764 = vadd.f32 0.0, %v763
    %v765 = vpop.f32.mrb[0].mxu0
    %v766 = vadd.f32 0.0, %v765
    %767 = vdwg.mxu0
    %768 = vmatprep.subr.bf16.mxu0 0
    %769 = vmatpush1.bf16.msra.mxu0 %v649
    %770 = vmatprep.subr.bf16.mxu0 0
    %771 = vmatpush1.bf16.msra.mxu0 %v652
    %772 = vmatprep.subr.bf16.mxu0 0
    %773 = vmatpush1.bf16.msra.mxu0 %v655
    %774 = vmatprep.subr.bf16.mxu0 0
    %775 = vmatpush1.bf16.msra.mxu0 %v658
    %776 = vmatprep.subr.bf16.mxu0 0
    %777 = vmatpush1.bf16.msra.mxu0 %v661
    %778 = vmatprep.subr.bf16.mxu0 0
    %779 = vmatpush1.bf16.msra.mxu0 %v664
    %780 = vmatprep.subr.bf16.mxu0 0
    %781 = vmatpush1.bf16.msra.mxu0 %v667
    %782 = vmatprep.subr.bf16.mxu0 0
    %783 = vmatpush1.bf16.msra.mxu0 %v670
    %784 = vmatprep.subr.bf16.mxu0 0
    %785 = vmatpush1.bf16.msra.mxu0 0
    %786 = vmatprep.subr.bf16.mxu0 0
    %787 = vmatpush1.bf16.msra.mxu0 0
    %788 = vmatprep.subr.bf16.mxu0 0
    %789 = vmatpush1.bf16.msra.mxu0 0
    %790 = vmatprep.subr.bf16.mxu0 0
    %791 = vmatpush1.bf16.msra.mxu0 0
    %792 = vmatprep.subr.bf16.mxu0 0
    %793 = vmatpush1.bf16.msra.mxu0 0
    %794 = vmatprep.subr.bf16.mxu0 0
    %795 = vmatpush1.bf16.msra.mxu0 0
    %796 = vmatprep.subr.bf16.mxu0 0
    %797 = vmatpush1.bf16.msra.mxu0 0
    %798 = vmatprep.subr.bf16.mxu0 0
    %799 = vmatpush1.bf16.msra.mxu0 0
    %800 = vmatprep.mubr.bf16.mxu0 0
    %801 = vmatmul.mubr.bf16.gmra.mrb[0].mxu0 %v559
    %v802 = vpop.f32.mrb[0].mxu0
    %v803 = vadd.f32 0.0, %v802
    %v804 = vpop.f32.mrb[0].mxu0
    %v805 = vpop.f32.mrb[0].mxu0
    %v806 = vadd.f32 0.0, %v805
    %v807 = vpop.f32.mrb[0].mxu0
    %808 = vmatprep.mubr.bf16.mxu0 0
    %809 = vmatmul.mubr.bf16.gmra.mrb[0].mxu0 %v560
    %v810 = vpop.f32.mrb[0].mxu0
    %v811 = vadd.f32 0.0, %v810
    %v812 = vpop.f32.mrb[0].mxu0
    %v813 = vpop.f32.mrb[0].mxu0
    %v814 = vadd.f32 0.0, %v813
    %v815 = vpop.f32.mrb[0].mxu0
    %816 = vmatprep.mubr.bf16.mxu0 0
    %817 = vmatmul.mubr.bf16.gmra.mrb[0].mxu0 %v561
    %v818 = vpop.f32.mrb[0].mxu0
    %v819 = vadd.f32 0.0, %v818
    %v820 = vpop.f32.mrb[0].mxu0
    %v821 = vpop.f32.mrb[0].mxu0
    %v822 = vadd.f32 0.0, %v821
    %v823 = vpop.f32.mrb[0].mxu0
    %824 = vmatprep.mubr.bf16.mxu0 0
    %825 = vmatmul.mubr.bf16.gmra.mrb[0].mxu0 %v562
    %v826 = vpop.f32.mrb[0].mxu0
    %v827 = vadd.f32 0.0, %v826
    %v828 = vpop.f32.mrb[0].mxu0
    %v829 = vpop.f32.mrb[0].mxu0
    %v830 = vadd.f32 0.0, %v829
    %v831 = vpop.f32.mrb[0].mxu0
    %832 = vdwg.mxu0
    %v833 = vpack.c.bf16 %v734, %v730
    %v834 = vpack.c.bf16 %v736, %v732
    %v835 = vpack.c.bf16 %v806, %v803
    %v836 = vpack.c.bf16 %v744, %v740
    %v837 = vpack.c.bf16 %v746, %v742
    %v838 = vpack.c.bf16 %v814, %v811
    %v839 = vpack.c.bf16 %v754, %v750
    %v840 = vpack.c.bf16 %v756, %v752
    %v841 = vpack.c.bf16 %v822, %v819
    %v842 = vpack.c.bf16 %v764, %v760
    %v843 = vpack.c.bf16 %v766, %v762
    %v844 = vpack.c.bf16 %v830, %v827
    %v845 = vld [vmem:[#allocation7] sm:$0xff]
    %v846 = vld [vmem:[#allocation7 + $0x8] sm:$0xff]
    %v847 = vld [vmem:[#allocation7 + $0x10] sm:$0xff]
    %v848 = vld [vmem:[#allocation7 + $0x18] sm:$0xff]
    %v849 = vld [vmem:[#allocation7 + $0x20] sm:$0xff]
    %v850 = vld [vmem:[#allocation7 + $0x28] sm:$0xff]
    %v851 = vld [vmem:[#allocation7 + $0x30] sm:$0xff]
    %v852 = vld [vmem:[#allocation7 + $0x38] sm:$0xff]
    %v853 = vld [vmem:[#allocation7 + $0x40] sm:$0xff]
    %v854 = vld [vmem:[#allocation7 + $0x48] sm:$0xff]
    %v855 = vld [vmem:[#allocation7 + $0x50] sm:$0xff]
    %v856 = vld [vmem:[#allocation7 + $0x58] sm:$0xff]
    %v857 = vld [vmem:[#allocation7 + $0x60] sm:$0xff]
    %v858 = vld [vmem:[#allocation7 + $0x68] sm:$0xff]
    %v859 = vld [vmem:[#allocation7 + $0x70] sm:$0xff]
    %v860 = vld [vmem:[#allocation7 + $0x78] sm:$0xff]
    %v861 = vld [vmem:[#allocation7 + $0x80] sm:$0xff]
    %v862 = vld [vmem:[#allocation7 + $0x88] sm:$0xff]
    %v863 = vld [vmem:[#allocation7 + $0x90] sm:$0xff]
    %v864 = vld [vmem:[#allocation7 + $0x98] sm:$0xff]
    %v865 = vld [vmem:[#allocation7 + $0xa0] sm:$0xff]
    %v866 = vld [vmem:[#allocation7 + $0xa8] sm:$0xff]
    %v867 = vld [vmem:[#allocation7 + $0xb0] sm:$0xff]
    %v868 = vld [vmem:[#allocation7 + $0xb8] sm:$0xff]
    %v869 = vld [vmem:[#allocation7 + $0xc0] sm:$0xff]
    %v870 = vld [vmem:[#allocation7 + $0xc8] sm:$0xff]
    %v871 = vld [vmem:[#allocation7 + $0xd0] sm:$0xff]
    %v872 = vld [vmem:[#allocation7 + $0xd8] sm:$0xff]
    %v873 = vld [vmem:[#allocation7 + $0xe0] sm:$0xff]
    %v874 = vld [vmem:[#allocation7 + $0xe8] sm:$0xff]
    %v875 = vld [vmem:[#allocation7 + $0xf0] sm:$0xff]
    %v876 = vld [vmem:[#allocation7 + $0xf8] sm:$0xff]
    %v877 = vld [vmem:[#allocation7 + $0x100] sm:$0xff]
    %v878 = vld [vmem:[#allocation7 + $0x108] sm:$0xff]
    %v879 = vld [vmem:[#allocation7 + $0x110] sm:$0xff]
    %v880 = vld [vmem:[#allocation7 + $0x118] sm:$0xff]
    %v881 = vld [vmem:[#allocation7 + $0x120] sm:$0xff]
    %v882 = vld [vmem:[#allocation7 + $0x128] sm:$0xff]
    %v883 = vld [vmem:[#allocation7 + $0x130] sm:$0xff]
    %v884 = vld [vmem:[#allocation7 + $0x138] sm:$0xff]
    %v885 = vld [vmem:[#allocation7 + $0x140] sm:$0xff]
    %v886 = vld [vmem:[#allocation7 + $0x148] sm:$0xff]
    %v887 = vld [vmem:[#allocation7 + $0x150] sm:$0xff]
    %v888 = vld [vmem:[#allocation7 + $0x158] sm:$0xff]
    %v889 = vld [vmem:[#allocation7 + $0x160] sm:$0xff]
    %v890 = vld [vmem:[#allocation7 + $0x168] sm:$0xff]
    %v891 = vld [vmem:[#allocation7 + $0x170] sm:$0xff]
    %v892 = vld [vmem:[#allocation7 + $0x178] sm:$0xff]
    %v893 = vld [vmem:[#allocation10] sm:$0xff]
    %v894 = vld [vmem:[#allocation10 + $0x8] sm:$0xff]
    %v895 = vld [vmem:[#allocation10 + $0x10] sm:$0xff]
    %v896 = vld [vmem:[#allocation10 + $0x18] sm:$0xff]
    %v897 = vld [vmem:[#allocation10 + $0x20] sm:$0xff]
    %v898 = vld [vmem:[#allocation10 + $0x28] sm:$0xff]
    %v899 = vld [vmem:[#allocation10 + $0x30] sm:$0xff]
    %v900 = vld [vmem:[#allocation10 + $0x38] sm:$0xff]
    %v901 = vld [vmem:[#allocation10 + $0x40] sm:$0xff]
    %v902 = vld [vmem:[#allocation10 + $0x48] sm:$0xff]
    %v903 = vld [vmem:[#allocation10 + $0x50] sm:$0xff]
    %v904 = vld [vmem:[#allocation10 + $0x58] sm:$0xff]
    %v905 = vld [vmem:[#allocation10 + $0x60] sm:$0xff]
    %v906 = vld [vmem:[#allocation10 + $0x68] sm:$0xff]
    %v907 = vld [vmem:[#allocation10 + $0x70] sm:$0xff]
    %v908 = vld [vmem:[#allocation10 + $0x78] sm:$0xff]
    %v909 = vld [vmem:[#allocation10 + $0x80] sm:$0xff]
    %v910 = vld [vmem:[#allocation10 + $0x88] sm:$0xff]
    %v911 = vld [vmem:[#allocation10 + $0x90] sm:$0xff]
    %v912 = vld [vmem:[#allocation10 + $0x98] sm:$0xff]
    %v913 = vld [vmem:[#allocation10 + $0xa0] sm:$0xff]
    %v914 = vld [vmem:[#allocation10 + $0xa8] sm:$0xff]
    %v915 = vld [vmem:[#allocation10 + $0xb0] sm:$0xff]
    %v916 = vld [vmem:[#allocation10 + $0xb8] sm:$0xff]
    %v917 = vld [vmem:[#allocation10 + $0xc0] sm:$0xff]
    %v918 = vld [vmem:[#allocation10 + $0xc8] sm:$0xff]
    %v919 = vld [vmem:[#allocation10 + $0xd0] sm:$0xff]
    %v920 = vld [vmem:[#allocation10 + $0xd8] sm:$0xff]
    %v921 = vld [vmem:[#allocation10 + $0xe0] sm:$0xff]
    %v922 = vld [vmem:[#allocation10 + $0xe8] sm:$0xff]
    %v923 = vld [vmem:[#allocation10 + $0xf0] sm:$0xff]
    %v924 = vld [vmem:[#allocation10 + $0xf8] sm:$0xff]
    %v925 = vld [vmem:[#allocation10 + $0x100] sm:$0xff]
    %v926 = vld [vmem:[#allocation10 + $0x108] sm:$0xff]
    %v927 = vld [vmem:[#allocation10 + $0x110] sm:$0xff]
    %v928 = vld [vmem:[#allocation10 + $0x118] sm:$0xff]
    %v929 = vld [vmem:[#allocation10 + $0x120] sm:$0xff]
    %v930 = vld [vmem:[#allocation10 + $0x128] sm:$0xff]
    %v931 = vld [vmem:[#allocation10 + $0x130] sm:$0xff]
    %v932 = vld [vmem:[#allocation10 + $0x138] sm:$0xff]
    %v933 = vld [vmem:[#allocation10 + $0x140] sm:$0xff]
    %v934 = vld [vmem:[#allocation10 + $0x148] sm:$0xff]
    %v935 = vld [vmem:[#allocation10 + $0x150] sm:$0xff]
    %v936 = vld [vmem:[#allocation10 + $0x158] sm:$0xff]
    %v937 = vld [vmem:[#allocation10 + $0x160] sm:$0xff]
    %v938 = vld [vmem:[#allocation10 + $0x168] sm:$0xff]
    %v939 = vld [vmem:[#allocation10 + $0x170] sm:$0xff]
    %v940 = vld [vmem:[#allocation10 + $0x178] sm:$0xff]
    %v941 = vld [vmem:[%s9] sm:$0x7]
    %v942 = vld [vmem:[%s10] sm:$0x7]
    %v943 = vld [vmem:[%s13] sm:$0x7]
    %v944 = vld [vmem:[%s14] sm:$0x7]
    %vm945 = vcmp.gt.s32.totalorder %v159, 0
    %vm946 = vcmp.gt.s32.totalorder %v160, 0
    %v948 = vlaneseq
    %v949 = vshrl.u32 %v948, 7
    %v950 = vsub.s32 0, %v949
    %v951 = vrot.slane %v942, %v950
    %v952 = vlaneseq
    %v953 = vshrl.u32 %v952, 7
    %v954 = vsub.s32 1, %v953
    %v955 = vrot.slane %v942, %v954
    %v956 = vlaneseq
    %v957 = vshrl.u32 %v956, 7
    %v958 = vsub.s32 2, %v957
    %v959 = vrot.slane %v942, %v958
    %963 = vmatprep.subr.mxu0 %v846
    %964 = vmatpush1.msra.mxu0 %v845
    %965 = vmatprep.subr.mxu0 %v849
    %966 = vmatpush1.msra.mxu0 %v848
    %967 = vmatprep.subr.mxu0 %v852
    %968 = vmatpush1.msra.mxu0 %v851
    %969 = vmatprep.subr.mxu0 %v855
    %970 = vmatpush1.msra.mxu0 %v854
    %971 = vmatprep.subr.mxu0 %v858
    %972 = vmatpush1.msra.mxu0 %v857
    %973 = vmatprep.subr.mxu0 %v861
    %974 = vmatpush1.msra.mxu0 %v860
    %975 = vmatprep.subr.mxu0 %v864
    %976 = vmatpush1.msra.mxu0 %v863
    %977 = vmatprep.subr.mxu0 %v867
    %978 = vmatpush1.msra.mxu0 %v866
    %979 = vmatprep.subr.mxu0 %v870
    %980 = vmatpush1.msra.mxu0 %v869
    %981 = vmatprep.subr.mxu0 %v873
    %982 = vmatpush1.msra.mxu0 %v872
    %983 = vmatprep.subr.mxu0 %v876
    %984 = vmatpush1.msra.mxu0 %v875
    %985 = vmatprep.subr.mxu0 %v879
    %986 = vmatpush1.msra.mxu0 %v878
    %987 = vmatprep.subr.mxu0 %v882
    %988 = vmatpush1.msra.mxu0 %v881
    %989 = vmatprep.subr.mxu0 %v885
    %990 = vmatpush1.msra.mxu0 %v884
    %991 = vmatprep.subr.mxu0 %v888
    %992 = vmatpush1.msra.mxu0 %v887
    %993 = vmatprep.subr.mxu0 %v891
    %994 = vmatpush1.msra.mxu0 %v890
    %995 = vmatprep.subr.mxu0 0.0
    %996 = vmatpush1.msra.mxu0 0.0
    %997 = vmatprep.subr.mxu0 0.0
    %998 = vmatpush1.msra.mxu0 0.0
    %999 = vmatprep.subr.mxu0 0.0
    %1000 = vmatpush1.msra.mxu0 0.0
    %1001 = vmatprep.subr.mxu0 0.0
    %1002 = vmatpush1.msra.mxu0 0.0
    %1003 = vmatprep.subr.mxu0 0.0
    %1004 = vmatpush1.msra.mxu0 0.0
    %1005 = vmatprep.subr.mxu0 0.0
    %1006 = vmatpush1.msra.mxu0 0.0
    %1007 = vmatprep.subr.mxu0 0.0
    %1008 = vmatpush1.msra.mxu0 0.0
    %1009 = vmatprep.subr.mxu0 0.0
    %1010 = vmatpush1.msra.mxu0 0.0
    %1011 = vmatprep.subr.mxu0 0.0
    %1012 = vmatpush1.msra.mxu0 0.0
    %1013 = vmatprep.subr.mxu0 0.0
    %1014 = vmatpush1.msra.mxu0 0.0
    %1015 = vmatprep.subr.mxu0 0.0
    %1016 = vmatpush1.msra.mxu0 0.0
    %1017 = vmatprep.subr.mxu0 0.0
    %1018 = vmatpush1.msra.mxu0 0.0
    %1019 = vmatprep.subr.mxu0 0.0
    %1020 = vmatpush1.msra.mxu0 0.0
    %1021 = vmatprep.subr.mxu0 0.0
    %1022 = vmatpush1.msra.mxu0 0.0
    %1023 = vmatprep.subr.mxu0 0.0
    %1024 = vmatpush1.msra.mxu0 0.0
    %1025 = vmatprep.subr.mxu0 0.0
    %1026 = vmatpush1.msra.mxu0 0.0
    %1027 = vmatprep.mubr.f32.mxu0 0.0
    %1028 = vmatmul.mubr.f32.gmra.mrb[0].mxu0 0.0
    %v1029 = vpop.f32.mrb[0].mxu0
    %v1030 = vadd.f32 %v951, %v1029
    %v1031 = vpop.f32.mrb[0].mxu0
    %v1032 = vadd.f32 %v955, %v1031
    %1033 = vmatprep.mubr.f32.mxu0 0.0
    %1034 = vmatmul.mubr.f32.gmra.mrb[0].mxu0 0.0
    %v1035 = vpop.f32.mrb[0].mxu0
    %v1036 = vadd.f32 %v951, %v1035
    %v1037 = vpop.f32.mrb[0].mxu0
    %v1038 = vadd.f32 %v955, %v1037
    %1039 = vdwg.mxu0
    %1040 = vmatprep.subr.mxu0 0.0
    %1041 = vmatpush1.msra.mxu0 %v847
    %1042 = vmatprep.subr.mxu0 0.0
    %1043 = vmatpush1.msra.mxu0 %v850
    %1044 = vmatprep.subr.mxu0 0.0
    %1045 = vmatpush1.msra.mxu0 %v853
    %1046 = vmatprep.subr.mxu0 0.0
    %1047 = vmatpush1.msra.mxu0 %v856
    %1048 = vmatprep.subr.mxu0 0.0
    %1049 = vmatpush1.msra.mxu0 %v859
    %1050 = vmatprep.subr.mxu0 0.0
    %1051 = vmatpush1.msra.mxu0 %v862
    %1052 = vmatprep.subr.mxu0 0.0
    %1053 = vmatpush1.msra.mxu0 %v865
    %1054 = vmatprep.subr.mxu0 0.0
    %1055 = vmatpush1.msra.mxu0 %v868
    %1056 = vmatprep.subr.mxu0 0.0
    %1057 = vmatpush1.msra.mxu0 %v871
    %1058 = vmatprep.subr.mxu0 0.0
    %1059 = vmatpush1.msra.mxu0 %v874
    %1060 = vmatprep.subr.mxu0 0.0
    %1061 = vmatpush1.msra.mxu0 %v877
    %1062 = vmatprep.subr.mxu0 0.0
    %1063 = vmatpush1.msra.mxu0 %v880
    %1064 = vmatprep.subr.mxu0 0.0
    %1065 = vmatpush1.msra.mxu0 %v883
    %1066 = vmatprep.subr.mxu0 0.0
    %1067 = vmatpush1.msra.mxu0 %v886
    %1068 = vmatprep.subr.mxu0 0.0
    %1069 = vmatpush1.msra.mxu0 %v889
    %1070 = vmatprep.subr.mxu0 0.0
    %1071 = vmatpush1.msra.mxu0 %v892
    %1072 = vmatprep.subr.mxu0 0.0
    %1073 = vmatpush1.msra.mxu0 0.0
    %1074 = vmatprep.subr.mxu0 0.0
    %1075 = vmatpush1.msra.mxu0 0.0
    %1076 = vmatprep.subr.mxu0 0.0
    %1077 = vmatpush1.msra.mxu0 0.0
    %1078 = vmatprep.subr.mxu0 0.0
    %1079 = vmatpush1.msra.mxu0 0.0
    %1080 = vmatprep.subr.mxu0 0.0
    %1081 = vmatpush1.msra.mxu0 0.0
    %1082 = vmatprep.subr.mxu0 0.0
    %1083 = vmatpush1.msra.mxu0 0.0
    %1084 = vmatprep.subr.mxu0 0.0
    %1085 = vmatpush1.msra.mxu0 0.0
    %1086 = vmatprep.subr.mxu0 0.0
    %1087 = vmatpush1.msra.mxu0 0.0
    %1088 = vmatprep.subr.mxu0 0.0
    %1089 = vmatpush1.msra.mxu0 0.0
    %1090 = vmatprep.subr.mxu0 0.0
    %1091 = vmatpush1.msra.mxu0 0.0
    %1092 = vmatprep.subr.mxu0 0.0
    %1093 = vmatpush1.msra.mxu0 0.0
    %1094 = vmatprep.subr.mxu0 0.0
    %1095 = vmatpush1.msra.mxu0 0.0
    %1096 = vmatprep.subr.mxu0 0.0
    %1097 = vmatpush1.msra.mxu0 0.0
    %1098 = vmatprep.subr.mxu0 0.0
    %1099 = vmatpush1.msra.mxu0 0.0
    %1100 = vmatprep.subr.mxu0 0.0
    %1101 = vmatpush1.msra.mxu0 0.0
    %1102 = vmatprep.subr.mxu0 0.0
    %1103 = vmatpush1.msra.mxu0 0.0
    %1104 = vmatprep.mubr.f32.mxu0 0.0
    %1105 = vmatmul.mubr.f32.gmra.mrb[0].mxu0 0.0
    %v1106 = vpop.f32.mrb[0].mxu0
    %v1107 = vadd.f32 %v959, %v1106
    %v1108 = vpop.f32.mrb[0].mxu0
    %1109 = vmatprep.mubr.f32.mxu0 0.0
    %1110 = vmatmul.mubr.f32.gmra.mrb[0].mxu0 0.0
    %v1111 = vpop.f32.mrb[0].mxu0
    %v1112 = vadd.f32 %v959, %v1111
    %v1113 = vpop.f32.mrb[0].mxu0
    %1114 = vdwg.mxu0
    %v1116 = vlaneseq
    %v1117 = vshrl.u32 %v1116, 7
    %v1118 = vsub.s32 0, %v1117
    %v1119 = vrot.slane %v944, %v1118
    %v1120 = vlaneseq
    %v1121 = vshrl.u32 %v1120, 7
    %v1122 = vsub.s32 1, %v1121
    %v1123 = vrot.slane %v944, %v1122
    %v1124 = vlaneseq
    %v1125 = vshrl.u32 %v1124, 7
    %v1126 = vsub.s32 2, %v1125
    %v1127 = vrot.slane %v944, %v1126
    %1131 = vmatprep.subr.mxu0 %v894
    %1132 = vmatpush1.msra.mxu0 %v893
    %1133 = vmatprep.subr.mxu0 %v897
    %1134 = vmatpush1.msra.mxu0 %v896
    %1135 = vmatprep.subr.mxu0 %v900
    %1136 = vmatpush1.msra.mxu0 %v899
    %1137 = vmatprep.subr.mxu0 %v903
    %1138 = vmatpush1.msra.mxu0 %v902
    %1139 = vmatprep.subr.mxu0 %v906
    %1140 = vmatpush1.msra.mxu0 %v905
    %1141 = vmatprep.subr.mxu0 %v909
    %1142 = vmatpush1.msra.mxu0 %v908
    %1143 = vmatprep.subr.mxu0 %v912
    %1144 = vmatpush1.msra.mxu0 %v911
    %1145 = vmatprep.subr.mxu0 %v915
    %1146 = vmatpush1.msra.mxu0 %v914
    %1147 = vmatprep.subr.mxu0 %v918
    %1148 = vmatpush1.msra.mxu0 %v917
    %1149 = vmatprep.subr.mxu0 %v921
    %1150 = vmatpush1.msra.mxu0 %v920
    %1151 = vmatprep.subr.mxu0 %v924
    %1152 = vmatpush1.msra.mxu0 %v923
    %1153 = vmatprep.subr.mxu0 %v927
    %1154 = vmatpush1.msra.mxu0 %v926
    %1155 = vmatprep.subr.mxu0 %v930
    %1156 = vmatpush1.msra.mxu0 %v929
    %1157 = vmatprep.subr.mxu0 %v933
    %1158 = vmatpush1.msra.mxu0 %v932
    %1159 = vmatprep.subr.mxu0 %v936
    %1160 = vmatpush1.msra.mxu0 %v935
    %1161 = vmatprep.subr.mxu0 %v939
    %1162 = vmatpush1.msra.mxu0 %v938
    %1163 = vmatprep.subr.mxu0 0.0
    %1164 = vmatpush1.msra.mxu0 0.0
    %1165 = vmatprep.subr.mxu0 0.0
    %1166 = vmatpush1.msra.mxu0 0.0
    %1167 = vmatprep.subr.mxu0 0.0
    %1168 = vmatpush1.msra.mxu0 0.0
    %1169 = vmatprep.subr.mxu0 0.0
    %1170 = vmatpush1.msra.mxu0 0.0
    %1171 = vmatprep.subr.mxu0 0.0
    %1172 = vmatpush1.msra.mxu0 0.0
    %1173 = vmatprep.subr.mxu0 0.0
    %1174 = vmatpush1.msra.mxu0 0.0
    %1175 = vmatprep.subr.mxu0 0.0
    %1176 = vmatpush1.msra.mxu0 0.0
    %1177 = vmatprep.subr.mxu0 0.0
    %1178 = vmatpush1.msra.mxu0 0.0
    %1179 = vmatprep.subr.mxu0 0.0
    %1180 = vmatpush1.msra.mxu0 0.0
    %1181 = vmatprep.subr.mxu0 0.0
    %1182 = vmatpush1.msra.mxu0 0.0
    %1183 = vmatprep.subr.mxu0 0.0
    %1184 = vmatpush1.msra.mxu0 0.0
    %1185 = vmatprep.subr.mxu0 0.0
    %1186 = vmatpush1.msra.mxu0 0.0
    %1187 = vmatprep.subr.mxu0 0.0
    %1188 = vmatpush1.msra.mxu0 0.0
    %1189 = vmatprep.subr.mxu0 0.0
    %1190 = vmatpush1.msra.mxu0 0.0
    %1191 = vmatprep.subr.mxu0 0.0
    %1192 = vmatpush1.msra.mxu0 0.0
    %1193 = vmatprep.subr.mxu0 0.0
    %1194 = vmatpush1.msra.mxu0 0.0
    %1195 = vmatprep.mubr.f32.mxu0 0.0
    %1196 = vmatmul.mubr.f32.gmra.mrb[0].mxu0 0.0
    %v1197 = vpop.f32.mrb[0].mxu0
    %v1198 = vadd.f32 %v1119, %v1197
    %v1199 = vpop.f32.mrb[0].mxu0
    %v1200 = vadd.f32 %v1123, %v1199
    %1201 = vmatprep.mubr.f32.mxu0 0.0
    %1202 = vmatmul.mubr.f32.gmra.mrb[0].mxu0 0.0
    %v1203 = vpop.f32.mrb[0].mxu0
    %v1204 = vadd.f32 %v1119, %v1203
    %v1205 = vpop.f32.mrb[0].mxu0
    %v1206 = vadd.f32 %v1123, %v1205
    %1207 = vdwg.mxu0
    %1208 = vmatprep.subr.mxu0 0.0
    %1209 = vmatpush1.msra.mxu0 %v895
    %1210 = vmatprep.subr.mxu0 0.0
    %1211 = vmatpush1.msra.mxu0 %v898
    %1212 = vmatprep.subr.mxu0 0.0
    %1213 = vmatpush1.msra.mxu0 %v901
    %1214 = vmatprep.subr.mxu0 0.0
    %1215 = vmatpush1.msra.mxu0 %v904
    %1216 = vmatprep.subr.mxu0 0.0
    %1217 = vmatpush1.msra.mxu0 %v907
    %1218 = vmatprep.subr.mxu0 0.0
    %1219 = vmatpush1.msra.mxu0 %v910
    %1220 = vmatprep.subr.mxu0 0.0
    %1221 = vmatpush1.msra.mxu0 %v913
    %1222 = vmatprep.subr.mxu0 0.0
    %1223 = vmatpush1.msra.mxu0 %v916
    %1224 = vmatprep.subr.mxu0 0.0
    %1225 = vmatpush1.msra.mxu0 %v919
    %1226 = vmatprep.subr.mxu0 0.0
    %1227 = vmatpush1.msra.mxu0 %v922
    %1228 = vmatprep.subr.mxu0 0.0
    %1229 = vmatpush1.msra.mxu0 %v925
    %1230 = vmatprep.subr.mxu0 0.0
    %1231 = vmatpush1.msra.mxu0 %v928
    %1232 = vmatprep.subr.mxu0 0.0
    %1233 = vmatpush1.msra.mxu0 %v931
    %1234 = vmatprep.subr.mxu0 0.0
    %1235 = vmatpush1.msra.mxu0 %v934
    %1236 = vmatprep.subr.mxu0 0.0
    %1237 = vmatpush1.msra.mxu0 %v937
    %1238 = vmatprep.subr.mxu0 0.0
    %1239 = vmatpush1.msra.mxu0 %v940
    %1240 = vmatprep.subr.mxu0 0.0
    %1241 = vmatpush1.msra.mxu0 0.0
    %1242 = vmatprep.subr.mxu0 0.0
    %1243 = vmatpush1.msra.mxu0 0.0
    %1244 = vmatprep.subr.mxu0 0.0
    %1245 = vmatpush1.msra.mxu0 0.0
    %1246 = vmatprep.subr.mxu0 0.0
    %1247 = vmatpush1.msra.mxu0 0.0
    %1248 = vmatprep.subr.mxu0 0.0
    %1249 = vmatpush1.msra.mxu0 0.0
    %1250 = vmatprep.subr.mxu0 0.0
    %1251 = vmatpush1.msra.mxu0 0.0
    %1252 = vmatprep.subr.mxu0 0.0
    %1253 = vmatpush1.msra.mxu0 0.0
    %1254 = vmatprep.subr.mxu0 0.0
    %1255 = vmatpush1.msra.mxu0 0.0
    %1256 = vmatprep.subr.mxu0 0.0
    %1257 = vmatpush1.msra.mxu0 0.0
    %1258 = vmatprep.subr.mxu0 0.0
    %1259 = vmatpush1.msra.mxu0 0.0
    %1260 = vmatprep.subr.mxu0 0.0
    %1261 = vmatpush1.msra.mxu0 0.0
    %1262 = vmatprep.subr.mxu0 0.0
    %1263 = vmatpush1.msra.mxu0 0.0
    %1264 = vmatprep.subr.mxu0 0.0
    %1265 = vmatpush1.msra.mxu0 0.0
    %1266 = vmatprep.subr.mxu0 0.0
    %1267 = vmatpush1.msra.mxu0 0.0
    %1268 = vmatprep.subr.mxu0 0.0
    %1269 = vmatpush1.msra.mxu0 0.0
    %1270 = vmatprep.subr.mxu0 0.0
    %1271 = vmatpush1.msra.mxu0 0.0
    %1272 = vmatprep.mubr.f32.mxu0 0.0
    %1273 = vmatmul.mubr.f32.gmra.mrb[0].mxu0 0.0
    %v1274 = vpop.f32.mrb[0].mxu0
    %v1275 = vadd.f32 %v1127, %v1274
    %v1276 = vpop.f32.mrb[0].mxu0
    %1277 = vmatprep.mubr.f32.mxu0 0.0
    %1278 = vmatmul.mubr.f32.gmra.mrb[0].mxu0 0.0
    %v1279 = vpop.f32.mrb[0].mxu0
    %v1280 = vadd.f32 %v1127, %v1279
    %v1281 = vpop.f32.mrb[0].mxu0
    %1282 = vdwg.mxu0
    %v1283 = vunpack.c.l.bf16 %v499
    %v1284 = vunpack.c.l.bf16 %v500
    %v1285 = vunpack.c.l.bf16 %v501
    %v1286 = vunpack.c.h.bf16 %v499
    %v1287 = vunpack.c.h.bf16 %v500
    %v1288 = vunpack.c.h.bf16 %v501
    %v1290 = vlaneseq
    %v1291 = vshrl.u32 %v1290, 7
    %v1292 = vsub.s32 0, %v1291
    %v1293 = vrot.slane %v941, %v1292
    %v1294 = vlaneseq
    %v1295 = vshrl.u32 %v1294, 7
    %v1296 = vsub.s32 1, %v1295
    %v1297 = vrot.slane %v941, %v1296
    %v1298 = vlaneseq
    %v1299 = vshrl.u32 %v1298, 7
    %v1300 = vsub.s32 2, %v1299
    %v1301 = vrot.slane %v941, %v1300
    %v1305 = vadd.f32 %v1283, %v1293
    %v1306 = vadd.f32 %v1284, %v1297
    %v1307 = vadd.f32 %v1285, %v1301
    %v1308 = vadd.f32 %v1286, %v1293
    %v1309 = vadd.f32 %v1287, %v1297
    %v1310 = vadd.f32 %v1288, %v1301
    %v1311 = vunpack.c.l.bf16 %v833
    %v1312 = vunpack.c.l.bf16 %v834
    %v1313 = vunpack.c.l.bf16 %v835
    %v1314 = vunpack.c.h.bf16 %v833
    %v1315 = vunpack.c.h.bf16 %v834
    %v1316 = vunpack.c.h.bf16 %v835
    %v1318 = vlaneseq
    %v1319 = vshrl.u32 %v1318, 7
    %v1320 = vsub.s32 0, %v1319
    %v1321 = vrot.slane %v943, %v1320
    %v1322 = vlaneseq
    %v1323 = vshrl.u32 %v1322, 7
    %v1324 = vsub.s32 1, %v1323
    %v1325 = vrot.slane %v943, %v1324
    %v1326 = vlaneseq
    %v1327 = vshrl.u32 %v1326, 7
    %v1328 = vsub.s32 2, %v1327
    %v1329 = vrot.slane %v943, %v1328
    %v1333 = vadd.f32 %v1311, %v1321
    %v1334 = vadd.f32 %v1312, %v1325
    %v1335 = vadd.f32 %v1313, %v1329
    %v1336 = vadd.f32 %v1314, %v1321
    %v1337 = vadd.f32 %v1315, %v1325
    %v1338 = vadd.f32 %v1316, %v1329
    %v1339 = vadd.f32 %v1305, %v1030
    %v1340 = vadd.f32 %v1308, %v1036
    %v1341 = vxor.u32 %v1339, 2147483648
    %v1342 = vxor.u32 %v1340, 2147483648
    %v1343 = vmul.f32 %v1341, 1.442695
    %v1344 = vpow.pop %v1343
    %v1345 = vmul.f32 %v1342, 1.442695
    %v1346 = vpow.pop %v1345
    %v1347 = vadd.f32 %v1344, 1.0
    %v1348 = vadd.f32 %v1346, 1.0
    %v1349 = vrcp.pop %v1347
    %v1350 = vmul.f32 1.0, %v1349
    %v1351 = vrcp.pop %v1348
    %v1352 = vmul.f32 1.0, %v1351
    %v1353 = vadd.f32 %v1306, %v1032
    %v1354 = vadd.f32 %v1309, %v1038
    %v1355 = vxor.u32 %v1353, 2147483648
    %v1356 = vxor.u32 %v1354, 2147483648
    %v1357 = vmul.f32 %v1355, 1.442695
    %v1358 = vpow.pop %v1357
    %v1359 = vmul.f32 %v1356, 1.442695
    %v1360 = vpow.pop %v1359
    %v1361 = vadd.f32 %v1358, 1.0
    %v1362 = vadd.f32 %v1360, 1.0
    %v1363 = vrcp.pop %v1361
    %v1364 = vmul.f32 1.0, %v1363
    %v1365 = vrcp.pop %v1362
    %v1366 = vmul.f32 1.0, %v1365
    %v1367 = vmul.f32 %v1350, %v1107
    %v1368 = vmul.f32 %v1352, %v1112
    %v1369 = vadd.f32 %v1307, %v1367
    %v1370 = vadd.f32 %v1310, %v1368
    %v1371 = vtanh.pop %v1369
    %v1372 = vtanh.pop %v1370
    %v1373 = vsub.f32 1.0, %v1364
    %v1374 = vsub.f32 1.0, %v1366
    %v1375 = vmul.f32 %v1373, %v1371
    %v1376 = vmul.f32 %v1374, %v1372
    %v1377 = vmul.f32 %v1364, 0.0
    %v1378 = vmul.f32 %v1366, 0.0
    %v1379 = vadd.f32 %v1375, %v1377
    %v1380 = vadd.f32 %v1376, %v1378
    %v1381 = vsel %vm945, 1, 0
    %v1382 = vsel %vm946, 1, 0
    %1383 = vset.pattern.permute.xlu0 0
    %1384 = vperm.xlu0 %1383, %v1381
    %v1385 = vpop.permute.xlu0 %1384
    %1386 = vset.pattern.permute.xlu0 0
    %1387 = vperm.xlu0 %1386, %v1382
    %v1388 = vpop.permute.xlu0 %1387
    %vm1389 = vcmp.eq.s32.totalorder %v1385, 1
    %vm1390 = vcmp.eq.s32.totalorder %v1388, 1
    %v1391 = vsel %vm1389, %v1379, 0.0
    %v1392 = vsel %vm1390, %v1380, 0.0
    %v1393 = vadd.f32 %v1333, %v1198
    %v1394 = vadd.f32 %v1336, %v1204
    %v1395 = vxor.u32 %v1393, 2147483648
    %v1396 = vxor.u32 %v1394, 2147483648
    %v1397 = vmul.f32 %v1395, 1.442695
    %v1398 = vpow.pop %v1397
    %v1399 = vmul.f32 %v1396, 1.442695
    %v1400 = vpow.pop %v1399
    %v1401 = vadd.f32 %v1398, 1.0
    %v1402 = vadd.f32 %v1400, 1.0
    %v1403 = vrcp.pop %v1401
    %v1404 = vmul.f32 1.0, %v1403
    %v1405 = vrcp.pop %v1402
    %v1406 = vmul.f32 1.0, %v1405
    %v1407 = vadd.f32 %v1334, %v1200
    %v1408 = vadd.f32 %v1337, %v1206
    %v1409 = vxor.u32 %v1407, 2147483648
    %v1410 = vxor.u32 %v1408, 2147483648
    %v1411 = vmul.f32 %v1409, 1.442695
    %v1412 = vpow.pop %v1411
    %v1413 = vmul.f32 %v1410, 1.442695
    %v1414 = vpow.pop %v1413
    %v1415 = vadd.f32 %v1412, 1.0
    %v1416 = vadd.f32 %v1414, 1.0
    %v1417 = vrcp.pop %v1415
    %v1418 = vmul.f32 1.0, %v1417
    %v1419 = vrcp.pop %v1416
    %v1420 = vmul.f32 1.0, %v1419
    %v1421 = vmul.f32 %v1404, %v1275
    %v1422 = vmul.f32 %v1406, %v1280
    %v1423 = vadd.f32 %v1335, %v1421
    %v1424 = vadd.f32 %v1338, %v1422
    %v1425 = vtanh.pop %v1423
    %v1426 = vtanh.pop %v1424
    %v1427 = vsub.f32 1.0, %v1418
    %v1428 = vsub.f32 1.0, %v1420
    %v1429 = vmul.f32 %v1427, %v1425
    %v1430 = vmul.f32 %v1428, %v1426
    %v1431 = vmul.f32 %v1418, 0.0
    %v1432 = vmul.f32 %v1420, 0.0
    %v1433 = vadd.f32 %v1429, %v1431
    %v1434 = vadd.f32 %v1430, %v1432
    %v1435 = vsel %vm1389, %v1433, 0.0
    %v1436 = vsel %vm1390, %v1434, 0.0
    %vm1437 = vcmp.gt.s32.totalorder %v159, 1
    %vm1438 = vcmp.gt.s32.totalorder %v160, 1
    %1439 = vmatprep.subr.mxu0 %v846
    %1440 = vmatpush1.msra.mxu0 %v845
    %1441 = vmatprep.subr.mxu0 %v849
    %1442 = vmatpush1.msra.mxu0 %v848
    %1443 = vmatprep.subr.mxu0 %v852
    %1444 = vmatpush1.msra.mxu0 %v851
    %1445 = vmatprep.subr.mxu0 %v855
    %1446 = vmatpush1.msra.mxu0 %v854
    %1447 = vmatprep.subr.mxu0 %v858
    %1448 = vmatpush1.msra.mxu0 %v857
    %1449 = vmatprep.subr.mxu0 %v861
    %1450 = vmatpush1.msra.mxu0 %v860
    %1451 = vmatprep.subr.mxu0 %v864
    %1452 = vmatpush1.msra.mxu0 %v863
    %1453 = vmatprep.subr.mxu0 %v867
    %1454 = vmatpush1.msra.mxu0 %v866
    %1455 = vmatprep.subr.mxu0 %v870
    %1456 = vmatpush1.msra.mxu0 %v869
    %1457 = vmatprep.subr.mxu0 %v873
    %1458 = vmatpush1.msra.mxu0 %v872
    %1459 = vmatprep.subr.mxu0 %v876
    %1460 = vmatpush1.msra.mxu0 %v875
    %1461 = vmatprep.subr.mxu0 %v879
    %1462 = vmatpush1.msra.mxu0 %v878
    %1463 = vmatprep.subr.mxu0 %v882
    %1464 = vmatpush1.msra.mxu0 %v881
    %1465 = vmatprep.subr.mxu0 %v885
    %1466 = vmatpush1.msra.mxu0 %v884
    %1467 = vmatprep.subr.mxu0 %v888
    %1468 = vmatpush1.msra.mxu0 %v887
    %1469 = vmatprep.subr.mxu0 %v891
    %1470 = vmatpush1.msra.mxu0 %v890
    %1471 = vmatprep.subr.mxu0 0.0
    %1472 = vmatpush1.msra.mxu0 0.0
    %1473 = vmatprep.subr.mxu0 0.0
    %1474 = vmatpush1.msra.mxu0 0.0
    %1475 = vmatprep.subr.mxu0 0.0
    %1476 = vmatpush1.msra.mxu0 0.0
    %1477 = vmatprep.subr.mxu0 0.0
    %1478 = vmatpush1.msra.mxu0 0.0
    %1479 = vmatprep.subr.mxu0 0.0
    %1480 = vmatpush1.msra.mxu0 0.0
    %1481 = vmatprep.subr.mxu0 0.0
    %1482 = vmatpush1.msra.mxu0 0.0
    %1483 = vmatprep.subr.mxu0 0.0
    %1484 = vmatpush1.msra.mxu0 0.0
    %1485 = vmatprep.subr.mxu0 0.0
    %1486 = vmatpush1.msra.mxu0 0.0
    %1487 = vmatprep.subr.mxu0 0.0
    %1488 = vmatpush1.msra.mxu0 0.0
    %1489 = vmatprep.subr.mxu0 0.0
    %1490 = vmatpush1.msra.mxu0 0.0
    %1491 = vmatprep.subr.mxu0 0.0
    %1492 = vmatpush1.msra.mxu0 0.0
    %1493 = vmatprep.subr.mxu0 0.0
    %1494 = vmatpush1.msra.mxu0 0.0
    %1495 = vmatprep.subr.mxu0 0.0
    %1496 = vmatpush1.msra.mxu0 0.0
    %1497 = vmatprep.subr.mxu0 0.0
    %1498 = vmatpush1.msra.mxu0 0.0
    %1499 = vmatprep.subr.mxu0 0.0
    %1500 = vmatpush1.msra.mxu0 0.0
    %1501 = vmatprep.subr.mxu0 0.0
    %1502 = vmatpush1.msra.mxu0 0.0
    %1503 = vmatprep.mubr.f32.mxu0 0.0
    %1504 = vmatmul.mubr.f32.gmra.mrb[0].mxu0 %v1391
    %v1505 = vpop.f32.mrb[0].mxu0
    %v1506 = vadd.f32 %v951, %v1505
    %v1507 = vpop.f32.mrb[0].mxu0
    %v1508 = vadd.f32 %v955, %v1507
    %1509 = vmatprep.mubr.f32.mxu0 0.0
    %1510 = vmatmul.mubr.f32.gmra.mrb[0].mxu0 %v1392
    %v1511 = vpop.f32.mrb[0].mxu0
    %v1512 = vadd.f32 %v951, %v1511
    %v1513 = vpop.f32.mrb[0].mxu0
    %v1514 = vadd.f32 %v955, %v1513
    %1515 = vdwg.mxu0
    %1516 = vmatprep.subr.mxu0 0.0
    %1517 = vmatpush1.msra.mxu0 %v847
    %1518 = vmatprep.subr.mxu0 0.0
    %1519 = vmatpush1.msra.mxu0 %v850
    %1520 = vmatprep.subr.mxu0 0.0
    %1521 = vmatpush1.msra.mxu0 %v853
    %1522 = vmatprep.subr.mxu0 0.0
    %1523 = vmatpush1.msra.mxu0 %v856
    %1524 = vmatprep.subr.mxu0 0.0
    %1525 = vmatpush1.msra.mxu0 %v859
    %1526 = vmatprep.subr.mxu0 0.0
    %1527 = vmatpush1.msra.mxu0 %v862
    %1528 = vmatprep.subr.mxu0 0.0
    %1529 = vmatpush1.msra.mxu0 %v865
    %1530 = vmatprep.subr.mxu0 0.0
    %1531 = vmatpush1.msra.mxu0 %v868
    %1532 = vmatprep.subr.mxu0 0.0
    %1533 = vmatpush1.msra.mxu0 %v871
    %1534 = vmatprep.subr.mxu0 0.0
    %1535 = vmatpush1.msra.mxu0 %v874
    %1536 = vmatprep.subr.mxu0 0.0
    %1537 = vmatpush1.msra.mxu0 %v877
    %1538 = vmatprep.subr.mxu0 0.0
    %1539 = vmatpush1.msra.mxu0 %v880
    %1540 = vmatprep.subr.mxu0 0.0
    %1541 = vmatpush1.msra.mxu0 %v883
    %1542 = vmatprep.subr.mxu0 0.0
    %1543 = vmatpush1.msra.mxu0 %v886
    %1544 = vmatprep.subr.mxu0 0.0
    %1545 = vmatpush1.msra.mxu0 %v889
    %1546 = vmatprep.subr.mxu0 0.0
    %1547 = vmatpush1.msra.mxu0 %v892
    %1548 = vmatprep.subr.mxu0 0.0
    %1549 = vmatpush1.msra.mxu0 0.0
    %1550 = vmatprep.subr.mxu0 0.0
    %1551 = vmatpush1.msra.mxu0 0.0
    %1552 = vmatprep.subr.mxu0 0.0
    %1553 = vmatpush1.msra.mxu0 0.0
    %1554 = vmatprep.subr.mxu0 0.0
    %1555 = vmatpush1.msra.mxu0 0.0
    %1556 = vmatprep.subr.mxu0 0.0
    %1557 = vmatpush1.msra.mxu0 0.0
    %1558 = vmatprep.subr.mxu0 0.0
    %1559 = vmatpush1.msra.mxu0 0.0
    %1560 = vmatprep.subr.mxu0 0.0
    %1561 = vmatpush1.msra.mxu0 0.0
    %1562 = vmatprep.subr.mxu0 0.0
    %1563 = vmatpush1.msra.mxu0 0.0
    %1564 = vmatprep.subr.mxu0 0.0
    %1565 = vmatpush1.msra.mxu0 0.0
    %1566 = vmatprep.subr.mxu0 0.0
    %1567 = vmatpush1.msra.mxu0 0.0
    %1568 = vmatprep.subr.mxu0 0.0
    %1569 = vmatpush1.msra.mxu0 0.0
    %1570 = vmatprep.subr.mxu0 0.0
    %1571 = vmatpush1.msra.mxu0 0.0
    %1572 = vmatprep.subr.mxu0 0.0
    %1573 = vmatpush1.msra.mxu0 0.0
    %1574 = vmatprep.subr.mxu0 0.0
    %1575 = vmatpush1.msra.mxu0 0.0
    %1576 = vmatprep.subr.mxu0 0.0
    %1577 = vmatpush1.msra.mxu0 0.0
    %1578 = vmatprep.subr.mxu0 0.0
    %1579 = vmatpush1.msra.mxu0 0.0
    %1580 = vmatprep.mubr.f32.mxu0 0.0
    %1581 = vmatmul.mubr.f32.gmra.mrb[0].mxu0 %v1391
    %v1582 = vpop.f32.mrb[0].mxu0
    %v1583 = vadd.f32 %v959, %v1582
    %v1584 = vpop.f32.mrb[0].mxu0
    %1585 = vmatprep.mubr.f32.mxu0 0.0
    %1586 = vmatmul.mubr.f32.gmra.mrb[0].mxu0 %v1392
    %v1587 = vpop.f32.mrb[0].mxu0
    %v1588 = vadd.f32 %v959, %v1587
    %v1589 = vpop.f32.mrb[0].mxu0
    %1590 = vdwg.mxu0
    %1591 = vmatprep.subr.mxu0 %v894
    %1592 = vmatpush1.msra.mxu0 %v893
    %1593 = vmatprep.subr.mxu0 %v897
    %1594 = vmatpush1.msra.mxu0 %v896
    %1595 = vmatprep.subr.mxu0 %v900
    %1596 = vmatpush1.msra.mxu0 %v899
    %1597 = vmatprep.subr.mxu0 %v903
    %1598 = vmatpush1.msra.mxu0 %v902
    %1599 = vmatprep.subr.mxu0 %v906
    %1600 = vmatpush1.msra.mxu0 %v905
    %1601 = vmatprep.subr.mxu0 %v909
    %1602 = vmatpush1.msra.mxu0 %v908
    %1603 = vmatprep.subr.mxu0 %v912
    %1604 = vmatpush1.msra.mxu0 %v911
    %1605 = vmatprep.subr.mxu0 %v915
    %1606 = vmatpush1.msra.mxu0 %v914
    %1607 = vmatprep.subr.mxu0 %v918
    %1608 = vmatpush1.msra.mxu0 %v917
    %1609 = vmatprep.subr.mxu0 %v921
    %1610 = vmatpush1.msra.mxu0 %v920
    %1611 = vmatprep.subr.mxu0 %v924
    %1612 = vmatpush1.msra.mxu0 %v923
    %1613 = vmatprep.subr.mxu0 %v927
    %1614 = vmatpush1.msra.mxu0 %v926
    %1615 = vmatprep.subr.mxu0 %v930
    %1616 = vmatpush1.msra.mxu0 %v929
    %1617 = vmatprep.subr.mxu0 %v933
    %1618 = vmatpush1.msra.mxu0 %v932
    %1619 = vmatprep.subr.mxu0 %v936
    %1620 = vmatpush1.msra.mxu0 %v935
    %1621 = vmatprep.subr.mxu0 %v939
    %1622 = vmatpush1.msra.mxu0 %v938
    %1623 = vmatprep.subr.mxu0 0.0
    %1624 = vmatpush1.msra.mxu0 0.0
    %1625 = vmatprep.subr.mxu0 0.0
    %1626 = vmatpush1.msra.mxu0 0.0
    %1627 = vmatprep.subr.mxu0 0.0
    %1628 = vmatpush1.msra.mxu0 0.0
    %1629 = vmatprep.subr.mxu0 0.0
    %1630 = vmatpush1.msra.mxu0 0.0
    %1631 = vmatprep.subr.mxu0 0.0
    %1632 = vmatpush1.msra.mxu0 0.0
    %1633 = vmatprep.subr.mxu0 0.0
    %1634 = vmatpush1.msra.mxu0 0.0
    %1635 = vmatprep.subr.mxu0 0.0
    %1636 = vmatpush1.msra.mxu0 0.0
    %1637 = vmatprep.subr.mxu0 0.0
    %1638 = vmatpush1.msra.mxu0 0.0
    %1639 = vmatprep.subr.mxu0 0.0
    %1640 = vmatpush1.msra.mxu0 0.0
    %1641 = vmatprep.subr.mxu0 0.0
    %1642 = vmatpush1.msra.mxu0 0.0
    %1643 = vmatprep.subr.mxu0 0.0
    %1644 = vmatpush1.msra.mxu0 0.0
    %1645 = vmatprep.subr.mxu0 0.0
    %1646 = vmatpush1.msra.mxu0 0.0
    %1647 = vmatprep.subr.mxu0 0.0
    %1648 = vmatpush1.msra.mxu0 0.0
    %1649 = vmatprep.subr.mxu0 0.0
    %1650 = vmatpush1.msra.mxu0 0.0
    %1651 = vmatprep.subr.mxu0 0.0
    %1652 = vmatpush1.msra.mxu0 0.0
    %1653 = vmatprep.subr.mxu0 0.0
    %1654 = vmatpush1.msra.mxu0 0.0
    %1655 = vmatprep.mubr.f32.mxu0 0.0
    %1656 = vmatmul.mubr.f32.gmra.mrb[0].mxu0 %v1435
    %v1657 = vpop.f32.mrb[0].mxu0
    %v1658 = vadd.f32 %v1119, %v1657
    %v1659 = vpop.f32.mrb[0].mxu0
    %v1660 = vadd.f32 %v1123, %v1659
    %1661 = vmatprep.mubr.f32.mxu0 0.0
    %1662 = vmatmul.mubr.f32.gmra.mrb[0].mxu0 %v1436
    %v1663 = vpop.f32.mrb[0].mxu0
    %v1664 = vadd.f32 %v1119, %v1663
    %v1665 = vpop.f32.mrb[0].mxu0
    %v1666 = vadd.f32 %v1123, %v1665
    %1667 = vdwg.mxu0
    %1668 = vmatprep.subr.mxu0 0.0
    %1669 = vmatpush1.msra.mxu0 %v895
    %1670 = vmatprep.subr.mxu0 0.0
    %1671 = vmatpush1.msra.mxu0 %v898
    %1672 = vmatprep.subr.mxu0 0.0
    %1673 = vmatpush1.msra.mxu0 %v901
    %1674 = vmatprep.subr.mxu0 0.0
    %1675 = vmatpush1.msra.mxu0 %v904
    %1676 = vmatprep.subr.mxu0 0.0
    %1677 = vmatpush1.msra.mxu0 %v907
    %1678 = vmatprep.subr.mxu0 0.0
    %1679 = vmatpush1.msra.mxu0 %v910
    %1680 = vmatprep.subr.mxu0 0.0
    %1681 = vmatpush1.msra.mxu0 %v913
    %1682 = vmatprep.subr.mxu0 0.0
    %1683 = vmatpush1.msra.mxu0 %v916
    %1684 = vmatprep.subr.mxu0 0.0
    %1685 = vmatpush1.msra.mxu0 %v919
    %1686 = vmatprep.subr.mxu0 0.0
    %1687 = vmatpush1.msra.mxu0 %v922
    %1688 = vmatprep.subr.mxu0 0.0
    %1689 = vmatpush1.msra.mxu0 %v925
    %1690 = vmatprep.subr.mxu0 0.0
    %1691 = vmatpush1.msra.mxu0 %v928
    %1692 = vmatprep.subr.mxu0 0.0
    %1693 = vmatpush1.msra.mxu0 %v931
    %1694 = vmatprep.subr.mxu0 0.0
    %1695 = vmatpush1.msra.mxu0 %v934
    %1696 = vmatprep.subr.mxu0 0.0
    %1697 = vmatpush1.msra.mxu0 %v937
    %1698 = vmatprep.subr.mxu0 0.0
    %1699 = vmatpush1.msra.mxu0 %v940
    %1700 = vmatprep.subr.mxu0 0.0
    %1701 = vmatpush1.msra.mxu0 0.0
    %1702 = vmatprep.subr.mxu0 0.0
    %1703 = vmatpush1.msra.mxu0 0.0
    %1704 = vmatprep.subr.mxu0 0.0
    %1705 = vmatpush1.msra.mxu0 0.0
    %1706 = vmatprep.subr.mxu0 0.0
    %1707 = vmatpush1.msra.mxu0 0.0
    %1708 = vmatprep.subr.mxu0 0.0
    %1709 = vmatpush1.msra.mxu0 0.0
    %1710 = vmatprep.subr.mxu0 0.0
    %1711 = vmatpush1.msra.mxu0 0.0
    %1712 = vmatprep.subr.mxu0 0.0
    %1713 = vmatpush1.msra.mxu0 0.0
    %1714 = vmatprep.subr.mxu0 0.0
    %1715 = vmatpush1.msra.mxu0 0.0
    %1716 = vmatprep.subr.mxu0 0.0
    %1717 = vmatpush1.msra.mxu0 0.0
    %1718 = vmatprep.subr.mxu0 0.0
    %1719 = vmatpush1.msra.mxu0 0.0
    %1720 = vmatprep.subr.mxu0 0.0
    %1721 = vmatpush1.msra.mxu0 0.0
    %1722 = vmatprep.subr.mxu0 0.0
    %1723 = vmatpush1.msra.mxu0 0.0
    %1724 = vmatprep.subr.mxu0 0.0
    %1725 = vmatpush1.msra.mxu0 0.0
    %1726 = vmatprep.subr.mxu0 0.0
    %1727 = vmatpush1.msra.mxu0 0.0
    %1728 = vmatprep.subr.mxu0 0.0
    %1729 = vmatpush1.msra.mxu0 0.0
    %1730 = vmatprep.subr.mxu0 0.0
    %1731 = vmatpush1.msra.mxu0 0.0
    %1732 = vmatprep.mubr.f32.mxu0 0.0
    %1733 = vmatmul.mubr.f32.gmra.mrb[0].mxu0 %v1435
    %v1734 = vpop.f32.mrb[0].mxu0
    %v1735 = vadd.f32 %v1127, %v1734
    %v1736 = vpop.f32.mrb[0].mxu0
    %1737 = vmatprep.mubr.f32.mxu0 0.0
    %1738 = vmatmul.mubr.f32.gmra.mrb[0].mxu0 %v1436
    %v1739 = vpop.f32.mrb[0].mxu0
    %v1740 = vadd.f32 %v1127, %v1739
    %v1741 = vpop.f32.mrb[0].mxu0
    %1742 = vdwg.mxu0
    %v1743 = vunpack.c.l.bf16 %v502
    %v1744 = vunpack.c.l.bf16 %v503
    %v1745 = vunpack.c.l.bf16 %v504
    %v1746 = vunpack.c.h.bf16 %v502
    %v1747 = vunpack.c.h.bf16 %v503
    %v1748 = vunpack.c.h.bf16 %v504
    %v1749 = vadd.f32 %v1743, %v1293
    %v1750 = vadd.f32 %v1744, %v1297
    %v1751 = vadd.f32 %v1745, %v1301
    %v1752 = vadd.f32 %v1746, %v1293
    %v1753 = vadd.f32 %v1747, %v1297
    %v1754 = vadd.f32 %v1748, %v1301
    %v1755 = vunpack.c.l.bf16 %v836
    %v1756 = vunpack.c.l.bf16 %v837
    %v1757 = vunpack.c.l.bf16 %v838
    %v1758 = vunpack.c.h.bf16 %v836
    %v1759 = vunpack.c.h.bf16 %v837
    %v1760 = vunpack.c.h.bf16 %v838
    %v1761 = vadd.f32 %v1755, %v1321
    %v1762 = vadd.f32 %v1756, %v1325
    %v1763 = vadd.f32 %v1757, %v1329
    %v1764 = vadd.f32 %v1758, %v1321
    %v1765 = vadd.f32 %v1759, %v1325
    %v1766 = vadd.f32 %v1760, %v1329
    %v1767 = vadd.f32 %v1749, %v1506
    %v1768 = vadd.f32 %v1752, %v1512
    %v1769 = vxor.u32 %v1767, 2147483648
    %v1770 = vxor.u32 %v1768, 2147483648
    %v1771 = vmul.f32 %v1769, 1.442695
    %v1772 = vpow.pop %v1771
    %v1773 = vmul.f32 %v1770, 1.442695
    %v1774 = vpow.pop %v1773
    %v1775 = vadd.f32 %v1772, 1.0
    %v1776 = vadd.f32 %v1774, 1.0
    %v1777 = vrcp.pop %v1775
    %v1778 = vmul.f32 1.0, %v1777
    %v1779 = vrcp.pop %v1776
    %v1780 = vmul.f32 1.0, %v1779
    %v1781 = vadd.f32 %v1750, %v1508
    %v1782 = vadd.f32 %v1753, %v1514
    %v1783 = vxor.u32 %v1781, 2147483648
    %v1784 = vxor.u32 %v1782, 2147483648
    %v1785 = vmul.f32 %v1783, 1.442695
    %v1786 = vpow.pop %v1785
    %v1787 = vmul.f32 %v1784, 1.442695
    %v1788 = vpow.pop %v1787
    %v1789 = vadd.f32 %v1786, 1.0
    %v1790 = vadd.f32 %v1788, 1.0
    %v1791 = vrcp.pop %v1789
    %v1792 = vmul.f32 1.0, %v1791
    %v1793 = vrcp.pop %v1790
    %v1794 = vmul.f32 1.0, %v1793
    %v1795 = vmul.f32 %v1778, %v1583
    %v1796 = vmul.f32 %v1780, %v1588
    %v1797 = vadd.f32 %v1751, %v1795
    %v1798 = vadd.f32 %v1754, %v1796
    %v1799 = vtanh.pop %v1797
    %v1800 = vtanh.pop %v1798
    %v1801 = vsub.f32 1.0, %v1792
    %v1802 = vsub.f32 1.0, %v1794
    %v1803 = vmul.f32 %v1801, %v1799
    %v1804 = vmul.f32 %v1802, %v1800
    %v1805 = vmul.f32 %v1792, %v1391
    %v1806 = vmul.f32 %v1794, %v1392
    %v1807 = vadd.f32 %v1803, %v1805
    %v1808 = vadd.f32 %v1804, %v1806
    %v1809 = vsel %vm1437, 1, 0
    %v1810 = vsel %vm1438, 1, 0
    %1811 = vset.pattern.permute.xlu0 0
    %1812 = vperm.xlu0 %1811, %v1809
    %v1813 = vpop.permute.xlu0 %1812
    %1814 = vset.pattern.permute.xlu0 0
    %1815 = vperm.xlu0 %1814, %v1810
    %v1816 = vpop.permute.xlu0 %1815
    %vm1817 = vcmp.eq.s32.totalorder %v1813, 1
    %vm1818 = vcmp.eq.s32.totalorder %v1816, 1
    %v1819 = vsel %vm1817, %v1807, %v1391
    %v1820 = vsel %vm1818, %v1808, %v1392
    %v1821 = vadd.f32 %v1761, %v1658
    %v1822 = vadd.f32 %v1764, %v1664
    %v1823 = vxor.u32 %v1821, 2147483648
    %v1824 = vxor.u32 %v1822, 2147483648
    %v1825 = vmul.f32 %v1823, 1.442695
    %v1826 = vpow.pop %v1825
    %v1827 = vmul.f32 %v1824, 1.442695
    %v1828 = vpow.pop %v1827
    %v1829 = vadd.f32 %v1826, 1.0
    %v1830 = vadd.f32 %v1828, 1.0
    %v1831 = vrcp.pop %v1829
    %v1832 = vmul.f32 1.0, %v1831
    %v1833 = vrcp.pop %v1830
    %v1834 = vmul.f32 1.0, %v1833
    %v1835 = vadd.f32 %v1762, %v1660
    %v1836 = vadd.f32 %v1765, %v1666
    %v1837 = vxor.u32 %v1835, 2147483648
    %v1838 = vxor.u32 %v1836, 2147483648
    %v1839 = vmul.f32 %v1837, 1.442695
    %v1840 = vpow.pop %v1839
    %v1841 = vmul.f32 %v1838, 1.442695
    %v1842 = vpow.pop %v1841
    %v1843 = vadd.f32 %v1840, 1.0
    %v1844 = vadd.f32 %v1842, 1.0
    %v1845 = vrcp.pop %v1843
    %v1846 = vmul.f32 1.0, %v1845
    %v1847 = vrcp.pop %v1844
    %v1848 = vmul.f32 1.0, %v1847
    %v1849 = vmul.f32 %v1832, %v1735
    %v1850 = vmul.f32 %v1834, %v1740
    %v1851 = vadd.f32 %v1763, %v1849
    %v1852 = vadd.f32 %v1766, %v1850
    %v1853 = vtanh.pop %v1851
    %v1854 = vtanh.pop %v1852
    %v1855 = vsub.f32 1.0, %v1846
    %v1856 = vsub.f32 1.0, %v1848
    %v1857 = vmul.f32 %v1855, %v1853
    %v1858 = vmul.f32 %v1856, %v1854
    %v1859 = vmul.f32 %v1846, %v1435
    %v1860 = vmul.f32 %v1848, %v1436
    %v1861 = vadd.f32 %v1857, %v1859
    %v1862 = vadd.f32 %v1858, %v1860
    %v1863 = vsel %vm1817, %v1861, %v1435
    %v1864 = vsel %vm1818, %v1862, %v1436
    %vm1865 = vcmp.gt.s32.totalorder %v159, 2
    %vm1866 = vcmp.gt.s32.totalorder %v160, 2
    %1867 = vmatprep.subr.mxu0 %v846
    %1868 = vmatpush1.msra.mxu0 %v845
    %1869 = vmatprep.subr.mxu0 %v849
    %1870 = vmatpush1.msra.mxu0 %v848
    %1871 = vmatprep.subr.mxu0 %v852
    %1872 = vmatpush1.msra.mxu0 %v851
    %1873 = vmatprep.subr.mxu0 %v855
    %1874 = vmatpush1.msra.mxu0 %v854
    %1875 = vmatprep.subr.mxu0 %v858
    %1876 = vmatpush1.msra.mxu0 %v857
    %1877 = vmatprep.subr.mxu0 %v861
    %1878 = vmatpush1.msra.mxu0 %v860
    %1879 = vmatprep.subr.mxu0 %v864
    %1880 = vmatpush1.msra.mxu0 %v863
    %1881 = vmatprep.subr.mxu0 %v867
    %1882 = vmatpush1.msra.mxu0 %v866
    %1883 = vmatprep.subr.mxu0 %v870
    %1884 = vmatpush1.msra.mxu0 %v869
    %1885 = vmatprep.subr.mxu0 %v873
    %1886 = vmatpush1.msra.mxu0 %v872
    %1887 = vmatprep.subr.mxu0 %v876
    %1888 = vmatpush1.msra.mxu0 %v875
    %1889 = vmatprep.subr.mxu0 %v879
    %1890 = vmatpush1.msra.mxu0 %v878
    %1891 = vmatprep.subr.mxu0 %v882
    %1892 = vmatpush1.msra.mxu0 %v881
    %1893 = vmatprep.subr.mxu0 %v885
    %1894 = vmatpush1.msra.mxu0 %v884
    %1895 = vmatprep.subr.mxu0 %v888
    %1896 = vmatpush1.msra.mxu0 %v887
    %1897 = vmatprep.subr.mxu0 %v891
    %1898 = vmatpush1.msra.mxu0 %v890
    %1899 = vmatprep.subr.mxu0 0.0
    %1900 = vmatpush1.msra.mxu0 0.0
    %1901 = vmatprep.subr.mxu0 0.0
    %1902 = vmatpush1.msra.mxu0 0.0
    %1903 = vmatprep.subr.mxu0 0.0
    %1904 = vmatpush1.msra.mxu0 0.0
    %1905 = vmatprep.subr.mxu0 0.0
    %1906 = vmatpush1.msra.mxu0 0.0
    %1907 = vmatprep.subr.mxu0 0.0
    %1908 = vmatpush1.msra.mxu0 0.0
    %1909 = vmatprep.subr.mxu0 0.0
    %1910 = vmatpush1.msra.mxu0 0.0
    %1911 = vmatprep.subr.mxu0 0.0
    %1912 = vmatpush1.msra.mxu0 0.0
    %1913 = vmatprep.subr.mxu0 0.0
    %1914 = vmatpush1.msra.mxu0 0.0
    %1915 = vmatprep.subr.mxu0 0.0
    %1916 = vmatpush1.msra.mxu0 0.0
    %1917 = vmatprep.subr.mxu0 0.0
    %1918 = vmatpush1.msra.mxu0 0.0
    %1919 = vmatprep.subr.mxu0 0.0
    %1920 = vmatpush1.msra.mxu0 0.0
    %1921 = vmatprep.subr.mxu0 0.0
    %1922 = vmatpush1.msra.mxu0 0.0
    %1923 = vmatprep.subr.mxu0 0.0
    %1924 = vmatpush1.msra.mxu0 0.0
    %1925 = vmatprep.subr.mxu0 0.0
    %1926 = vmatpush1.msra.mxu0 0.0
    %1927 = vmatprep.subr.mxu0 0.0
    %1928 = vmatpush1.msra.mxu0 0.0
    %1929 = vmatprep.subr.mxu0 0.0
    %1930 = vmatpush1.msra.mxu0 0.0
    %1931 = vmatprep.mubr.f32.mxu0 0.0
    %1932 = vmatmul.mubr.f32.gmra.mrb[0].mxu0 %v1819
    %v1933 = vpop.f32.mrb[0].mxu0
    %v1934 = vadd.f32 %v951, %v1933
    %v1935 = vpop.f32.mrb[0].mxu0
    %v1936 = vadd.f32 %v955, %v1935
    %1937 = vmatprep.mubr.f32.mxu0 0.0
    %1938 = vmatmul.mubr.f32.gmra.mrb[0].mxu0 %v1820
    %v1939 = vpop.f32.mrb[0].mxu0
    %v1940 = vadd.f32 %v951, %v1939
    %v1941 = vpop.f32.mrb[0].mxu0
    %v1942 = vadd.f32 %v955, %v1941
    %1943 = vdwg.mxu0
    %1944 = vmatprep.subr.mxu0 0.0
    %1945 = vmatpush1.msra.mxu0 %v847
    %1946 = vmatprep.subr.mxu0 0.0
    %1947 = vmatpush1.msra.mxu0 %v850
    %1948 = vmatprep.subr.mxu0 0.0
    %1949 = vmatpush1.msra.mxu0 %v853
    %1950 = vmatprep.subr.mxu0 0.0
    %1951 = vmatpush1.msra.mxu0 %v856
    %1952 = vmatprep.subr.mxu0 0.0
    %1953 = vmatpush1.msra.mxu0 %v859
    %1954 = vmatprep.subr.mxu0 0.0
    %1955 = vmatpush1.msra.mxu0 %v862
    %1956 = vmatprep.subr.mxu0 0.0
    %1957 = vmatpush1.msra.mxu0 %v865
    %1958 = vmatprep.subr.mxu0 0.0
    %1959 = vmatpush1.msra.mxu0 %v868
    %1960 = vmatprep.subr.mxu0 0.0
    %1961 = vmatpush1.msra.mxu0 %v871
    %1962 = vmatprep.subr.mxu0 0.0
    %1963 = vmatpush1.msra.mxu0 %v874
    %1964 = vmatprep.subr.mxu0 0.0
    %1965 = vmatpush1.msra.mxu0 %v877
    %1966 = vmatprep.subr.mxu0 0.0
    %1967 = vmatpush1.msra.mxu0 %v880
    %1968 = vmatprep.subr.mxu0 0.0
    %1969 = vmatpush1.msra.mxu0 %v883
    %1970 = vmatprep.subr.mxu0 0.0
    %1971 = vmatpush1.msra.mxu0 %v886
    %1972 = vmatprep.subr.mxu0 0.0
    %1973 = vmatpush1.msra.mxu0 %v889
    %1974 = vmatprep.subr.mxu0 0.0
    %1975 = vmatpush1.msra.mxu0 %v892
    %1976 = vmatprep.subr.mxu0 0.0
    %1977 = vmatpush1.msra.mxu0 0.0
    %1978 = vmatprep.subr.mxu0 0.0
    %1979 = vmatpush1.msra.mxu0 0.0
    %1980 = vmatprep.subr.mxu0 0.0
    %1981 = vmatpush1.msra.mxu0 0.0
    %1982 = vmatprep.subr.mxu0 0.0
    %1983 = vmatpush1.msra.mxu0 0.0
    %1984 = vmatprep.subr.mxu0 0.0
    %1985 = vmatpush1.msra.mxu0 0.0
    %1986 = vmatprep.subr.mxu0 0.0
    %1987 = vmatpush1.msra.mxu0 0.0
    %1988 = vmatprep.subr.mxu0 0.0
    %1989 = vmatpush1.msra.mxu0 0.0
    %1990 = vmatprep.subr.mxu0 0.0
    %1991 = vmatpush1.msra.mxu0 0.0
    %1992 = vmatprep.subr.mxu0 0.0
    %1993 = vmatpush1.msra.mxu0 0.0
    %1994 = vmatprep.subr.mxu0 0.0
    %1995 = vmatpush1.msra.mxu0 0.0
    %1996 = vmatprep.subr.mxu0 0.0
    %1997 = vmatpush1.msra.mxu0 0.0
    %1998 = vmatprep.subr.mxu0 0.0
    %1999 = vmatpush1.msra.mxu0 0.0
    %2000 = vmatprep.subr.mxu0 0.0
    %2001 = vmatpush1.msra.mxu0 0.0
    %2002 = vmatprep.subr.mxu0 0.0
    %2003 = vmatpush1.msra.mxu0 0.0
    %2004 = vmatprep.subr.mxu0 0.0
    %2005 = vmatpush1.msra.mxu0 0.0
    %2006 = vmatprep.subr.mxu0 0.0
    %2007 = vmatpush1.msra.mxu0 0.0
    %2008 = vmatprep.mubr.f32.mxu0 0.0
    %2009 = vmatmul.mubr.f32.gmra.mrb[0].mxu0 %v1819
    %v2010 = vpop.f32.mrb[0].mxu0
    %v2011 = vadd.f32 %v959, %v2010
    %v2012 = vpop.f32.mrb[0].mxu0
    %2013 = vmatprep.mubr.f32.mxu0 0.0
    %2014 = vmatmul.mubr.f32.gmra.mrb[0].mxu0 %v1820
    %v2015 = vpop.f32.mrb[0].mxu0
    %v2016 = vadd.f32 %v959, %v2015
    %v2017 = vpop.f32.mrb[0].mxu0
    %2018 = vdwg.mxu0
    %2019 = vmatprep.subr.mxu0 %v894
    %2020 = vmatpush1.msra.mxu0 %v893
    %2021 = vmatprep.subr.mxu0 %v897
    %2022 = vmatpush1.msra.mxu0 %v896
    %2023 = vmatprep.subr.mxu0 %v900
    %2024 = vmatpush1.msra.mxu0 %v899
    %2025 = vmatprep.subr.mxu0 %v903
    %2026 = vmatpush1.msra.mxu0 %v902
    %2027 = vmatprep.subr.mxu0 %v906
    %2028 = vmatpush1.msra.mxu0 %v905
    %2029 = vmatprep.subr.mxu0 %v909
    %2030 = vmatpush1.msra.mxu0 %v908
    %2031 = vmatprep.subr.mxu0 %v912
    %2032 = vmatpush1.msra.mxu0 %v911
    %2033 = vmatprep.subr.mxu0 %v915
    %2034 = vmatpush1.msra.mxu0 %v914
    %2035 = vmatprep.subr.mxu0 %v918
    %2036 = vmatpush1.msra.mxu0 %v917
    %2037 = vmatprep.subr.mxu0 %v921
    %2038 = vmatpush1.msra.mxu0 %v920
    %2039 = vmatprep.subr.mxu0 %v924
    %2040 = vmatpush1.msra.mxu0 %v923
    %2041 = vmatprep.subr.mxu0 %v927
    %2042 = vmatpush1.msra.mxu0 %v926
    %2043 = vmatprep.subr.mxu0 %v930
    %2044 = vmatpush1.msra.mxu0 %v929
    %2045 = vmatprep.subr.mxu0 %v933
    %2046 = vmatpush1.msra.mxu0 %v932
    %2047 = vmatprep.subr.mxu0 %v936
    %2048 = vmatpush1.msra.mxu0 %v935
    %2049 = vmatprep.subr.mxu0 %v939
    %2050 = vmatpush1.msra.mxu0 %v938
    %2051 = vmatprep.subr.mxu0 0.0
    %2052 = vmatpush1.msra.mxu0 0.0
    %2053 = vmatprep.subr.mxu0 0.0
    %2054 = vmatpush1.msra.mxu0 0.0
    %2055 = vmatprep.subr.mxu0 0.0
    %2056 = vmatpush1.msra.mxu0 0.0
    %2057 = vmatprep.subr.mxu0 0.0
    %2058 = vmatpush1.msra.mxu0 0.0
    %2059 = vmatprep.subr.mxu0 0.0
    %2060 = vmatpush1.msra.mxu0 0.0
    %2061 = vmatprep.subr.mxu0 0.0
    %2062 = vmatpush1.msra.mxu0 0.0
    %2063 = vmatprep.subr.mxu0 0.0
    %2064 = vmatpush1.msra.mxu0 0.0
    %2065 = vmatprep.subr.mxu0 0.0
    %2066 = vmatpush1.msra.mxu0 0.0
    %2067 = vmatprep.subr.mxu0 0.0
    %2068 = vmatpush1.msra.mxu0 0.0
    %2069 = vmatprep.subr.mxu0 0.0
    %2070 = vmatpush1.msra.mxu0 0.0
    %2071 = vmatprep.subr.mxu0 0.0
    %2072 = vmatpush1.msra.mxu0 0.0
    %2073 = vmatprep.subr.mxu0 0.0
    %2074 = vmatpush1.msra.mxu0 0.0
    %2075 = vmatprep.subr.mxu0 0.0
    %2076 = vmatpush1.msra.mxu0 0.0
    %2077 = vmatprep.subr.mxu0 0.0
    %2078 = vmatpush1.msra.mxu0 0.0
    %2079 = vmatprep.subr.mxu0 0.0
    %2080 = vmatpush1.msra.mxu0 0.0
    %2081 = vmatprep.subr.mxu0 0.0
    %2082 = vmatpush1.msra.mxu0 0.0
    %2083 = vmatprep.mubr.f32.mxu0 0.0
    %2084 = vmatmul.mubr.f32.gmra.mrb[0].mxu0 %v1863
    %v2085 = vpop.f32.mrb[0].mxu0
    %v2086 = vadd.f32 %v1119, %v2085
    %v2087 = vpop.f32.mrb[0].mxu0
    %v2088 = vadd.f32 %v1123, %v2087
    %2089 = vmatprep.mubr.f32.mxu0 0.0
    %2090 = vmatmul.mubr.f32.gmra.mrb[0].mxu0 %v1864
    %v2091 = vpop.f32.mrb[0].mxu0
    %v2092 = vadd.f32 %v1119, %v2091
    %v2093 = vpop.f32.mrb[0].mxu0
    %v2094 = vadd.f32 %v1123, %v2093
    %2095 = vdwg.mxu0
    %2096 = vmatprep.subr.mxu0 0.0
    %2097 = vmatpush1.msra.mxu0 %v895
    %2098 = vmatprep.subr.mxu0 0.0
    %2099 = vmatpush1.msra.mxu0 %v898
    %2100 = vmatprep.subr.mxu0 0.0
    %2101 = vmatpush1.msra.mxu0 %v901
    %2102 = vmatprep.subr.mxu0 0.0
    %2103 = vmatpush1.msra.mxu0 %v904
    %2104 = vmatprep.subr.mxu0 0.0
    %2105 = vmatpush1.msra.mxu0 %v907
    %2106 = vmatprep.subr.mxu0 0.0
    %2107 = vmatpush1.msra.mxu0 %v910
    %2108 = vmatprep.subr.mxu0 0.0
    %2109 = vmatpush1.msra.mxu0 %v913
    %2110 = vmatprep.subr.mxu0 0.0
    %2111 = vmatpush1.msra.mxu0 %v916
    %2112 = vmatprep.subr.mxu0 0.0
    %2113 = vmatpush1.msra.mxu0 %v919
    %2114 = vmatprep.subr.mxu0 0.0
    %2115 = vmatpush1.msra.mxu0 %v922
    %2116 = vmatprep.subr.mxu0 0.0
    %2117 = vmatpush1.msra.mxu0 %v925
    %2118 = vmatprep.subr.mxu0 0.0
    %2119 = vmatpush1.msra.mxu0 %v928
    %2120 = vmatprep.subr.mxu0 0.0
    %2121 = vmatpush1.msra.mxu0 %v931
    %2122 = vmatprep.subr.mxu0 0.0
    %2123 = vmatpush1.msra.mxu0 %v934
    %2124 = vmatprep.subr.mxu0 0.0
    %2125 = vmatpush1.msra.mxu0 %v937
    %2126 = vmatprep.subr.mxu0 0.0
    %2127 = vmatpush1.msra.mxu0 %v940
    %2128 = vmatprep.subr.mxu0 0.0
    %2129 = vmatpush1.msra.mxu0 0.0
    %2130 = vmatprep.subr.mxu0 0.0
    %2131 = vmatpush1.msra.mxu0 0.0
    %2132 = vmatprep.subr.mxu0 0.0
    %2133 = vmatpush1.msra.mxu0 0.0
    %2134 = vmatprep.subr.mxu0 0.0
    %2135 = vmatpush1.msra.mxu0 0.0
    %2136 = vmatprep.subr.mxu0 0.0
    %2137 = vmatpush1.msra.mxu0 0.0
    %2138 = vmatprep.subr.mxu0 0.0
    %2139 = vmatpush1.msra.mxu0 0.0
    %2140 = vmatprep.subr.mxu0 0.0
    %2141 = vmatpush1.msra.mxu0 0.0
    %2142 = vmatprep.subr.mxu0 0.0
    %2143 = vmatpush1.msra.mxu0 0.0
    %2144 = vmatprep.subr.mxu0 0.0
    %2145 = vmatpush1.msra.mxu0 0.0
    %2146 = vmatprep.subr.mxu0 0.0
    %2147 = vmatpush1.msra.mxu0 0.0
    %2148 = vmatprep.subr.mxu0 0.0
    %2149 = vmatpush1.msra.mxu0 0.0
    %2150 = vmatprep.subr.mxu0 0.0
    %2151 = vmatpush1.msra.mxu0 0.0
    %2152 = vmatprep.subr.mxu0 0.0
    %2153 = vmatpush1.msra.mxu0 0.0
    %2154 = vmatprep.subr.mxu0 0.0
    %2155 = vmatpush1.msra.mxu0 0.0
    %2156 = vmatprep.subr.mxu0 0.0
    %2157 = vmatpush1.msra.mxu0 0.0
    %2158 = vmatprep.subr.mxu0 0.0
    %2159 = vmatpush1.msra.mxu0 0.0
    %2160 = vmatprep.mubr.f32.mxu0 0.0
    %2161 = vmatmul.mubr.f32.gmra.mrb[0].mxu0 %v1863
    %v2162 = vpop.f32.mrb[0].mxu0
    %v2163 = vadd.f32 %v1127, %v2162
    %v2164 = vpop.f32.mrb[0].mxu0
    %2165 = vmatprep.mubr.f32.mxu0 0.0
    %2166 = vmatmul.mubr.f32.gmra.mrb[0].mxu0 %v1864
    %v2167 = vpop.f32.mrb[0].mxu0
    %v2168 = vadd.f32 %v1127, %v2167
    %v2169 = vpop.f32.mrb[0].mxu0
    %2170 = vdwg.mxu0
    %v2171 = vunpack.c.l.bf16 %v505
    %v2172 = vunpack.c.l.bf16 %v506
    %v2173 = vunpack.c.l.bf16 %v507
    %v2174 = vunpack.c.h.bf16 %v505
    %v2175 = vunpack.c.h.bf16 %v506
    %v2176 = vunpack.c.h.bf16 %v507
    %v2177 = vadd.f32 %v2171, %v1293
    %v2178 = vadd.f32 %v2172, %v1297
    %v2179 = vadd.f32 %v2173, %v1301
    %v2180 = vadd.f32 %v2174, %v1293
    %v2181 = vadd.f32 %v2175, %v1297
    %v2182 = vadd.f32 %v2176, %v1301
    %v2183 = vunpack.c.l.bf16 %v839
    %v2184 = vunpack.c.l.bf16 %v840
    %v2185 = vunpack.c.l.bf16 %v841
    %v2186 = vunpack.c.h.bf16 %v839
    %v2187 = vunpack.c.h.bf16 %v840
    %v2188 = vunpack.c.h.bf16 %v841
    %v2189 = vadd.f32 %v2183, %v1321
    %v2190 = vadd.f32 %v2184, %v1325
    %v2191 = vadd.f32 %v2185, %v1329
    %v2192 = vadd.f32 %v2186, %v1321
    %v2193 = vadd.f32 %v2187, %v1325
    %v2194 = vadd.f32 %v2188, %v1329
    %v2195 = vadd.f32 %v2177, %v1934
    %v2196 = vadd.f32 %v2180, %v1940
    %v2197 = vxor.u32 %v2195, 2147483648
    %v2198 = vxor.u32 %v2196, 2147483648
    %v2199 = vmul.f32 %v2197, 1.442695
    %v2200 = vpow.pop %v2199
    %v2201 = vmul.f32 %v2198, 1.442695
    %v2202 = vpow.pop %v2201
    %v2203 = vadd.f32 %v2200, 1.0
    %v2204 = vadd.f32 %v2202, 1.0
    %v2205 = vrcp.pop %v2203
    %v2206 = vmul.f32 1.0, %v2205
    %v2207 = vrcp.pop %v2204
    %v2208 = vmul.f32 1.0, %v2207
    %v2209 = vadd.f32 %v2178, %v1936
    %v2210 = vadd.f32 %v2181, %v1942
    %v2211 = vxor.u32 %v2209, 2147483648
    %v2212 = vxor.u32 %v2210, 2147483648
    %v2213 = vmul.f32 %v2211, 1.442695
    %v2214 = vpow.pop %v2213
    %v2215 = vmul.f32 %v2212, 1.442695
    %v2216 = vpow.pop %v2215
    %v2217 = vadd.f32 %v2214, 1.0
    %v2218 = vadd.f32 %v2216, 1.0
    %v2219 = vrcp.pop %v2217
    %v2220 = vmul.f32 1.0, %v2219
    %v2221 = vrcp.pop %v2218
    %v2222 = vmul.f32 1.0, %v2221
    %v2223 = vmul.f32 %v2206, %v2011
    %v2224 = vmul.f32 %v2208, %v2016
    %v2225 = vadd.f32 %v2179, %v2223
    %v2226 = vadd.f32 %v2182, %v2224
    %v2227 = vtanh.pop %v2225
    %v2228 = vtanh.pop %v2226
    %v2229 = vsub.f32 1.0, %v2220
    %v2230 = vsub.f32 1.0, %v2222
    %v2231 = vmul.f32 %v2229, %v2227
    %v2232 = vmul.f32 %v2230, %v2228
    %v2233 = vmul.f32 %v2220, %v1819
    %v2234 = vmul.f32 %v2222, %v1820
    %v2235 = vadd.f32 %v2231, %v2233
    %v2236 = vadd.f32 %v2232, %v2234
    %v2237 = vsel %vm1865, 1, 0
    %v2238 = vsel %vm1866, 1, 0
    %2239 = vset.pattern.permute.xlu0 0
    %2240 = vperm.xlu0 %2239, %v2237
    %v2241 = vpop.permute.xlu0 %2240
    %2242 = vset.pattern.permute.xlu0 0
    %2243 = vperm.xlu0 %2242, %v2238
    %v2244 = vpop.permute.xlu0 %2243
    %vm2245 = vcmp.eq.s32.totalorder %v2241, 1
    %vm2246 = vcmp.eq.s32.totalorder %v2244, 1
    %v2247 = vsel %vm2245, %v2235, %v1819
    %v2248 = vsel %vm2246, %v2236, %v1820
    %v2249 = vadd.f32 %v2189, %v2086
    %v2250 = vadd.f32 %v2192, %v2092
    %v2251 = vxor.u32 %v2249, 2147483648
    %v2252 = vxor.u32 %v2250, 2147483648
    %v2253 = vmul.f32 %v2251, 1.442695
    %v2254 = vpow.pop %v2253
    %v2255 = vmul.f32 %v2252, 1.442695
    %v2256 = vpow.pop %v2255
    %v2257 = vadd.f32 %v2254, 1.0
    %v2258 = vadd.f32 %v2256, 1.0
    %v2259 = vrcp.pop %v2257
    %v2260 = vmul.f32 1.0, %v2259
    %v2261 = vrcp.pop %v2258
    %v2262 = vmul.f32 1.0, %v2261
    %v2263 = vadd.f32 %v2190, %v2088
    %v2264 = vadd.f32 %v2193, %v2094
    %v2265 = vxor.u32 %v2263, 2147483648
    %v2266 = vxor.u32 %v2264, 2147483648
    %v2267 = vmul.f32 %v2265, 1.442695
    %v2268 = vpow.pop %v2267
    %v2269 = vmul.f32 %v2266, 1.442695
    %v2270 = vpow.pop %v2269
    %v2271 = vadd.f32 %v2268, 1.0
    %v2272 = vadd.f32 %v2270, 1.0
    %v2273 = vrcp.pop %v2271
    %v2274 = vmul.f32 1.0, %v2273
    %v2275 = vrcp.pop %v2272
    %v2276 = vmul.f32 1.0, %v2275
    %v2277 = vmul.f32 %v2260, %v2163
    %v2278 = vmul.f32 %v2262, %v2168
    %v2279 = vadd.f32 %v2191, %v2277
    %v2280 = vadd.f32 %v2194, %v2278
    %v2281 = vtanh.pop %v2279
    %v2282 = vtanh.pop %v2280
    %v2283 = vsub.f32 1.0, %v2274
    %v2284 = vsub.f32 1.0, %v2276
    %v2285 = vmul.f32 %v2283, %v2281
    %v2286 = vmul.f32 %v2284, %v2282
    %v2287 = vmul.f32 %v2274, %v1863
    %v2288 = vmul.f32 %v2276, %v1864
    %v2289 = vadd.f32 %v2285, %v2287
    %v2290 = vadd.f32 %v2286, %v2288
    %v2291 = vsel %vm2245, %v2289, %v1863
    %v2292 = vsel %vm2246, %v2290, %v1864
    %vm2293 = vcmp.gt.s32.totalorder %v159, 3
    %vm2294 = vcmp.gt.s32.totalorder %v160, 3
    %2295 = vmatprep.subr.mxu0 %v846
    %2296 = vmatpush1.msra.mxu0 %v845
    %2297 = vmatprep.subr.mxu0 %v849
    %2298 = vmatpush1.msra.mxu0 %v848
    %2299 = vmatprep.subr.mxu0 %v852
    %2300 = vmatpush1.msra.mxu0 %v851
    %2301 = vmatprep.subr.mxu0 %v855
    %2302 = vmatpush1.msra.mxu0 %v854
    %2303 = vmatprep.subr.mxu0 %v858
    %2304 = vmatpush1.msra.mxu0 %v857
    %2305 = vmatprep.subr.mxu0 %v861
    %2306 = vmatpush1.msra.mxu0 %v860
    %2307 = vmatprep.subr.mxu0 %v864
    %2308 = vmatpush1.msra.mxu0 %v863
    %2309 = vmatprep.subr.mxu0 %v867
    %2310 = vmatpush1.msra.mxu0 %v866
    %2311 = vmatprep.subr.mxu0 %v870
    %2312 = vmatpush1.msra.mxu0 %v869
    %2313 = vmatprep.subr.mxu0 %v873
    %2314 = vmatpush1.msra.mxu0 %v872
    %2315 = vmatprep.subr.mxu0 %v876
    %2316 = vmatpush1.msra.mxu0 %v875
    %2317 = vmatprep.subr.mxu0 %v879
    %2318 = vmatpush1.msra.mxu0 %v878
    %2319 = vmatprep.subr.mxu0 %v882
    %2320 = vmatpush1.msra.mxu0 %v881
    %2321 = vmatprep.subr.mxu0 %v885
    %2322 = vmatpush1.msra.mxu0 %v884
    %2323 = vmatprep.subr.mxu0 %v888
    %2324 = vmatpush1.msra.mxu0 %v887
    %2325 = vmatprep.subr.mxu0 %v891
    %2326 = vmatpush1.msra.mxu0 %v890
    %2327 = vmatprep.subr.mxu0 0.0
    %2328 = vmatpush1.msra.mxu0 0.0
    %2329 = vmatprep.subr.mxu0 0.0
    %2330 = vmatpush1.msra.mxu0 0.0
    %2331 = vmatprep.subr.mxu0 0.0
    %2332 = vmatpush1.msra.mxu0 0.0
    %2333 = vmatprep.subr.mxu0 0.0
    %2334 = vmatpush1.msra.mxu0 0.0
    %2335 = vmatprep.subr.mxu0 0.0
    %2336 = vmatpush1.msra.mxu0 0.0
    %2337 = vmatprep.subr.mxu0 0.0
    %2338 = vmatpush1.msra.mxu0 0.0
    %2339 = vmatprep.subr.mxu0 0.0
    %2340 = vmatpush1.msra.mxu0 0.0
    %2341 = vmatprep.subr.mxu0 0.0
    %2342 = vmatpush1.msra.mxu0 0.0
    %2343 = vmatprep.subr.mxu0 0.0
    %2344 = vmatpush1.msra.mxu0 0.0
    %2345 = vmatprep.subr.mxu0 0.0
    %2346 = vmatpush1.msra.mxu0 0.0
    %2347 = vmatprep.subr.mxu0 0.0
    %2348 = vmatpush1.msra.mxu0 0.0
    %2349 = vmatprep.subr.mxu0 0.0
    %2350 = vmatpush1.msra.mxu0 0.0
    %2351 = vmatprep.subr.mxu0 0.0
    %2352 = vmatpush1.msra.mxu0 0.0
    %2353 = vmatprep.subr.mxu0 0.0
    %2354 = vmatpush1.msra.mxu0 0.0
    %2355 = vmatprep.subr.mxu0 0.0
    %2356 = vmatpush1.msra.mxu0 0.0
    %2357 = vmatprep.subr.mxu0 0.0
    %2358 = vmatpush1.msra.mxu0 0.0
    %2359 = vmatprep.mubr.f32.mxu0 0.0
    %2360 = vmatmul.mubr.f32.gmra.mrb[0].mxu0 %v2247
    %v2361 = vpop.f32.mrb[0].mxu0
    %v2362 = vadd.f32 %v951, %v2361
    %v2363 = vpop.f32.mrb[0].mxu0
    %v2364 = vadd.f32 %v955, %v2363
    %2365 = vmatprep.mubr.f32.mxu0 0.0
    %2366 = vmatmul.mubr.f32.gmra.mrb[0].mxu0 %v2248
    %v2367 = vpop.f32.mrb[0].mxu0
    %v2368 = vadd.f32 %v951, %v2367
    %v2369 = vpop.f32.mrb[0].mxu0
    %v2370 = vadd.f32 %v955, %v2369
    %2371 = vdwg.mxu0
    %2372 = vmatprep.subr.mxu0 0.0
    %2373 = vmatpush1.msra.mxu0 %v847
    %2374 = vmatprep.subr.mxu0 0.0
    %2375 = vmatpush1.msra.mxu0 %v850
    %2376 = vmatprep.subr.mxu0 0.0
    %2377 = vmatpush1.msra.mxu0 %v853
    %2378 = vmatprep.subr.mxu0 0.0
    %2379 = vmatpush1.msra.mxu0 %v856
    %2380 = vmatprep.subr.mxu0 0.0
    %2381 = vmatpush1.msra.mxu0 %v859
    %2382 = vmatprep.subr.mxu0 0.0
    %2383 = vmatpush1.msra.mxu0 %v862
    %2384 = vmatprep.subr.mxu0 0.0
    %2385 = vmatpush1.msra.mxu0 %v865
    %2386 = vmatprep.subr.mxu0 0.0
    %2387 = vmatpush1.msra.mxu0 %v868
    %2388 = vmatprep.subr.mxu0 0.0
    %2389 = vmatpush1.msra.mxu0 %v871
    %2390 = vmatprep.subr.mxu0 0.0
    %2391 = vmatpush1.msra.mxu0 %v874
    %2392 = vmatprep.subr.mxu0 0.0
    %2393 = vmatpush1.msra.mxu0 %v877
    %2394 = vmatprep.subr.mxu0 0.0
    %2395 = vmatpush1.msra.mxu0 %v880
    %2396 = vmatprep.subr.mxu0 0.0
    %2397 = vmatpush1.msra.mxu0 %v883
    %2398 = vmatprep.subr.mxu0 0.0
    %2399 = vmatpush1.msra.mxu0 %v886
    %2400 = vmatprep.subr.mxu0 0.0
    %2401 = vmatpush1.msra.mxu0 %v889
    %2402 = vmatprep.subr.mxu0 0.0
    %2403 = vmatpush1.msra.mxu0 %v892
    %2404 = vmatprep.subr.mxu0 0.0
    %2405 = vmatpush1.msra.mxu0 0.0
    %2406 = vmatprep.subr.mxu0 0.0
    %2407 = vmatpush1.msra.mxu0 0.0
    %2408 = vmatprep.subr.mxu0 0.0
    %2409 = vmatpush1.msra.mxu0 0.0
    %2410 = vmatprep.subr.mxu0 0.0
    %2411 = vmatpush1.msra.mxu0 0.0
    %2412 = vmatprep.subr.mxu0 0.0
    %2413 = vmatpush1.msra.mxu0 0.0
    %2414 = vmatprep.subr.mxu0 0.0
    %2415 = vmatpush1.msra.mxu0 0.0
    %2416 = vmatprep.subr.mxu0 0.0
    %2417 = vmatpush1.msra.mxu0 0.0
    %2418 = vmatprep.subr.mxu0 0.0
    %2419 = vmatpush1.msra.mxu0 0.0
    %2420 = vmatprep.subr.mxu0 0.0
    %2421 = vmatpush1.msra.mxu0 0.0
    %2422 = vmatprep.subr.mxu0 0.0
    %2423 = vmatpush1.msra.mxu0 0.0
    %2424 = vmatprep.subr.mxu0 0.0
    %2425 = vmatpush1.msra.mxu0 0.0
    %2426 = vmatprep.subr.mxu0 0.0
    %2427 = vmatpush1.msra.mxu0 0.0
    %2428 = vmatprep.subr.mxu0 0.0
    %2429 = vmatpush1.msra.mxu0 0.0
    %2430 = vmatprep.subr.mxu0 0.0
    %2431 = vmatpush1.msra.mxu0 0.0
    %2432 = vmatprep.subr.mxu0 0.0
    %2433 = vmatpush1.msra.mxu0 0.0
    %2434 = vmatprep.subr.mxu0 0.0
    %2435 = vmatpush1.msra.mxu0 0.0
    %2436 = vmatprep.mubr.f32.mxu0 0.0
    %2437 = vmatmul.mubr.f32.gmra.mrb[0].mxu0 %v2247
    %v2438 = vpop.f32.mrb[0].mxu0
    %v2439 = vadd.f32 %v959, %v2438
    %v2440 = vpop.f32.mrb[0].mxu0
    %2441 = vmatprep.mubr.f32.mxu0 0.0
    %2442 = vmatmul.mubr.f32.gmra.mrb[0].mxu0 %v2248
    %v2443 = vpop.f32.mrb[0].mxu0
    %v2444 = vadd.f32 %v959, %v2443
    %v2445 = vpop.f32.mrb[0].mxu0
    %2446 = vdwg.mxu0
    %2447 = vmatprep.subr.mxu0 %v894
    %2448 = vmatpush1.msra.mxu0 %v893
    %2449 = vmatprep.subr.mxu0 %v897
    %2450 = vmatpush1.msra.mxu0 %v896
    %2451 = vmatprep.subr.mxu0 %v900
    %2452 = vmatpush1.msra.mxu0 %v899
    %2453 = vmatprep.subr.mxu0 %v903
    %2454 = vmatpush1.msra.mxu0 %v902
    %2455 = vmatprep.subr.mxu0 %v906
    %2456 = vmatpush1.msra.mxu0 %v905
    %2457 = vmatprep.subr.mxu0 %v909
    %2458 = vmatpush1.msra.mxu0 %v908
    %2459 = vmatprep.subr.mxu0 %v912
    %2460 = vmatpush1.msra.mxu0 %v911
    %2461 = vmatprep.subr.mxu0 %v915
    %2462 = vmatpush1.msra.mxu0 %v914
    %2463 = vmatprep.subr.mxu0 %v918
    %2464 = vmatpush1.msra.mxu0 %v917
    %2465 = vmatprep.subr.mxu0 %v921
    %2466 = vmatpush1.msra.mxu0 %v920
    %2467 = vmatprep.subr.mxu0 %v924
    %2468 = vmatpush1.msra.mxu0 %v923
    %2469 = vmatprep.subr.mxu0 %v927
    %2470 = vmatpush1.msra.mxu0 %v926
    %2471 = vmatprep.subr.mxu0 %v930
    %2472 = vmatpush1.msra.mxu0 %v929
    %2473 = vmatprep.subr.mxu0 %v933
    %2474 = vmatpush1.msra.mxu0 %v932
    %2475 = vmatprep.subr.mxu0 %v936
    %2476 = vmatpush1.msra.mxu0 %v935
    %2477 = vmatprep.subr.mxu0 %v939
    %2478 = vmatpush1.msra.mxu0 %v938
    %2479 = vmatprep.subr.mxu0 0.0
    %2480 = vmatpush1.msra.mxu0 0.0
    %2481 = vmatprep.subr.mxu0 0.0
    %2482 = vmatpush1.msra.mxu0 0.0
    %2483 = vmatprep.subr.mxu0 0.0
    %2484 = vmatpush1.msra.mxu0 0.0
    %2485 = vmatprep.subr.mxu0 0.0
    %2486 = vmatpush1.msra.mxu0 0.0
    %2487 = vmatprep.subr.mxu0 0.0
    %2488 = vmatpush1.msra.mxu0 0.0
    %2489 = vmatprep.subr.mxu0 0.0
    %2490 = vmatpush1.msra.mxu0 0.0
    %2491 = vmatprep.subr.mxu0 0.0
    %2492 = vmatpush1.msra.mxu0 0.0
    %2493 = vmatprep.subr.mxu0 0.0
    %2494 = vmatpush1.msra.mxu0 0.0
    %2495 = vmatprep.subr.mxu0 0.0
    %2496 = vmatpush1.msra.mxu0 0.0
    %2497 = vmatprep.subr.mxu0 0.0
    %2498 = vmatpush1.msra.mxu0 0.0
    %2499 = vmatprep.subr.mxu0 0.0
    %2500 = vmatpush1.msra.mxu0 0.0
    %2501 = vmatprep.subr.mxu0 0.0
    %2502 = vmatpush1.msra.mxu0 0.0
    %2503 = vmatprep.subr.mxu0 0.0
    %2504 = vmatpush1.msra.mxu0 0.0
    %2505 = vmatprep.subr.mxu0 0.0
    %2506 = vmatpush1.msra.mxu0 0.0
    %2507 = vmatprep.subr.mxu0 0.0
    %2508 = vmatpush1.msra.mxu0 0.0
    %2509 = vmatprep.subr.mxu0 0.0
    %2510 = vmatpush1.msra.mxu0 0.0
    %2511 = vmatprep.mubr.f32.mxu0 0.0
    %2512 = vmatmul.mubr.f32.gmra.mrb[0].mxu0 %v2291
    %v2513 = vpop.f32.mrb[0].mxu0
    %v2514 = vadd.f32 %v1119, %v2513
    %v2515 = vpop.f32.mrb[0].mxu0
    %v2516 = vadd.f32 %v1123, %v2515
    %2517 = vmatprep.mubr.f32.mxu0 0.0
    %2518 = vmatmul.mubr.f32.gmra.mrb[0].mxu0 %v2292
    %v2519 = vpop.f32.mrb[0].mxu0
    %v2520 = vadd.f32 %v1119, %v2519
    %v2521 = vpop.f32.mrb[0].mxu0
    %v2522 = vadd.f32 %v1123, %v2521
    %2523 = vdwg.mxu0
    %2524 = vmatprep.subr.mxu0 0.0
    %2525 = vmatpush1.msra.mxu0 %v895
    %2526 = vmatprep.subr.mxu0 0.0
    %2527 = vmatpush1.msra.mxu0 %v898
    %2528 = vmatprep.subr.mxu0 0.0
    %2529 = vmatpush1.msra.mxu0 %v901
    %2530 = vmatprep.subr.mxu0 0.0
    %2531 = vmatpush1.msra.mxu0 %v904
    %2532 = vmatprep.subr.mxu0 0.0
    %2533 = vmatpush1.msra.mxu0 %v907
    %2534 = vmatprep.subr.mxu0 0.0
    %2535 = vmatpush1.msra.mxu0 %v910
    %2536 = vmatprep.subr.mxu0 0.0
    %2537 = vmatpush1.msra.mxu0 %v913
    %2538 = vmatprep.subr.mxu0 0.0
    %2539 = vmatpush1.msra.mxu0 %v916
    %2540 = vmatprep.subr.mxu0 0.0
    %2541 = vmatpush1.msra.mxu0 %v919
    %2542 = vmatprep.subr.mxu0 0.0
    %2543 = vmatpush1.msra.mxu0 %v922
    %2544 = vmatprep.subr.mxu0 0.0
    %2545 = vmatpush1.msra.mxu0 %v925
    %2546 = vmatprep.subr.mxu0 0.0
    %2547 = vmatpush1.msra.mxu0 %v928
    %2548 = vmatprep.subr.mxu0 0.0
    %2549 = vmatpush1.msra.mxu0 %v931
    %2550 = vmatprep.subr.mxu0 0.0
    %2551 = vmatpush1.msra.mxu0 %v934
    %2552 = vmatprep.subr.mxu0 0.0
    %2553 = vmatpush1.msra.mxu0 %v937
    %2554 = vmatprep.subr.mxu0 0.0
    %2555 = vmatpush1.msra.mxu0 %v940
    %2556 = vmatprep.subr.mxu0 0.0
    %2557 = vmatpush1.msra.mxu0 0.0
    %2558 = vmatprep.subr.mxu0 0.0
    %2559 = vmatpush1.msra.mxu0 0.0
    %2560 = vmatprep.subr.mxu0 0.0
    %2561 = vmatpush1.msra.mxu0 0.0
    %2562 = vmatprep.subr.mxu0 0.0
    %2563 = vmatpush1.msra.mxu0 0.0
    %2564 = vmatprep.subr.mxu0 0.0
    %2565 = vmatpush1.msra.mxu0 0.0
    %2566 = vmatprep.subr.mxu0 0.0
    %2567 = vmatpush1.msra.mxu0 0.0
    %2568 = vmatprep.subr.mxu0 0.0
    %2569 = vmatpush1.msra.mxu0 0.0
    %2570 = vmatprep.subr.mxu0 0.0
    %2571 = vmatpush1.msra.mxu0 0.0
    %2572 = vmatprep.subr.mxu0 0.0
    %2573 = vmatpush1.msra.mxu0 0.0
    %2574 = vmatprep.subr.mxu0 0.0
    %2575 = vmatpush1.msra.mxu0 0.0
    %2576 = vmatprep.subr.mxu0 0.0
    %2577 = vmatpush1.msra.mxu0 0.0
    %2578 = vmatprep.subr.mxu0 0.0
    %2579 = vmatpush1.msra.mxu0 0.0
    %2580 = vmatprep.subr.mxu0 0.0
    %2581 = vmatpush1.msra.mxu0 0.0
    %2582 = vmatprep.subr.mxu0 0.0
    %2583 = vmatpush1.msra.mxu0 0.0
    %2584 = vmatprep.subr.mxu0 0.0
    %2585 = vmatpush1.msra.mxu0 0.0
    %2586 = vmatprep.subr.mxu0 0.0
    %2587 = vmatpush1.msra.mxu0 0.0
    %2588 = vmatprep.mubr.f32.mxu0 0.0
    %2589 = vmatmul.mubr.f32.gmra.mrb[0].mxu0 %v2291
    %v2590 = vpop.f32.mrb[0].mxu0
    %v2591 = vadd.f32 %v1127, %v2590
    %v2592 = vpop.f32.mrb[0].mxu0
    %2593 = vmatprep.mubr.f32.mxu0 0.0
    %2594 = vmatmul.mubr.f32.gmra.mrb[0].mxu0 %v2292
    %v2595 = vpop.f32.mrb[0].mxu0
    %v2596 = vadd.f32 %v1127, %v2595
    %v2597 = vpop.f32.mrb[0].mxu0
    %2598 = vdwg.mxu0
    %v2599 = vunpack.c.l.bf16 %v508
    %v2600 = vunpack.c.l.bf16 %v509
    %v2601 = vunpack.c.l.bf16 %v510
    %v2602 = vunpack.c.h.bf16 %v508
    %v2603 = vunpack.c.h.bf16 %v509
    %v2604 = vunpack.c.h.bf16 %v510
    %v2605 = vadd.f32 %v2599, %v1293
    %v2606 = vadd.f32 %v2600, %v1297
    %v2607 = vadd.f32 %v2601, %v1301
    %v2608 = vadd.f32 %v2602, %v1293
    %v2609 = vadd.f32 %v2603, %v1297
    %v2610 = vadd.f32 %v2604, %v1301
    %v2611 = vunpack.c.l.bf16 %v842
    %v2612 = vunpack.c.l.bf16 %v843
    %v2613 = vunpack.c.l.bf16 %v844
    %v2614 = vunpack.c.h.bf16 %v842
    %v2615 = vunpack.c.h.bf16 %v843
    %v2616 = vunpack.c.h.bf16 %v844
    %v2617 = vadd.f32 %v2611, %v1321
    %v2618 = vadd.f32 %v2612, %v1325
    %v2619 = vadd.f32 %v2613, %v1329
    %v2620 = vadd.f32 %v2614, %v1321
    %v2621 = vadd.f32 %v2615, %v1325
    %v2622 = vadd.f32 %v2616, %v1329
    %v2623 = vadd.f32 %v2605, %v2362
    %v2624 = vadd.f32 %v2608, %v2368
    %v2625 = vxor.u32 %v2623, 2147483648
    %v2626 = vxor.u32 %v2624, 2147483648
    %v2627 = vmul.f32 %v2625, 1.442695
    %v2628 = vpow.pop %v2627
    %v2629 = vmul.f32 %v2626, 1.442695
    %v2630 = vpow.pop %v2629
    %v2631 = vadd.f32 %v2628, 1.0
    %v2632 = vadd.f32 %v2630, 1.0
    %v2633 = vrcp.pop %v2631
    %v2634 = vmul.f32 1.0, %v2633
    %v2635 = vrcp.pop %v2632
    %v2636 = vmul.f32 1.0, %v2635
    %v2637 = vadd.f32 %v2606, %v2364
    %v2638 = vadd.f32 %v2609, %v2370
    %v2639 = vxor.u32 %v2637, 2147483648
    %v2640 = vxor.u32 %v2638, 2147483648
    %v2641 = vmul.f32 %v2639, 1.442695
    %v2642 = vpow.pop %v2641
    %v2643 = vmul.f32 %v2640, 1.442695
    %v2644 = vpow.pop %v2643
    %v2645 = vadd.f32 %v2642, 1.0
    %v2646 = vadd.f32 %v2644, 1.0
    %v2647 = vrcp.pop %v2645
    %v2648 = vmul.f32 1.0, %v2647
    %v2649 = vrcp.pop %v2646
    %v2650 = vmul.f32 1.0, %v2649
    %v2651 = vmul.f32 %v2634, %v2439
    %v2652 = vmul.f32 %v2636, %v2444
    %v2653 = vadd.f32 %v2607, %v2651
    %v2654 = vadd.f32 %v2610, %v2652
    %v2655 = vtanh.pop %v2653
    %v2656 = vtanh.pop %v2654
    %v2657 = vsub.f32 1.0, %v2648
    %v2658 = vsub.f32 1.0, %v2650
    %v2659 = vmul.f32 %v2657, %v2655
    %v2660 = vmul.f32 %v2658, %v2656
    %v2661 = vmul.f32 %v2648, %v2247
    %v2662 = vmul.f32 %v2650, %v2248
    %v2663 = vadd.f32 %v2659, %v2661
    %v2664 = vadd.f32 %v2660, %v2662
    %v2665 = vsel %vm2293, 1, 0
    %v2666 = vsel %vm2294, 1, 0
    %2667 = vset.pattern.permute.xlu0 0
    %2668 = vperm.xlu0 %2667, %v2665
    %v2669 = vpop.permute.xlu0 %2668
    %2670 = vset.pattern.permute.xlu0 0
    %2671 = vperm.xlu0 %2670, %v2666
    %v2672 = vpop.permute.xlu0 %2671
    %vm2673 = vcmp.eq.s32.totalorder %v2669, 1
    %vm2674 = vcmp.eq.s32.totalorder %v2672, 1
    %v2675 = vsel %vm2673, %v2663, %v2247
    %v2676 = vsel %vm2674, %v2664, %v2248
    %v2677 = vadd.f32 %v2617, %v2514
    %v2678 = vadd.f32 %v2620, %v2520
    %v2679 = vxor.u32 %v2677, 2147483648
    %v2680 = vxor.u32 %v2678, 2147483648
    %v2681 = vmul.f32 %v2679, 1.442695
    %v2682 = vpow.pop %v2681
    %v2683 = vmul.f32 %v2680, 1.442695
    %v2684 = vpow.pop %v2683
    %v2685 = vadd.f32 %v2682, 1.0
    %v2686 = vadd.f32 %v2684, 1.0
    %v2687 = vrcp.pop %v2685
    %v2688 = vmul.f32 1.0, %v2687
    %v2689 = vrcp.pop %v2686
    %v2690 = vmul.f32 1.0, %v2689
    %v2691 = vadd.f32 %v2618, %v2516
    %v2692 = vadd.f32 %v2621, %v2522
    %v2693 = vxor.u32 %v2691, 2147483648
    %v2694 = vxor.u32 %v2692, 2147483648
    %v2695 = vmul.f32 %v2693, 1.442695
    %v2696 = vpow.pop %v2695
    %v2697 = vmul.f32 %v2694, 1.442695
    %v2698 = vpow.pop %v2697
    %v2699 = vadd.f32 %v2696, 1.0
    %v2700 = vadd.f32 %v2698, 1.0
    %v2701 = vrcp.pop %v2699
    %v2702 = vmul.f32 1.0, %v2701
    %v2703 = vrcp.pop %v2700
    %v2704 = vmul.f32 1.0, %v2703
    %v2705 = vmul.f32 %v2688, %v2591
    %v2706 = vmul.f32 %v2690, %v2596
    %v2707 = vadd.f32 %v2619, %v2705
    %v2708 = vadd.f32 %v2622, %v2706
    %v2709 = vtanh.pop %v2707
    %v2710 = vtanh.pop %v2708
    %v2711 = vsub.f32 1.0, %v2702
    %v2712 = vsub.f32 1.0, %v2704
    %v2713 = vmul.f32 %v2711, %v2709
    %v2714 = vmul.f32 %v2712, %v2710
    %v2715 = vmul.f32 %v2702, %v2291
    %v2716 = vmul.f32 %v2704, %v2292
    %v2717 = vadd.f32 %v2713, %v2715
    %v2718 = vadd.f32 %v2714, %v2716
    %v2719 = vsel %vm2673, %v2717, %v2291
    %v2720 = vsel %vm2674, %v2718, %v2292
    %v2721 = vld [vmem:[%s3] sm:$0xf]
    %v2722 = vld [vmem:[%s3 + $0x4] sm:$0xf]
    %v2723 = vld [vmem:[%s4] sm:$0xf]
    %v2724 = vld [vmem:[%s4 + $0x4] sm:$0xf]
    %v2725 = vld [vmem:[#allocation11] sm:$0xf]
    %v2726 = vld [vmem:[#allocation11 + $0x4] sm:$0xf]
    %v2727 = vld [vmem:[#allocation11 + $0x8] sm:$0xf]
    %v2728 = vld [vmem:[#allocation11 + $0xc] sm:$0xf]
    %v2729 = vld [vmem:[#allocation11 + $0x10] sm:$0xf]
    %v2730 = vld [vmem:[#allocation11 + $0x14] sm:$0xf]
    %v2731 = vld [vmem:[#allocation11 + $0x18] sm:$0xf]
    %v2732 = vld [vmem:[#allocation11 + $0x1c] sm:$0xf]
    %v2733 = vld [vmem:[#allocation11 + $0x20] sm:$0xf]
    %v2734 = vld [vmem:[#allocation11 + $0x24] sm:$0xf]
    %v2735 = vld [vmem:[#allocation11 + $0x28] sm:$0xf]
    %v2736 = vld [vmem:[#allocation11 + $0x2c] sm:$0xf]
    %v2737 = vld [vmem:[#allocation11 + $0x30] sm:$0xf]
    %v2738 = vld [vmem:[#allocation11 + $0x34] sm:$0xf]
    %v2739 = vld [vmem:[#allocation11 + $0x38] sm:$0xf]
    %v2740 = vld [vmem:[#allocation11 + $0x3c] sm:$0xf]
    %v2741 = vpack.c.bf16 %v2676, %v2675
    %s2742 = scalar_lea.vmem [#allocation11], 64
    %v2743 = vld [vmem:[%s2742] sm:$0xf]
    %v2744 = vld [vmem:[%s2742 + $0x4] sm:$0xf]
    %v2745 = vld [vmem:[%s2742 + $0x8] sm:$0xf]
    %v2746 = vld [vmem:[%s2742 + $0xc] sm:$0xf]
    %v2747 = vld [vmem:[%s2742 + $0x10] sm:$0xf]
    %v2748 = vld [vmem:[%s2742 + $0x14] sm:$0xf]
    %v2749 = vld [vmem:[%s2742 + $0x18] sm:$0xf]
    %v2750 = vld [vmem:[%s2742 + $0x1c] sm:$0xf]
    %v2751 = vld [vmem:[%s2742 + $0x20] sm:$0xf]
    %v2752 = vld [vmem:[%s2742 + $0x24] sm:$0xf]
    %v2753 = vld [vmem:[%s2742 + $0x28] sm:$0xf]
    %v2754 = vld [vmem:[%s2742 + $0x2c] sm:$0xf]
    %v2755 = vld [vmem:[%s2742 + $0x30] sm:$0xf]
    %v2756 = vld [vmem:[%s2742 + $0x34] sm:$0xf]
    %v2757 = vld [vmem:[%s2742 + $0x38] sm:$0xf]
    %v2758 = vld [vmem:[%s2742 + $0x3c] sm:$0xf]
    %v2775 = vunpack.c.l.b16 %v2743
    %v2776 = vunpack.c.l.b16 %v2744
    %v2777 = vunpack.c.l.b16 %v2745
    %v2778 = vunpack.c.l.b16 %v2746
    %v2779 = vunpack.c.l.b16 %v2747
    %v2780 = vunpack.c.l.b16 %v2748
    %v2781 = vunpack.c.l.b16 %v2749
    %v2782 = vunpack.c.l.b16 %v2750
    %v2783 = vunpack.c.l.b16 %v2751
    %v2784 = vunpack.c.l.b16 %v2752
    %v2785 = vunpack.c.l.b16 %v2753
    %v2786 = vunpack.c.l.b16 %v2754
    %v2787 = vunpack.c.l.b16 %v2755
    %v2788 = vunpack.c.l.b16 %v2756
    %v2789 = vunpack.c.l.b16 %v2757
    %v2790 = vunpack.c.l.b16 %v2758
    %v2791 = vpack.c.b16 %v2776, %v2775
    %v2792 = vpack.c.b16 %v2778, %v2777
    %v2793 = vpack.c.b16 %v2780, %v2779
    %v2794 = vpack.c.b16 %v2782, %v2781
    %v2795 = vpack.c.b16 %v2784, %v2783
    %v2796 = vpack.c.b16 %v2786, %v2785
    %v2797 = vpack.c.b16 %v2788, %v2787
    %v2798 = vpack.c.b16 %v2790, %v2789
    %2807 = vmatprep.subr.bf16.mxu0 0
    %2808 = vmatpush1.bf16.msra.mxu0 %v2791
    %2809 = vmatprep.subr.bf16.mxu0 0
    %2810 = vmatpush1.bf16.msra.mxu0 %v2792
    %2811 = vmatprep.subr.bf16.mxu0 0
    %2812 = vmatpush1.bf16.msra.mxu0 %v2793
    %2813 = vmatprep.subr.bf16.mxu0 0
    %2814 = vmatpush1.bf16.msra.mxu0 %v2794
    %2815 = vmatprep.subr.bf16.mxu0 0
    %2816 = vmatpush1.bf16.msra.mxu0 %v2795
    %2817 = vmatprep.subr.bf16.mxu0 0
    %2818 = vmatpush1.bf16.msra.mxu0 %v2796
    %2819 = vmatprep.subr.bf16.mxu0 0
    %2820 = vmatpush1.bf16.msra.mxu0 %v2797
    %2821 = vmatprep.subr.bf16.mxu0 0
    %2822 = vmatpush1.bf16.msra.mxu0 %v2798
    %2823 = vmatprep.subr.bf16.mxu0 0
    %2824 = vmatpush1.bf16.msra.mxu0 0
    %2825 = vmatprep.subr.bf16.mxu0 0
    %2826 = vmatpush1.bf16.msra.mxu0 0
    %2827 = vmatprep.subr.bf16.mxu0 0
    %2828 = vmatpush1.bf16.msra.mxu0 0
    %2829 = vmatprep.subr.bf16.mxu0 0
    %2830 = vmatpush1.bf16.msra.mxu0 0
    %2831 = vmatprep.subr.bf16.mxu0 0
    %2832 = vmatpush1.bf16.msra.mxu0 0
    %2833 = vmatprep.subr.bf16.mxu0 0
    %2834 = vmatpush1.bf16.msra.mxu0 0
    %2835 = vmatprep.subr.bf16.mxu0 0
    %2836 = vmatpush1.bf16.msra.mxu0 0
    %2837 = vmatprep.subr.bf16.mxu0 0
    %2838 = vmatpush1.bf16.msra.mxu0 0
    %2839 = vmatprep.mubr.bf16.mxu0 0
    %2840 = vmatmul.mubr.bf16.gmra.mrb[0].mxu0 %v2741
    %v2841 = vpop.f32.mrb[0].mxu0
    %v2842 = vadd.f32 0.0, %v2841
    %v2843 = vpop.f32.mrb[0].mxu0
    %v2844 = vpop.f32.mrb[0].mxu0
    %v2845 = vadd.f32 0.0, %v2844
    %v2846 = vpop.f32.mrb[0].mxu0
    %2847 = vdwg.mxu0
    %v2850 = vunpack.c.l.b16 %v2721
    %v2851 = vunpack.c.l.b16 %v2722
    %v2852 = vpack.c.b16 %v2851, %v2850
    %v2870 = vunpack.c.l.b16 %v2725
    %v2871 = vunpack.c.l.b16 %v2726
    %v2872 = vunpack.c.l.b16 %v2727
    %v2873 = vunpack.c.l.b16 %v2728
    %v2874 = vunpack.c.l.b16 %v2729
    %v2875 = vunpack.c.l.b16 %v2730
    %v2876 = vunpack.c.l.b16 %v2731
    %v2877 = vunpack.c.l.b16 %v2732
    %v2878 = vunpack.c.l.b16 %v2733
    %v2879 = vunpack.c.l.b16 %v2734
    %v2880 = vunpack.c.l.b16 %v2735
    %v2881 = vunpack.c.l.b16 %v2736
    %v2882 = vunpack.c.l.b16 %v2737
    %v2883 = vunpack.c.l.b16 %v2738
    %v2884 = vunpack.c.l.b16 %v2739
    %v2885 = vunpack.c.l.b16 %v2740
    %v2886 = vpack.c.b16 %v2871, %v2870
    %v2887 = vpack.c.b16 %v2873, %v2872
    %v2888 = vpack.c.b16 %v2875, %v2874
    %v2889 = vpack.c.b16 %v2877, %v2876
    %v2890 = vpack.c.b16 %v2879, %v2878
    %v2891 = vpack.c.b16 %v2881, %v2880
    %v2892 = vpack.c.b16 %v2883, %v2882
    %v2893 = vpack.c.b16 %v2885, %v2884
    %2902 = vmatprep.subr.bf16.mxu0 0
    %2903 = vmatpush1.bf16.msra.mxu0 %v2886
    %2904 = vmatprep.subr.bf16.mxu0 0
    %2905 = vmatpush1.bf16.msra.mxu0 %v2887
    %2906 = vmatprep.subr.bf16.mxu0 0
    %2907 = vmatpush1.bf16.msra.mxu0 %v2888
    %2908 = vmatprep.subr.bf16.mxu0 0
    %2909 = vmatpush1.bf16.msra.mxu0 %v2889
    %2910 = vmatprep.subr.bf16.mxu0 0
    %2911 = vmatpush1.bf16.msra.mxu0 %v2890
    %2912 = vmatprep.subr.bf16.mxu0 0
    %2913 = vmatpush1.bf16.msra.mxu0 %v2891
    %2914 = vmatprep.subr.bf16.mxu0 0
    %2915 = vmatpush1.bf16.msra.mxu0 %v2892
    %2916 = vmatprep.subr.bf16.mxu0 0
    %2917 = vmatpush1.bf16.msra.mxu0 %v2893
    %2918 = vmatprep.subr.bf16.mxu0 0
    %2919 = vmatpush1.bf16.msra.mxu0 0
    %2920 = vmatprep.subr.bf16.mxu0 0
    %2921 = vmatpush1.bf16.msra.mxu0 0
    %2922 = vmatprep.subr.bf16.mxu0 0
    %2923 = vmatpush1.bf16.msra.mxu0 0
    %2924 = vmatprep.subr.bf16.mxu0 0
    %2925 = vmatpush1.bf16.msra.mxu0 0
    %2926 = vmatprep.subr.bf16.mxu0 0
    %2927 = vmatpush1.bf16.msra.mxu0 0
    %2928 = vmatprep.subr.bf16.mxu0 0
    %2929 = vmatpush1.bf16.msra.mxu0 0
    %2930 = vmatprep.subr.bf16.mxu0 0
    %2931 = vmatpush1.bf16.msra.mxu0 0
    %2932 = vmatprep.subr.bf16.mxu0 0
    %2933 = vmatpush1.bf16.msra.mxu0 0
    %2934 = vmatprep.mubr.bf16.mxu0 0
    %2935 = vmatmul.mubr.bf16.gmra.mrb[0].mxu0 %v2852
    %v2936 = vpop.f32.mrb[0].mxu0
    %v2937 = vadd.f32 %v2842, %v2936
    %v2938 = vpop.f32.mrb[0].mxu0
    %v2939 = vpop.f32.mrb[0].mxu0
    %v2940 = vadd.f32 %v2845, %v2939
    %v2941 = vpop.f32.mrb[0].mxu0
    %2942 = vdwg.mxu0
    %s2943 = scalar_lea.vmem [#allocation11], 128
    %v2944 = vld [vmem:[%s2943] sm:$0xf]
    %v2945 = vld [vmem:[%s2943 + $0x4] sm:$0xf]
    %v2946 = vld [vmem:[%s2943 + $0x8] sm:$0xf]
    %v2947 = vld [vmem:[%s2943 + $0xc] sm:$0xf]
    %v2948 = vld [vmem:[%s2943 + $0x10] sm:$0xf]
    %v2949 = vld [vmem:[%s2943 + $0x14] sm:$0xf]
    %v2950 = vld [vmem:[%s2943 + $0x18] sm:$0xf]
    %v2951 = vld [vmem:[%s2943 + $0x1c] sm:$0xf]
    %v2952 = vld [vmem:[%s2943 + $0x20] sm:$0xf]
    %v2953 = vld [vmem:[%s2943 + $0x24] sm:$0xf]
    %v2954 = vld [vmem:[%s2943 + $0x28] sm:$0xf]
    %v2955 = vld [vmem:[%s2943 + $0x2c] sm:$0xf]
    %v2956 = vld [vmem:[%s2943 + $0x30] sm:$0xf]
    %v2957 = vld [vmem:[%s2943 + $0x34] sm:$0xf]
    %v2958 = vld [vmem:[%s2943 + $0x38] sm:$0xf]
    %v2959 = vld [vmem:[%s2943 + $0x3c] sm:$0xf]
    %v2962 = vunpack.c.l.b16 %v2723
    %v2963 = vunpack.c.l.b16 %v2724
    %v2964 = vpack.c.b16 %v2963, %v2962
    %v2982 = vunpack.c.l.b16 %v2944
    %v2983 = vunpack.c.l.b16 %v2945
    %v2984 = vunpack.c.l.b16 %v2946
    %v2985 = vunpack.c.l.b16 %v2947
    %v2986 = vunpack.c.l.b16 %v2948
    %v2987 = vunpack.c.l.b16 %v2949
    %v2988 = vunpack.c.l.b16 %v2950
    %v2989 = vunpack.c.l.b16 %v2951
    %v2990 = vunpack.c.l.b16 %v2952
    %v2991 = vunpack.c.l.b16 %v2953
    %v2992 = vunpack.c.l.b16 %v2954
    %v2993 = vunpack.c.l.b16 %v2955
    %v2994 = vunpack.c.l.b16 %v2956
    %v2995 = vunpack.c.l.b16 %v2957
    %v2996 = vunpack.c.l.b16 %v2958
    %v2997 = vunpack.c.l.b16 %v2959
    %v2998 = vpack.c.b16 %v2983, %v2982
    %v2999 = vpack.c.b16 %v2985, %v2984
    %v3000 = vpack.c.b16 %v2987, %v2986
    %v3001 = vpack.c.b16 %v2989, %v2988
    %v3002 = vpack.c.b16 %v2991, %v2990
    %v3003 = vpack.c.b16 %v2993, %v2992
    %v3004 = vpack.c.b16 %v2995, %v2994
    %v3005 = vpack.c.b16 %v2997, %v2996
    %3014 = vmatprep.subr.bf16.mxu0 0
    %3015 = vmatpush1.bf16.msra.mxu0 %v2998
    %3016 = vmatprep.subr.bf16.mxu0 0
    %3017 = vmatpush1.bf16.msra.mxu0 %v2999
    %3018 = vmatprep.subr.bf16.mxu0 0
    %3019 = vmatpush1.bf16.msra.mxu0 %v3000
    %3020 = vmatprep.subr.bf16.mxu0 0
    %3021 = vmatpush1.bf16.msra.mxu0 %v3001
    %3022 = vmatprep.subr.bf16.mxu0 0
    %3023 = vmatpush1.bf16.msra.mxu0 %v3002
    %3024 = vmatprep.subr.bf16.mxu0 0
    %3025 = vmatpush1.bf16.msra.mxu0 %v3003
    %3026 = vmatprep.subr.bf16.mxu0 0
    %3027 = vmatpush1.bf16.msra.mxu0 %v3004
    %3028 = vmatprep.subr.bf16.mxu0 0
    %3029 = vmatpush1.bf16.msra.mxu0 %v3005
    %3030 = vmatprep.subr.bf16.mxu0 0
    %3031 = vmatpush1.bf16.msra.mxu0 0
    %3032 = vmatprep.subr.bf16.mxu0 0
    %3033 = vmatpush1.bf16.msra.mxu0 0
    %3034 = vmatprep.subr.bf16.mxu0 0
    %3035 = vmatpush1.bf16.msra.mxu0 0
    %3036 = vmatprep.subr.bf16.mxu0 0
    %3037 = vmatpush1.bf16.msra.mxu0 0
    %3038 = vmatprep.subr.bf16.mxu0 0
    %3039 = vmatpush1.bf16.msra.mxu0 0
    %3040 = vmatprep.subr.bf16.mxu0 0
    %3041 = vmatpush1.bf16.msra.mxu0 0
    %3042 = vmatprep.subr.bf16.mxu0 0
    %3043 = vmatpush1.bf16.msra.mxu0 0
    %3044 = vmatprep.subr.bf16.mxu0 0
    %3045 = vmatpush1.bf16.msra.mxu0 0
    %3046 = vmatprep.mubr.bf16.mxu0 0
    %3047 = vmatmul.mubr.bf16.gmra.mrb[0].mxu0 %v2964
    %v3048 = vpop.f32.mrb[0].mxu0
    %v3049 = vadd.f32 0.0, %v3048
    %v3050 = vpop.f32.mrb[0].mxu0
    %v3051 = vpop.f32.mrb[0].mxu0
    %v3052 = vadd.f32 0.0, %v3051
    %v3053 = vpop.f32.mrb[0].mxu0
    %3054 = vdwg.mxu0
    %v3055 = vadd.f32 %v2937, %v3049
    %v3056 = vadd.f32 %v2940, %v3052
    %v3057 = vld [vmem:[%s16] sm:$0x1]
    %v3059 = vlaneseq
    %v3060 = vshrl.u32 %v3059, 7
    %v3061 = vsub.s32 0, %v3060
    %v3062 = vrot.slane %v3057, %v3061
    %v3064 = vadd.f32 %v3055, %v3062
    %v3065 = vadd.f32 %v3056, %v3062
    %v3066 = vld [vmem:[#allocation13] sm:$0xf]
    %v3067 = vld [vmem:[#allocation13 + $0x4] sm:$0xf]
    %v3068 = vld [vmem:[#allocation13 + $0x8] sm:$0xf]
    %v3069 = vld [vmem:[#allocation13 + $0xc] sm:$0xf]
    %v3070 = vld [vmem:[#allocation13 + $0x10] sm:$0xf]
    %v3071 = vld [vmem:[#allocation13 + $0x14] sm:$0xf]
    %v3072 = vld [vmem:[#allocation13 + $0x18] sm:$0xf]
    %v3073 = vld [vmem:[#allocation13 + $0x1c] sm:$0xf]
    %v3074 = vld [vmem:[#allocation13 + $0x20] sm:$0xf]
    %v3075 = vld [vmem:[#allocation13 + $0x24] sm:$0xf]
    %v3076 = vld [vmem:[#allocation13 + $0x28] sm:$0xf]
    %v3077 = vld [vmem:[#allocation13 + $0x2c] sm:$0xf]
    %v3078 = vld [vmem:[#allocation13 + $0x30] sm:$0xf]
    %v3079 = vld [vmem:[#allocation13 + $0x34] sm:$0xf]
    %v3080 = vld [vmem:[#allocation13 + $0x38] sm:$0xf]
    %v3081 = vld [vmem:[#allocation13 + $0x3c] sm:$0xf]
    %v3082 = vpack.c.bf16 %v2720, %v2719
    %s3083 = scalar_lea.vmem [#allocation13], 64
    %v3084 = vld [vmem:[%s3083] sm:$0xf]
    %v3085 = vld [vmem:[%s3083 + $0x4] sm:$0xf]
    %v3086 = vld [vmem:[%s3083 + $0x8] sm:$0xf]
    %v3087 = vld [vmem:[%s3083 + $0xc] sm:$0xf]
    %v3088 = vld [vmem:[%s3083 + $0x10] sm:$0xf]
    %v3089 = vld [vmem:[%s3083 + $0x14] sm:$0xf]
    %v3090 = vld [vmem:[%s3083 + $0x18] sm:$0xf]
    %v3091 = vld [vmem:[%s3083 + $0x1c] sm:$0xf]
    %v3092 = vld [vmem:[%s3083 + $0x20] sm:$0xf]
    %v3093 = vld [vmem:[%s3083 + $0x24] sm:$0xf]
    %v3094 = vld [vmem:[%s3083 + $0x28] sm:$0xf]
    %v3095 = vld [vmem:[%s3083 + $0x2c] sm:$0xf]
    %v3096 = vld [vmem:[%s3083 + $0x30] sm:$0xf]
    %v3097 = vld [vmem:[%s3083 + $0x34] sm:$0xf]
    %v3098 = vld [vmem:[%s3083 + $0x38] sm:$0xf]
    %v3099 = vld [vmem:[%s3083 + $0x3c] sm:$0xf]
    %v3116 = vunpack.c.l.b16 %v3084
    %v3117 = vunpack.c.l.b16 %v3085
    %v3118 = vunpack.c.l.b16 %v3086
    %v3119 = vunpack.c.l.b16 %v3087
    %v3120 = vunpack.c.l.b16 %v3088
    %v3121 = vunpack.c.l.b16 %v3089
    %v3122 = vunpack.c.l.b16 %v3090
    %v3123 = vunpack.c.l.b16 %v3091
    %v3124 = vunpack.c.l.b16 %v3092
    %v3125 = vunpack.c.l.b16 %v3093
    %v3126 = vunpack.c.l.b16 %v3094
    %v3127 = vunpack.c.l.b16 %v3095
    %v3128 = vunpack.c.l.b16 %v3096
    %v3129 = vunpack.c.l.b16 %v3097
    %v3130 = vunpack.c.l.b16 %v3098
    %v3131 = vunpack.c.l.b16 %v3099
    %v3132 = vpack.c.b16 %v3117, %v3116
    %v3133 = vpack.c.b16 %v3119, %v3118
    %v3134 = vpack.c.b16 %v3121, %v3120
    %v3135 = vpack.c.b16 %v3123, %v3122
    %v3136 = vpack.c.b16 %v3125, %v3124
    %v3137 = vpack.c.b16 %v3127, %v3126
    %v3138 = vpack.c.b16 %v3129, %v3128
    %v3139 = vpack.c.b16 %v3131, %v3130
    %3148 = vmatprep.subr.bf16.mxu0 0
    %3149 = vmatpush1.bf16.msra.mxu0 %v3132
    %3150 = vmatprep.subr.bf16.mxu0 0
    %3151 = vmatpush1.bf16.msra.mxu0 %v3133
    %3152 = vmatprep.subr.bf16.mxu0 0
    %3153 = vmatpush1.bf16.msra.mxu0 %v3134
    %3154 = vmatprep.subr.bf16.mxu0 0
    %3155 = vmatpush1.bf16.msra.mxu0 %v3135
    %3156 = vmatprep.subr.bf16.mxu0 0
    %3157 = vmatpush1.bf16.msra.mxu0 %v3136
    %3158 = vmatprep.subr.bf16.mxu0 0
    %3159 = vmatpush1.bf16.msra.mxu0 %v3137
    %3160 = vmatprep.subr.bf16.mxu0 0
    %3161 = vmatpush1.bf16.msra.mxu0 %v3138
    %3162 = vmatprep.subr.bf16.mxu0 0
    %3163 = vmatpush1.bf16.msra.mxu0 %v3139
    %3164 = vmatprep.subr.bf16.mxu0 0
    %3165 = vmatpush1.bf16.msra.mxu0 0
    %3166 = vmatprep.subr.bf16.mxu0 0
    %3167 = vmatpush1.bf16.msra.mxu0 0
    %3168 = vmatprep.subr.bf16.mxu0 0
    %3169 = vmatpush1.bf16.msra.mxu0 0
    %3170 = vmatprep.subr.bf16.mxu0 0
    %3171 = vmatpush1.bf16.msra.mxu0 0
    %3172 = vmatprep.subr.bf16.mxu0 0
    %3173 = vmatpush1.bf16.msra.mxu0 0
    %3174 = vmatprep.subr.bf16.mxu0 0
    %3175 = vmatpush1.bf16.msra.mxu0 0
    %3176 = vmatprep.subr.bf16.mxu0 0
    %3177 = vmatpush1.bf16.msra.mxu0 0
    %3178 = vmatprep.subr.bf16.mxu0 0
    %3179 = vmatpush1.bf16.msra.mxu0 0
    %3180 = vmatprep.mubr.bf16.mxu0 0
    %3181 = vmatmul.mubr.bf16.gmra.mrb[0].mxu0 %v3082
    %v3182 = vpop.f32.mrb[0].mxu0
    %v3183 = vadd.f32 0.0, %v3182
    %v3184 = vpop.f32.mrb[0].mxu0
    %v3185 = vpop.f32.mrb[0].mxu0
    %v3186 = vadd.f32 0.0, %v3185
    %v3187 = vpop.f32.mrb[0].mxu0
    %3188 = vdwg.mxu0
    %v3205 = vunpack.c.l.b16 %v3066
    %v3206 = vunpack.c.l.b16 %v3067
    %v3207 = vunpack.c.l.b16 %v3068
    %v3208 = vunpack.c.l.b16 %v3069
    %v3209 = vunpack.c.l.b16 %v3070
    %v3210 = vunpack.c.l.b16 %v3071
    %v3211 = vunpack.c.l.b16 %v3072
    %v3212 = vunpack.c.l.b16 %v3073
    %v3213 = vunpack.c.l.b16 %v3074
    %v3214 = vunpack.c.l.b16 %v3075
    %v3215 = vunpack.c.l.b16 %v3076
    %v3216 = vunpack.c.l.b16 %v3077
    %v3217 = vunpack.c.l.b16 %v3078
    %v3218 = vunpack.c.l.b16 %v3079
    %v3219 = vunpack.c.l.b16 %v3080
    %v3220 = vunpack.c.l.b16 %v3081
    %v3221 = vpack.c.b16 %v3206, %v3205
    %v3222 = vpack.c.b16 %v3208, %v3207
    %v3223 = vpack.c.b16 %v3210, %v3209
    %v3224 = vpack.c.b16 %v3212, %v3211
    %v3225 = vpack.c.b16 %v3214, %v3213
    %v3226 = vpack.c.b16 %v3216, %v3215
    %v3227 = vpack.c.b16 %v3218, %v3217
    %v3228 = vpack.c.b16 %v3220, %v3219
    %3237 = vmatprep.subr.bf16.mxu0 0
    %3238 = vmatpush1.bf16.msra.mxu0 %v3221
    %3239 = vmatprep.subr.bf16.mxu0 0
    %3240 = vmatpush1.bf16.msra.mxu0 %v3222
    %3241 = vmatprep.subr.bf16.mxu0 0
    %3242 = vmatpush1.bf16.msra.mxu0 %v3223
    %3243 = vmatprep.subr.bf16.mxu0 0
    %3244 = vmatpush1.bf16.msra.mxu0 %v3224
    %3245 = vmatprep.subr.bf16.mxu0 0
    %3246 = vmatpush1.bf16.msra.mxu0 %v3225
    %3247 = vmatprep.subr.bf16.mxu0 0
    %3248 = vmatpush1.bf16.msra.mxu0 %v3226
    %3249 = vmatprep.subr.bf16.mxu0 0
    %3250 = vmatpush1.bf16.msra.mxu0 %v3227
    %3251 = vmatprep.subr.bf16.mxu0 0
    %3252 = vmatpush1.bf16.msra.mxu0 %v3228
    %3253 = vmatprep.subr.bf16.mxu0 0
    %3254 = vmatpush1.bf16.msra.mxu0 0
    %3255 = vmatprep.subr.bf16.mxu0 0
    %3256 = vmatpush1.bf16.msra.mxu0 0
    %3257 = vmatprep.subr.bf16.mxu0 0
    %3258 = vmatpush1.bf16.msra.mxu0 0
    %3259 = vmatprep.subr.bf16.mxu0 0
    %3260 = vmatpush1.bf16.msra.mxu0 0
    %3261 = vmatprep.subr.bf16.mxu0 0
    %3262 = vmatpush1.bf16.msra.mxu0 0
    %3263 = vmatprep.subr.bf16.mxu0 0
    %3264 = vmatpush1.bf16.msra.mxu0 0
    %3265 = vmatprep.subr.bf16.mxu0 0
    %3266 = vmatpush1.bf16.msra.mxu0 0
    %3267 = vmatprep.subr.bf16.mxu0 0
    %3268 = vmatpush1.bf16.msra.mxu0 0
    %3269 = vmatprep.mubr.bf16.mxu0 0
    %3270 = vmatmul.mubr.bf16.gmra.mrb[0].mxu0 %v2852
    %v3271 = vpop.f32.mrb[0].mxu0
    %v3272 = vadd.f32 %v3183, %v3271
    %v3273 = vpop.f32.mrb[0].mxu0
    %v3274 = vpop.f32.mrb[0].mxu0
    %v3275 = vadd.f32 %v3186, %v3274
    %v3276 = vpop.f32.mrb[0].mxu0
    %3277 = vdwg.mxu0
    %v3278 = vld [vmem:[%s18] sm:$0x1]
    %v3280 = vlaneseq
    %v3281 = vshrl.u32 %v3280, 7
    %v3282 = vsub.s32 0, %v3281
    %v3283 = vrot.slane %v3278, %v3282
    %v3285 = vadd.f32 %v3272, %v3283
    %v3286 = vadd.f32 %v3275, %v3283
    %s3287 = smul.u32 0, 16
    %v3288 = vlaneseq
    %v3289 = vshrl.u32 %v3288, 7
    %v3290 = vadd.s32 %v3289, 8
    %v3291 = vstv %s3287
    %v3292 = vadd.s32 %v3291, %v3289
    %v3293 = vadd.s32 %v3291, %v3290
    %vm3294 = vcmp.lt.s32.totalorder %v3292, 8
    %vm3295 = vcmp.lt.s32.totalorder %v3293, 8
    %v3296 = vld [vmem:[%s5] sm:$0xff]
    %v3297 = vld [vmem:[%s5 + $0x8] sm:$0xff]
    %v3298 = vlaneseq
    %v3299 = vand.u32 %v3298, 127
    %vm3300 = vcmp.lt.s32.totalorder %v3299, 16
    %v3301 = vsel %vm3300, %v3064, -inf
    %v3302 = vsel %vm3300, %v3065, -inf
    %3303 = vmax.xlane.f32.xlu0 %v3301
    %v3304 = vpop.xlane.xlu0 %3303
    %3305 = vmax.xlane.f32.xlu0 %v3302
    %v3306 = vpop.xlane.xlu0 %3305
    %v3307 = vsub.f32 %v3301, %v3304
    %v3308 = vsub.f32 %v3302, %v3306
    %v3309 = vmul.f32 %v3307, 1.442695
    %v3310 = vpow.pop %v3309
    %v3311 = vmul.f32 %v3308, 1.442695
    %v3312 = vpow.pop %v3311
    %3313 = vadd.xlane.f32.xlu0 %v3310
    %v3314 = vpop.xlane.xlu0 %3313
    %3315 = vadd.xlane.f32.xlu0 %v3312
    %v3316 = vpop.xlane.xlu0 %3315
    %v3317 = vlog2.pop %v3314
    %v3318 = vmul.f32 %v3317, 0.6931472
    %v3319 = vlog2.pop %v3316
    %v3320 = vmul.f32 %v3319, 0.6931472
    %v3321 = vadd.f32 %v3304, %v3318
    %v3322 = vadd.f32 %v3306, %v3320
    %3323 = vset.pattern.permute.xlu0 0
    %3324 = vperm.xlu0 %3323, %v3296
    %v3325 = vpop.permute.xlu0 %3324
    %3326 = vset.pattern.permute.xlu0 0
    %3327 = vperm.xlu0 %3326, %v3297
    %v3328 = vpop.permute.xlu0 %3327
    %vm3329 = vcmp.eq.s32.totalorder %v3299, %v3325
    %vm3330 = vcmp.eq.s32.totalorder %v3299, %v3328
    %v3331 = vsel %vm3329, %v3301, 0.0
    %v3332 = vsel %vm3330, %v3302, 0.0
    %3333 = vadd.xlane.f32.xlu0 %v3331
    %v3334 = vpop.xlane.xlu0 %3333
    %3335 = vadd.xlane.f32.xlu0 %v3332
    %v3336 = vpop.xlane.xlu0 %3335
    %v3337 = vsub.f32 %v3321, %v3334
    %v3338 = vsub.f32 %v3322, %v3336
    %v3339 = vsel %vm3294, %v3337, 0.0
    %v3340 = vsel %vm3295, %v3338, 0.0
    %vm3341 = vcmask 7168
    %v3342 = vsel %vm3341, %v3339, 0.0
    %v3343 = vsel %vm3341, %v3340, 0.0
    %v3344 = vadd.f32 %v3342, %v3343
    %3345 = vadd.xlane.f32.xlu0 %v3344
    %v3346 = vpop.xlane.xlu0 %3345
    %v3347 = vrot.slane %v3346, 4
    %v3348 = vadd.f32 %v3346, %v3347
    %v3349 = vrot.slane %v3348, 2
    %v3350 = vadd.f32 %v3348, %v3349
    %v3351 = vrot.slane %v3350, 1
    %v3352 = vadd.f32 %v3350, %v3351
    %s3353 = vtos %v3352
    %v3354 = vld [vmem:[%s6] sm:$0xff]
    %v3355 = vld [vmem:[%s6 + $0x8] sm:$0xff]
    %vm3356 = vcmp.lt.s32.totalorder %v3299, 8
    %v3357 = vsel %vm3356, %v3285, -inf
    %v3358 = vsel %vm3356, %v3286, -inf
    %3359 = vmax.xlane.f32.xlu0 %v3357
    %v3360 = vpop.xlane.xlu0 %3359
    %3361 = vmax.xlane.f32.xlu0 %v3358
    %v3362 = vpop.xlane.xlu0 %3361
    %v3363 = vsub.f32 %v3357, %v3360
    %v3364 = vsub.f32 %v3358, %v3362
    %v3365 = vmul.f32 %v3363, 1.442695
    %v3366 = vpow.pop %v3365
    %v3367 = vmul.f32 %v3364, 1.442695
    %v3368 = vpow.pop %v3367
    %3369 = vadd.xlane.f32.xlu0 %v3366
    %v3370 = vpop.xlane.xlu0 %3369
    %3371 = vadd.xlane.f32.xlu0 %v3368
    %v3372 = vpop.xlane.xlu0 %3371
    %v3373 = vlog2.pop %v3370
    %v3374 = vmul.f32 %v3373, 0.6931472
    %v3375 = vlog2.pop %v3372
    %v3376 = vmul.f32 %v3375, 0.6931472
    %v3377 = vadd.f32 %v3360, %v3374
    %v3378 = vadd.f32 %v3362, %v3376
    %3379 = vset.pattern.permute.xlu0 0
    %3380 = vperm.xlu0 %3379, %v3354
    %v3381 = vpop.permute.xlu0 %3380
    %3382 = vset.pattern.permute.xlu0 0
    %3383 = vperm.xlu0 %3382, %v3355
    %v3384 = vpop.permute.xlu0 %3383
    %vm3385 = vcmp.eq.s32.totalorder %v3299, %v3381
    %vm3386 = vcmp.eq.s32.totalorder %v3299, %v3384
    %v3387 = vsel %vm3385, %v3357, 0.0
    %v3388 = vsel %vm3386, %v3358, 0.0
    %3389 = vadd.xlane.f32.xlu0 %v3387
    %v3390 = vpop.xlane.xlu0 %3389
    %3391 = vadd.xlane.f32.xlu0 %v3388
    %v3392 = vpop.xlane.xlu0 %3391
    %v3393 = vsub.f32 %v3377, %v3390
    %v3394 = vsub.f32 %v3378, %v3392
    %v3395 = vsel %vm3294, %v3393, 0.0
    %v3396 = vsel %vm3295, %v3394, 0.0
    %v3397 = vsel %vm3341, %v3395, 0.0
    %v3398 = vsel %vm3341, %v3396, 0.0
    %v3399 = vadd.f32 %v3397, %v3398
    %3400 = vadd.xlane.f32.xlu0 %v3399
    %v3401 = vpop.xlane.xlu0 %3400
    %v3402 = vrot.slane %v3401, 4
    %v3403 = vadd.f32 %v3401, %v3402
    %v3404 = vrot.slane %v3403, 2
    %v3405 = vadd.f32 %v3403, %v3404
    %v3406 = vrot.slane %v3405, 1
    %v3407 = vadd.f32 %v3405, %v3406
    %s3408 = vtos %v3407
    %s3409 = smul.f32 %s3408, 0.1
    %s3410 = sadd.f32 %s3353, %s3409
    %v3411 = vstv %s3410
    %3412 = vst [vmem:[#allocation14] sm:$0x1] %v3411
    // Predicated region
    $region106: #{tpu_custom_call.1} parent=1 // pred_check
      _
    $region107: #{tpu_custom_call.1} parent=1 // pred_check_branch
      %3414 = sbr.rel (0) target = $region109
    $region108: #{tpu_custom_call.1} parent=1 // pred_region
      %s3416 = ssub.s32 16, 16
      %3417 = vsyncadd [#allocation4], %s3416
      %s3419 = sshll.u32 [#allocation14], 4
      %s3420 = int_to_ptr.vmem [resolvable:$true] %s3419
      %3422 = dma.vmem_to_hbm [thread:$0]  %s3420, 16, %s19, [#allocation4]
    $region109: #{tpu_custom_call.1} parent=1 // pred_fallthru
      _
    // Predicated region
    $region110: #{tpu_custom_call.1} parent=1 // pred_check
      _
    $region111: #{tpu_custom_call.1} parent=1 // pred_check_branch
      %3424 = sbr.rel (0) target = $region113
    $region112: #{tpu_custom_call.1} parent=1 // pred_region
      %3425 = dma.done [#allocation4], 16
    $region113: #{tpu_custom_call.1} parent=1 // pred_fallthru
      _
    %3426 = vsyncpa [#allocation3], 1
    %3427 = vsyncpa [#allocation6], 1
    %3428 = vsyncpa [#allocation9], 1
    %3429 = vsyncpa [#allocation12], 1
    %3430 = vsyncpa [#allocation4], 1

</llo_original>
